<compile_context>
chip_gen: v6e
topology: v6e:2x2x1
jax: 0.10.0
libtpu: 0.0.40
codegen_flags: <defaults>
</compile_context>

<pallas_src>
import jax
import jax.numpy as jnp
from jax.experimental import pallas as pl
from jax.experimental.pallas import tpu as pltpu

HIDDEN = (64, 128, 256, 512)        # fixed hidden widths of ChannelDecoder
_VMEM_LIMIT = 32 * 1024 * 1024      # safe on v5e/v6e/v7x


def _round_up(x, m):
    return (x + m - 1) // m * m


# --------------------------------------------------------------------------- #
# Kernel 1: per-channel sigmatrix chain + relu + cross-channel normalization. #
# --------------------------------------------------------------------------- #
def _sig_kernel(w0_ref, w1_ref, w2_ref, w3_ref, w4_ref, sig_ref, norm_ref):
    """w*_ref: (C, d_in_l, d_out_l) VMEM (already in x@W layout).

    sig_ref / norm_ref: (D_lat, M_pad) VMEM, channel-major along lanes
    (columns [c*D_data : (c+1)*D_data] hold channel c; trailing pad is zeros).
    """
    num_ch = w0_ref.shape[0]
    d_lat = w0_ref.shape[1]
    sigs = []
    for c in range(num_ch):
        h = jnp.dot(w0_ref[c], w1_ref[c], preferred_element_type=jnp.float32)
        h = jnp.dot(h, w2_ref[c], preferred_element_type=jnp.float32)
        h = jnp.dot(h, w3_ref[c], preferred_element_type=jnp.float32)
        h = jnp.dot(h, w4_ref[c], preferred_element_type=jnp.float32)
        sigs.append(jnp.maximum(h, 0.0))                       # F.relu
    total = sigs[0]
    for s in sigs[1:]:
        total = total + s
    inv = 1.0 / total                                          # one divide, C multiplies
    d_data = sigs[0].shape[1]
    pad = sig_ref.shape[1] - num_ch * d_data
    pad_block = [jnp.zeros((d_lat, pad), jnp.float32)] if pad else []
    # Lane-dense packed stores (single wide vst per output slab).
    sig_ref[...] = jnp.concatenate(sigs + pad_block, axis=1)
    norm_ref[...] = jnp.concatenate([s * inv for s in sigs] + pad_block, axis=1)


# --------------------------------------------------------------------------- #
# Kernel 2: batched reconstruction, tiled over (N, packed columns).           #
# --------------------------------------------------------------------------- #
def _recon_kernel(z_ref, sig_ref, out_ref):
    """z_ref: (TN, D_lat); sig_ref: (D_lat, TM); out_ref: (TN, TM)."""
    out_ref[...] = jnp.dot(z_ref[...], sig_ref[...],
                           preferred_element_type=jnp.float32).astype(out_ref.dtype)


# --------------------------------------------------------------------------- #
# Wrapper                                                                     #
# --------------------------------------------------------------------------- #
def multi_channel_decoder_forward(z, params, *, tile_n=512, tile_m=2048):
    """z: (N, output_dim) float32.  Returns (stacked_recon, norm_stacked_sig)
    matching MultiChannelDecoder.forward: (N, input_dim, C), (output_dim, input_dim, C).
    """
    ws = params["decoder_weights"]          # 5 arrays, torch layout (C, out_l, in_l)
    num_ch = ws[0].shape[0]
    d_lat = ws[0].shape[2]                  # == output_dim of MultiChannelDecoder
    d_data = ws[-1].shape[1]                # == input_dim  of MultiChannelDecoder
    n = z.shape[0]
    assert z.shape[1] == d_lat

    # Layout plumbing: torch (out,in) -> (in,out) so the kernel does x @ W.
    wts = [jnp.transpose(w, (0, 2, 1)) for w in ws]

    vmem = pl.BlockSpec(memory_space=pltpu.MemorySpace.VMEM)

    # Packed-column geometry (channel-major along lanes, padded to the tile grid).
    m = num_ch * d_data
    tile_m = _round_up(tile_m, 128)
    tm = min(tile_m, _round_up(m, 128))
    m_pad = _round_up(m, tm)

    # ---- Kernel 1: sigmatrices (weight-only compute, whole blocks in VMEM). ----
    sig_packed, norm_packed = pl.pallas_call(
        _sig_kernel,
        out_shape=(jax.ShapeDtypeStruct((d_lat, m_pad), jnp.float32),
                   jax.ShapeDtypeStruct((d_lat, m_pad), jnp.float32)),
        in_specs=[vmem] * 5,
        out_specs=(vmem, vmem),
        compiler_params=pltpu.CompilerParams(vmem_limit_bytes=_VMEM_LIMIT),
    )(*wts)

    # ---- Kernel 2: recon = z @ sig for all channels at once, tiled (N, M). ----
    tn = min(tile_n, _round_up(n, 8))
    n_pad = _round_up(n, tn)
    z_p = z if n_pad == n else jnp.pad(z, ((0, n_pad - n), (0, 0)))

    flops = 2 * n_pad * d_lat * m_pad
    bytes_accessed = 4 * (n_pad * d_lat + d_lat * m_pad + n_pad * m_pad)

    recon_packed = pl.pallas_call(
        _recon_kernel,
        grid=(n_pad // tn, m_pad // tm),
        out_shape=jax.ShapeDtypeStruct((n_pad, m_pad), jnp.float32),
        in_specs=[pl.BlockSpec((tn, d_lat), lambda i, j: (i, 0)),
                  pl.BlockSpec((d_lat, tm), lambda i, j: (0, j))],
        out_specs=pl.BlockSpec((tn, tm), lambda i, j: (i, j)),
        compiler_params=pltpu.CompilerParams(
            dimension_semantics=("parallel", "parallel"),
            vmem_limit_bytes=_VMEM_LIMIT),
        cost_estimate=pl.CostEstimate(flops=flops, transcendentals=0,
                                      bytes_accessed=bytes_accessed),
    )(z_p, sig_packed)

    # Layout plumbing back to the PyTorch output layouts.
    stacked_recon = jnp.transpose(
        recon_packed[:n, :m].reshape(n, num_ch, d_data), (0, 2, 1))     # (N, D_data, C)
    norm_stacked_sig = jnp.transpose(
        norm_packed[:, :m].reshape(d_lat, num_ch, d_data), (0, 2, 1))   # (D_lat, D_data, C)
    return stacked_recon, norm_stacked_sig


# --------------------------------------------------------------------------- #
# Params / reference                                                          #
# --------------------------------------------------------------------------- #
def init_params(key, input_dim, channels, output_dim):
    """Stacked per-channel ChannelDecoder weights, torch Linear layout (C, out, in).

    Each ChannelDecoder maps output_dim -> 64 -> 128 -> 256 -> 512 -> input_dim.
    Weights are drawn positive (same magnitude as nn.Linear's default bound) so the
    channel-sum normalization denominator is strictly positive; this keeps the
    numerical check clean without changing the forward-pass math.
    """
    # TODO(synk): the unused `decompressor` Linear(1, channels) has no effect on
    # forward and is intentionally omitted.
    dims = [output_dim] + list(HIDDEN) + [input_dim]
    keys = jax.random.split(key, len(dims) - 1)
    ws = []
    for l in range(len(dims) - 1):
        bound = 1.0 / float(dims[l]) ** 0.5
        ws.append(jax.random.uniform(keys[l], (channels, dims[l + 1], dims[l]),
                                     jnp.float32, 0.05 * bound, bound))
    return {"decoder_weights": ws}


def reference_forward(z, params):
    """Pure-JAX reference matching the PyTorch forward exactly."""
    ws = params["decoder_weights"]
    num_ch = ws[0].shape[0]
    sigs, recons = [], []
    for c in range(num_ch):
        s = ws[0][c].T
        for w in ws[1:]:
            s = s @ w[c].T
        s = jnp.maximum(s, 0.0)
        sigs.append(s)
        recons.append(z @ s)
    stacked_recon = jnp.stack(recons, axis=2)
    stacked_sig = jnp.stack(sigs, axis=2)
    norm = stacked_sig / jnp.sum(stacked_sig, axis=2, keepdims=True)
    return stacked_recon, norm


def _rel_err(a, b):
    return float(jnp.max(jnp.abs(a - b)) / (jnp.max(jnp.abs(b)) + 1e-12))


if __name__ == "__main__":
    key = jax.random.PRNGKey(0)
    kz, kp = jax.random.split(key)

    # MultiChannelDecoder(input_dim=32, channels=4, output_dim=16); batch N=8.
    N, input_dim, channels, output_dim = 8, 32, 4, 16
    params = init_params(kp, input_dim, channels, output_dim)
    z = jax.random.normal(kz, (N, output_dim), jnp.float32)

    recon, norm_sig = multi_channel_decoder_forward(z, params)
    jax.block_until_ready((recon, norm_sig))

    ref_recon, ref_norm = reference_forward(z, params)
    assert recon.shape == (N, input_dim, channels)
    assert norm_sig.shape == (output_dim, input_dim, channels)
    assert _rel_err(recon, ref_recon) < 2e-3, _rel_err(recon, ref_recon)
    assert _rel_err(norm_sig, ref_norm) < 2e-3, _rel_err(norm_sig, ref_norm)

    print("KERNEL_OK")
</pallas_src>

<mosaic_0001>
module attributes {stable_mosaic.version = 11 : i64} {
  func.func @_sig_kernel(%arg0: memref<4x16x64xf32, #tpu.memory_space<vmem>>, %arg1: memref<4x64x128xf32, #tpu.memory_space<vmem>>, %arg2: memref<4x128x256xf32, #tpu.memory_space<vmem>>, %arg3: memref<4x256x512xf32, #tpu.memory_space<vmem>>, %arg4: memref<4x512x32xf32, #tpu.memory_space<vmem>>, %arg5: memref<16x128xf32, #tpu.memory_space<vmem>>, %arg6: memref<16x128xf32, #tpu.memory_space<vmem>>) attributes {dimension_semantics = [], scalar_prefetch = 0 : i64, scratch_operands = 0 : i64, tpu.core_type = #tpu.core_type<tc>} {
    %c0 = arith.constant 0 : index
    %c0_0 = arith.constant 0 : index
    %c0_1 = arith.constant 0 : index
    %0 = vector.load %arg0[%c0, %c0_0, %c0_1] : memref<4x16x64xf32, #tpu.memory_space<vmem>>, vector<1x16x64xf32>
    %1 = vector.shape_cast %0 : vector<1x16x64xf32> to vector<16x64xf32>
    %c0_2 = arith.constant 0 : index
    %c0_3 = arith.constant 0 : index
    %c0_4 = arith.constant 0 : index
    %2 = vector.load %arg1[%c0_2, %c0_3, %c0_4] : memref<4x64x128xf32, #tpu.memory_space<vmem>>, vector<1x64x128xf32>
    %3 = vector.shape_cast %2 : vector<1x64x128xf32> to vector<64x128xf32>
    %cst = arith.constant dense<0.000000e+00> : vector<16x128xf32>
    %4 = tpu.matmul %1, %3, %cst {dimension_numbers = #tpu.dot_dimension_numbers<[1], [0], [0], [1], [0, 0, 1, 1], [], []>} : vector<16x64xf32>, vector<64x128xf32>, vector<16x128xf32> -> vector<16x128xf32>
    %c0_5 = arith.constant 0 : index
    %c0_6 = arith.constant 0 : index
    %c0_7 = arith.constant 0 : index
    %5 = vector.load %arg2[%c0_5, %c0_6, %c0_7] : memref<4x128x256xf32, #tpu.memory_space<vmem>>, vector<1x128x256xf32>
    %6 = vector.shape_cast %5 : vector<1x128x256xf32> to vector<128x256xf32>
    %cst_8 = arith.constant dense<0.000000e+00> : vector<16x256xf32>
    %7 = tpu.matmul %4, %6, %cst_8 {dimension_numbers = #tpu.dot_dimension_numbers<[1], [0], [0], [1], [0, 0, 1, 1], [], []>} : vector<16x128xf32>, vector<128x256xf32>, vector<16x256xf32> -> vector<16x256xf32>
    %c0_9 = arith.constant 0 : index
    %c0_10 = arith.constant 0 : index
    %c0_11 = arith.constant 0 : index
    %8 = vector.load %arg3[%c0_9, %c0_10, %c0_11] : memref<4x256x512xf32, #tpu.memory_space<vmem>>, vector<1x256x512xf32>
    %9 = vector.shape_cast %8 : vector<1x256x512xf32> to vector<256x512xf32>
    %cst_12 = arith.constant dense<0.000000e+00> : vector<16x512xf32>
    %10 = tpu.matmul %7, %9, %cst_12 {dimension_numbers = #tpu.dot_dimension_numbers<[1], [0], [0], [1], [0, 0, 1, 1], [], []>} : vector<16x256xf32>, vector<256x512xf32>, vector<16x512xf32> -> vector<16x512xf32>
    %c0_13 = arith.constant 0 : index
    %c0_14 = arith.constant 0 : index
    %c0_15 = arith.constant 0 : index
    %11 = vector.load %arg4[%c0_13, %c0_14, %c0_15] : memref<4x512x32xf32, #tpu.memory_space<vmem>>, vector<1x512x32xf32>
    %12 = vector.shape_cast %11 : vector<1x512x32xf32> to vector<512x32xf32>
    %cst_16 = arith.constant dense<0.000000e+00> : vector<16x32xf32>
    %13 = tpu.matmul %10, %12, %cst_16 {dimension_numbers = #tpu.dot_dimension_numbers<[1], [0], [0], [1], [0, 0, 1, 1], [], []>} : vector<16x512xf32>, vector<512x32xf32>, vector<16x32xf32> -> vector<16x32xf32>
    %cst_17 = arith.constant 0.000000e+00 : f32
    %14 = vector.broadcast %cst_17 : f32 to vector<16x32xf32>
    %15 = arith.maximumf %13, %14 : vector<16x32xf32>
    %c1 = arith.constant 1 : index
    %c0_18 = arith.constant 0 : index
    %c0_19 = arith.constant 0 : index
    %16 = vector.load %arg0[%c1, %c0_18, %c0_19] : memref<4x16x64xf32, #tpu.memory_space<vmem>>, vector<1x16x64xf32>
    %17 = vector.shape_cast %16 : vector<1x16x64xf32> to vector<16x64xf32>
    %c1_20 = arith.constant 1 : index
    %c0_21 = arith.constant 0 : index
    %c0_22 = arith.constant 0 : index
    %18 = vector.load %arg1[%c1_20, %c0_21, %c0_22] : memref<4x64x128xf32, #tpu.memory_space<vmem>>, vector<1x64x128xf32>
    %19 = vector.shape_cast %18 : vector<1x64x128xf32> to vector<64x128xf32>
    %cst_23 = arith.constant dense<0.000000e+00> : vector<16x128xf32>
    %20 = tpu.matmul %17, %19, %cst_23 {dimension_numbers = #tpu.dot_dimension_numbers<[1], [0], [0], [1], [0, 0, 1, 1], [], []>} : vector<16x64xf32>, vector<64x128xf32>, vector<16x128xf32> -> vector<16x128xf32>
    %c1_24 = arith.constant 1 : index
    %c0_25 = arith.constant 0 : index
    %c0_26 = arith.constant 0 : index
    %21 = vector.load %arg2[%c1_24, %c0_25, %c0_26] : memref<4x128x256xf32, #tpu.memory_space<vmem>>, vector<1x128x256xf32>
    %22 = vector.shape_cast %21 : vector<1x128x256xf32> to vector<128x256xf32>
    %cst_27 = arith.constant dense<0.000000e+00> : vector<16x256xf32>
    %23 = tpu.matmul %20, %22, %cst_27 {dimension_numbers = #tpu.dot_dimension_numbers<[1], [0], [0], [1], [0, 0, 1, 1], [], []>} : vector<16x128xf32>, vector<128x256xf32>, vector<16x256xf32> -> vector<16x256xf32>
    %c1_28 = arith.constant 1 : index
    %c0_29 = arith.constant 0 : index
    %c0_30 = arith.constant 0 : index
    %24 = vector.load %arg3[%c1_28, %c0_29, %c0_30] : memref<4x256x512xf32, #tpu.memory_space<vmem>>, vector<1x256x512xf32>
    %25 = vector.shape_cast %24 : vector<1x256x512xf32> to vector<256x512xf32>
    %cst_31 = arith.constant dense<0.000000e+00> : vector<16x512xf32>
    %26 = tpu.matmul %23, %25, %cst_31 {dimension_numbers = #tpu.dot_dimension_numbers<[1], [0], [0], [1], [0, 0, 1, 1], [], []>} : vector<16x256xf32>, vector<256x512xf32>, vector<16x512xf32> -> vector<16x512xf32>
    %c1_32 = arith.constant 1 : index
    %c0_33 = arith.constant 0 : index
    %c0_34 = arith.constant 0 : index
    %27 = vector.load %arg4[%c1_32, %c0_33, %c0_34] : memref<4x512x32xf32, #tpu.memory_space<vmem>>, vector<1x512x32xf32>
    %28 = vector.shape_cast %27 : vector<1x512x32xf32> to vector<512x32xf32>
    %cst_35 = arith.constant dense<0.000000e+00> : vector<16x32xf32>
    %29 = tpu.matmul %26, %28, %cst_35 {dimension_numbers = #tpu.dot_dimension_numbers<[1], [0], [0], [1], [0, 0, 1, 1], [], []>} : vector<16x512xf32>, vector<512x32xf32>, vector<16x32xf32> -> vector<16x32xf32>
    %cst_36 = arith.constant 0.000000e+00 : f32
    %30 = vector.broadcast %cst_36 : f32 to vector<16x32xf32>
    %31 = arith.maximumf %29, %30 : vector<16x32xf32>
    %c2 = arith.constant 2 : index
    %c0_37 = arith.constant 0 : index
    %c0_38 = arith.constant 0 : index
    %32 = vector.load %arg0[%c2, %c0_37, %c0_38] : memref<4x16x64xf32, #tpu.memory_space<vmem>>, vector<1x16x64xf32>
    %33 = vector.shape_cast %32 : vector<1x16x64xf32> to vector<16x64xf32>
    %c2_39 = arith.constant 2 : index
    %c0_40 = arith.constant 0 : index
    %c0_41 = arith.constant 0 : index
    %34 = vector.load %arg1[%c2_39, %c0_40, %c0_41] : memref<4x64x128xf32, #tpu.memory_space<vmem>>, vector<1x64x128xf32>
    %35 = vector.shape_cast %34 : vector<1x64x128xf32> to vector<64x128xf32>
    %cst_42 = arith.constant dense<0.000000e+00> : vector<16x128xf32>
    %36 = tpu.matmul %33, %35, %cst_42 {dimension_numbers = #tpu.dot_dimension_numbers<[1], [0], [0], [1], [0, 0, 1, 1], [], []>} : vector<16x64xf32>, vector<64x128xf32>, vector<16x128xf32> -> vector<16x128xf32>
    %c2_43 = arith.constant 2 : index
    %c0_44 = arith.constant 0 : index
    %c0_45 = arith.constant 0 : index
    %37 = vector.load %arg2[%c2_43, %c0_44, %c0_45] : memref<4x128x256xf32, #tpu.memory_space<vmem>>, vector<1x128x256xf32>
    %38 = vector.shape_cast %37 : vector<1x128x256xf32> to vector<128x256xf32>
    %cst_46 = arith.constant dense<0.000000e+00> : vector<16x256xf32>
    %39 = tpu.matmul %36, %38, %cst_46 {dimension_numbers = #tpu.dot_dimension_numbers<[1], [0], [0], [1], [0, 0, 1, 1], [], []>} : vector<16x128xf32>, vector<128x256xf32>, vector<16x256xf32> -> vector<16x256xf32>
    %c2_47 = arith.constant 2 : index
    %c0_48 = arith.constant 0 : index
    %c0_49 = arith.constant 0 : index
    %40 = vector.load %arg3[%c2_47, %c0_48, %c0_49] : memref<4x256x512xf32, #tpu.memory_space<vmem>>, vector<1x256x512xf32>
    %41 = vector.shape_cast %40 : vector<1x256x512xf32> to vector<256x512xf32>
    %cst_50 = arith.constant dense<0.000000e+00> : vector<16x512xf32>
    %42 = tpu.matmul %39, %41, %cst_50 {dimension_numbers = #tpu.dot_dimension_numbers<[1], [0], [0], [1], [0, 0, 1, 1], [], []>} : vector<16x256xf32>, vector<256x512xf32>, vector<16x512xf32> -> vector<16x512xf32>
    %c2_51 = arith.constant 2 : index
    %c0_52 = arith.constant 0 : index
    %c0_53 = arith.constant 0 : index
    %43 = vector.load %arg4[%c2_51, %c0_52, %c0_53] : memref<4x512x32xf32, #tpu.memory_space<vmem>>, vector<1x512x32xf32>
    %44 = vector.shape_cast %43 : vector<1x512x32xf32> to vector<512x32xf32>
    %cst_54 = arith.constant dense<0.000000e+00> : vector<16x32xf32>
    %45 = tpu.matmul %42, %44, %cst_54 {dimension_numbers = #tpu.dot_dimension_numbers<[1], [0], [0], [1], [0, 0, 1, 1], [], []>} : vector<16x512xf32>, vector<512x32xf32>, vector<16x32xf32> -> vector<16x32xf32>
    %cst_55 = arith.constant 0.000000e+00 : f32
    %46 = vector.broadcast %cst_55 : f32 to vector<16x32xf32>
    %47 = arith.maximumf %45, %46 : vector<16x32xf32>
    %c3 = arith.constant 3 : index
    %c0_56 = arith.constant 0 : index
    %c0_57 = arith.constant 0 : index
    %48 = vector.load %arg0[%c3, %c0_56, %c0_57] : memref<4x16x64xf32, #tpu.memory_space<vmem>>, vector<1x16x64xf32>
    %49 = vector.shape_cast %48 : vector<1x16x64xf32> to vector<16x64xf32>
    %c3_58 = arith.constant 3 : index
    %c0_59 = arith.constant 0 : index
    %c0_60 = arith.constant 0 : index
    %50 = vector.load %arg1[%c3_58, %c0_59, %c0_60] : memref<4x64x128xf32, #tpu.memory_space<vmem>>, vector<1x64x128xf32>
    %51 = vector.shape_cast %50 : vector<1x64x128xf32> to vector<64x128xf32>
    %cst_61 = arith.constant dense<0.000000e+00> : vector<16x128xf32>
    %52 = tpu.matmul %49, %51, %cst_61 {dimension_numbers = #tpu.dot_dimension_numbers<[1], [0], [0], [1], [0, 0, 1, 1], [], []>} : vector<16x64xf32>, vector<64x128xf32>, vector<16x128xf32> -> vector<16x128xf32>
    %c3_62 = arith.constant 3 : index
    %c0_63 = arith.constant 0 : index
    %c0_64 = arith.constant 0 : index
    %53 = vector.load %arg2[%c3_62, %c0_63, %c0_64] : memref<4x128x256xf32, #tpu.memory_space<vmem>>, vector<1x128x256xf32>
    %54 = vector.shape_cast %53 : vector<1x128x256xf32> to vector<128x256xf32>
    %cst_65 = arith.constant dense<0.000000e+00> : vector<16x256xf32>
    %55 = tpu.matmul %52, %54, %cst_65 {dimension_numbers = #tpu.dot_dimension_numbers<[1], [0], [0], [1], [0, 0, 1, 1], [], []>} : vector<16x128xf32>, vector<128x256xf32>, vector<16x256xf32> -> vector<16x256xf32>
    %c3_66 = arith.constant 3 : index
    %c0_67 = arith.constant 0 : index
    %c0_68 = arith.constant 0 : index
    %56 = vector.load %arg3[%c3_66, %c0_67, %c0_68] : memref<4x256x512xf32, #tpu.memory_space<vmem>>, vector<1x256x512xf32>
    %57 = vector.shape_cast %56 : vector<1x256x512xf32> to vector<256x512xf32>
    %cst_69 = arith.constant dense<0.000000e+00> : vector<16x512xf32>
    %58 = tpu.matmul %55, %57, %cst_69 {dimension_numbers = #tpu.dot_dimension_numbers<[1], [0], [0], [1], [0, 0, 1, 1], [], []>} : vector<16x256xf32>, vector<256x512xf32>, vector<16x512xf32> -> vector<16x512xf32>
    %c3_70 = arith.constant 3 : index
    %c0_71 = arith.constant 0 : index
    %c0_72 = arith.constant 0 : index
    %59 = vector.load %arg4[%c3_70, %c0_71, %c0_72] : memref<4x512x32xf32, #tpu.memory_space<vmem>>, vector<1x512x32xf32>
    %60 = vector.shape_cast %59 : vector<1x512x32xf32> to vector<512x32xf32>
    %cst_73 = arith.constant dense<0.000000e+00> : vector<16x32xf32>
    %61 = tpu.matmul %58, %60, %cst_73 {dimension_numbers = #tpu.dot_dimension_numbers<[1], [0], [0], [1], [0, 0, 1, 1], [], []>} : vector<16x512xf32>, vector<512x32xf32>, vector<16x32xf32> -> vector<16x32xf32>
    %cst_74 = arith.constant 0.000000e+00 : f32
    %62 = vector.broadcast %cst_74 : f32 to vector<16x32xf32>
    %63 = arith.maximumf %61, %62 : vector<16x32xf32>
    %64 = arith.addf %15, %31 : vector<16x32xf32>
    %65 = arith.addf %64, %47 : vector<16x32xf32>
    %66 = arith.addf %65, %63 : vector<16x32xf32>
    %cst_75 = arith.constant 1.000000e+00 : f32
    %67 = vector.broadcast %cst_75 : f32 to vector<16x32xf32>
    %68 = arith.divf %67, %66 : vector<16x32xf32>
    %69 = tpu.concatenate %15, %31, %47, %63 in 1 : vector<16x32xf32>, vector<16x32xf32>, vector<16x32xf32>, vector<16x32xf32> -> vector<16x128xf32>
    %c0_76 = arith.constant 0 : index
    %c0_77 = arith.constant 0 : index
    %70 = vector.load %arg5[%c0_76, %c0_77] : memref<16x128xf32, #tpu.memory_space<vmem>>, vector<16x128xf32>
    tpu.vector_store %arg5[%c0_76, %c0_77], %69 {strides = array<i32>} : memref<16x128xf32, #tpu.memory_space<vmem>>, vector<16x128xf32>,
    %71 = arith.mulf %15, %68 : vector<16x32xf32>
    %72 = arith.mulf %31, %68 : vector<16x32xf32>
    %73 = arith.mulf %47, %68 : vector<16x32xf32>
    %74 = arith.mulf %63, %68 : vector<16x32xf32>
    %75 = tpu.concatenate %71, %72, %73, %74 in 1 : vector<16x32xf32>, vector<16x32xf32>, vector<16x32xf32>, vector<16x32xf32> -> vector<16x128xf32>
    %c0_78 = arith.constant 0 : index
    %c0_79 = arith.constant 0 : index
    %76 = vector.load %arg6[%c0_78, %c0_79] : memref<16x128xf32, #tpu.memory_space<vmem>>, vector<16x128xf32>
    tpu.vector_store %arg6[%c0_78, %c0_79], %75 {strides = array<i32>} : memref<16x128xf32, #tpu.memory_space<vmem>>, vector<16x128xf32>,
    return
  }
}

</mosaic_0001>

<llo_original>
// kernel: tpu_custom_call.1
$region0: #{tpu_custom_call.1}
  #allocation0 [shape = 'u32[]', space=smem, size = 0x4, offset = 0x4, fixed_abs, tag = 'smem constant byte address 0x4 - core index']
  #allocation1 [shape = 'u32[144,128]{1,0:T(1,128)}', space=vmem, size = 0x12000, scoped, tag = 'internal scratch']
  %s0 = inlined_call_operand.hbm [shape: f32[4,16,64], index: 0, kind: input, shape index: {}]
  %s1 = inlined_call_operand.hbm [shape: f32[4,64,128], index: 1, kind: input, shape index: {}]
  %s2 = inlined_call_operand.hbm [shape: f32[4,128,256], index: 2, kind: input, shape index: {}]
  %s3 = inlined_call_operand.hbm [shape: f32[4,256,512], index: 3, kind: input, shape index: {}]
  %s4 = inlined_call_operand.vmem [shape: f32[4,512,32], index: 4, kind: input, shape index: {}]
  %s5 = inlined_call_operand.hbm [shape: f32[16,128], index: 5, kind: output, shape index: {0}]
  %s6 = inlined_call_operand.hbm [shape: f32[16,128], index: 6, kind: output, shape index: {1}]
  %7 = xla_tuple %s5, %s6
  %s8 = sld [smem:[#allocation0]]
  $region54: #{tpu_custom_call.1} parent=0
    _
  %s10 = ssub.s32 1, %s8
  %s11 = scalar_select 0, %s10, %s8
  $region1: #{tpu_custom_call.1} parent=0
    #allocation2 [shape = 'u8[32768]{0}', space=vmem, size = 0x8000, scoped, tag = 'input window, operand 0, single buffered']
    #allocation3 [shape = 's32[1]{0}', space=sflag, size = 0x4, scoped, tag = 'scoped memory for tpu_custom_call.1']
    #allocation4 [shape = 's32[1]{0}', space=sflag, size = 0x4, scoped, tag = 'scoped memory for tpu_custom_call.1']
    #allocation5 [shape = 'u8[131072]{0}', space=vmem, size = 0x20000, scoped, tag = 'input window, operand 1, single buffered']
    #allocation6 [shape = 's32[1]{0}', space=sflag, size = 0x4, scoped, tag = 'scoped memory for tpu_custom_call.1']
    #allocation7 [shape = 'u8[524288]{0}', space=vmem, size = 0x80000, scoped, tag = 'input window, operand 2, single buffered']
    #allocation8 [shape = 'u8[2097152]{0}', space=vmem, size = 0x200000, scoped, tag = 'input window, operand 3, single buffered']
    #allocation9 [shape = 's32[1]{0}', space=sflag, size = 0x4, scoped, tag = 'scoped memory for tpu_custom_call.1']
    #allocation10 [shape = 'u8[8192]{0}', space=vmem, size = 0x2000, scoped, tag = 'output window, operand 0, single buffered']
    #allocation11 [shape = 'u8[8192]{0}', space=vmem, size = 0x2000, scoped, tag = 'output window, operand 1, single buffered']
    #allocation12 [shape = 's32[1]{0}', space=sflag, size = 0x4, scoped, tag = 'scoped memory for tpu_custom_call.1']
    %12 = vsyncpa [#allocation3], 0
    %13 = vsyncpa [#allocation6], 0
    %14 = vsyncpa [#allocation9], 0
    %15 = vsyncpa [#allocation4], 0
    %16 = vsyncpa [#allocation12], 0
    // Predicated region
    $region2: #{tpu_custom_call.1} parent=1 // pred_check
      _
    $region3: #{tpu_custom_call.1} parent=1 // pred_check_branch
      %18 = sbr.rel (0) target = $region5
    $region4: #{tpu_custom_call.1} parent=1 // pred_region
      %s20 = ssub.s32 1024, 1024
      %21 = vsyncadd [#allocation3], %s20
      %s22 = sshll.u32 [#allocation2], 4
      %s23 = int_to_ptr.vmem [resolvable:$true] %s22
      %28 = dma.hbm_to_vmem [thread:$0]  %s0, 1024, %s23, [#allocation3], 128, 128, 8
    $region5: #{tpu_custom_call.1} parent=1 // pred_fallthru
      _
    // Predicated region
    $region6: #{tpu_custom_call.1} parent=1 // pred_check
      _
    $region7: #{tpu_custom_call.1} parent=1 // pred_check_branch
      %30 = sbr.rel (0) target = $region9
    $region8: #{tpu_custom_call.1} parent=1 // pred_region
      %s32 = ssub.s32 4096, 4096
      %33 = vsyncadd [#allocation6], %s32
      %s34 = sshll.u32 [#allocation5], 4
      %s35 = int_to_ptr.vmem [resolvable:$true] %s34
      %40 = dma.hbm_to_vmem [thread:$0]  %s1, 4096, %s35, [#allocation6], 128, 128, 8
    $region9: #{tpu_custom_call.1} parent=1 // pred_fallthru
      _
    // Predicated region
    $region10: #{tpu_custom_call.1} parent=1 // pred_check
      _
    $region11: #{tpu_custom_call.1} parent=1 // pred_check_branch
      %42 = sbr.rel (0) target = $region13
    $region12: #{tpu_custom_call.1} parent=1 // pred_region
      %s44 = ssub.s32 16384, 16384
      %45 = vsyncadd [#allocation6], %s44
      %s46 = sshll.u32 [#allocation7], 4
      %s47 = int_to_ptr.vmem [resolvable:$true] %s46
      %52 = dma.hbm_to_vmem [thread:$0]  %s2, 16384, %s47, [#allocation6], 256, 256, 16
    $region13: #{tpu_custom_call.1} parent=1 // pred_fallthru
      _
    // Predicated region
    $region14: #{tpu_custom_call.1} parent=1 // pred_check
      _
    $region15: #{tpu_custom_call.1} parent=1 // pred_check_branch
      %54 = sbr.rel (0) target = $region17
    $region16: #{tpu_custom_call.1} parent=1 // pred_region
      %s56 = ssub.s32 65536, 65536
      %57 = vsyncadd [#allocation9], %s56
      %s58 = sshll.u32 [#allocation8], 4
      %s59 = int_to_ptr.vmem [resolvable:$true] %s58
      %64 = dma.hbm_to_vmem [thread:$0]  %s3, 65536, %s59, [#allocation9], 512, 512, 32
    $region17: #{tpu_custom_call.1} parent=1 // pred_fallthru
      _
    // Predicated region
    $region18: #{tpu_custom_call.1} parent=1 // pred_check
      _
    $region19: #{tpu_custom_call.1} parent=1 // pred_check_branch
      %66 = sbr.rel (0) target = $region21
    $region20: #{tpu_custom_call.1} parent=1 // pred_region
      _
    $region21: #{tpu_custom_call.1} parent=1 // pred_fallthru
      _
    // Predicated region
    $region22: #{tpu_custom_call.1} parent=1 // pred_check
      _
    $region23: #{tpu_custom_call.1} parent=1 // pred_check_branch
      %68 = sbr.rel (0) target = $region25
    $region24: #{tpu_custom_call.1} parent=1 // pred_region
      %69 = dma.done [#allocation3], 1024
    $region25: #{tpu_custom_call.1} parent=1 // pred_fallthru
      _
    // Predicated region
    $region26: #{tpu_custom_call.1} parent=1 // pred_check
      _
    $region27: #{tpu_custom_call.1} parent=1 // pred_check_branch
      %71 = sbr.rel (0) target = $region29
    $region28: #{tpu_custom_call.1} parent=1 // pred_region
      %72 = dma.done [#allocation6], 4096
    $region29: #{tpu_custom_call.1} parent=1 // pred_fallthru
      _
    // Predicated region
    $region30: #{tpu_custom_call.1} parent=1 // pred_check
      _
    $region31: #{tpu_custom_call.1} parent=1 // pred_check_branch
      %74 = sbr.rel (0) target = $region33
    $region32: #{tpu_custom_call.1} parent=1 // pred_region
      %75 = dma.done [#allocation6], 16384
    $region33: #{tpu_custom_call.1} parent=1 // pred_fallthru
      _
    // Predicated region
    $region34: #{tpu_custom_call.1} parent=1 // pred_check
      _
    $region35: #{tpu_custom_call.1} parent=1 // pred_check_branch
      %77 = sbr.rel (0) target = $region37
    $region36: #{tpu_custom_call.1} parent=1 // pred_region
      %78 = dma.done [#allocation9], 65536
    $region37: #{tpu_custom_call.1} parent=1 // pred_fallthru
      _
    %v79 = vld [vmem:[#allocation2] sm:$0xff]
    %v80 = vld [vmem:[#allocation2 + $0x8] sm:$0xff]
    %v81 = vld [vmem:[#allocation5] sm:$0xff]
    %v82 = vld [vmem:[#allocation5 + $0x8] sm:$0xff]
    %v83 = vld [vmem:[#allocation5 + $0x10] sm:$0xff]
    %v84 = vld [vmem:[#allocation5 + $0x18] sm:$0xff]
    %v85 = vld [vmem:[#allocation5 + $0x20] sm:$0xff]
    %v86 = vld [vmem:[#allocation5 + $0x28] sm:$0xff]
    %v87 = vld [vmem:[#allocation5 + $0x30] sm:$0xff]
    %v88 = vld [vmem:[#allocation5 + $0x38] sm:$0xff]
    %vm89 = vcmask 523264
    %v91 = vsel %vm89, %v79, 0
    %v94 = vsel %vm89, %v80, 0
    %96 = vmatprep.subr.mxu0 0.0
    %97 = vmatpush1.msra.mxu0 0.0
    %98 = vmatprep.subr.mxu0 0.0
    %99 = vmatpush1.msra.mxu0 0.0
    %100 = vmatprep.subr.mxu0 0.0
    %101 = vmatpush1.msra.mxu0 0.0
    %102 = vmatprep.subr.mxu0 0.0
    %103 = vmatpush1.msra.mxu0 0.0
    %104 = vmatprep.subr.mxu0 0.0
    %105 = vmatpush1.msra.mxu0 0.0
    %106 = vmatprep.subr.mxu0 0.0
    %107 = vmatpush1.msra.mxu0 0.0
    %108 = vmatprep.subr.mxu0 0.0
    %109 = vmatpush1.msra.mxu0 0.0
    %110 = vmatprep.subr.mxu0 0.0
    %111 = vmatpush1.msra.mxu0 0.0
    %112 = vmatprep.subr.mxu0 0.0
    %113 = vmatpush1.msra.mxu0 %v88
    %114 = vmatprep.subr.mxu0 0.0
    %115 = vmatpush1.msra.mxu0 %v87
    %116 = vmatprep.subr.mxu0 0.0
    %117 = vmatpush1.msra.mxu0 %v86
    %118 = vmatprep.subr.mxu0 0.0
    %119 = vmatpush1.msra.mxu0 %v85
    %120 = vmatprep.subr.mxu0 0.0
    %121 = vmatpush1.msra.mxu0 %v84
    %122 = vmatprep.subr.mxu0 0.0
    %123 = vmatpush1.msra.mxu0 %v83
    %124 = vmatprep.subr.mxu0 0.0
    %125 = vmatpush1.msra.mxu0 %v82
    %126 = vmatprep.subr.mxu0 0.0
    %127 = vmatpush1.msra.mxu0 %v81
    %128 = vmatprep.subr.mxu0 0.0
    %129 = vmatpush2.msra.mxu0 0.0
    %130 = vmatprep.subr.mxu0 0.0
    %131 = vmatpush2.msra.mxu0 0.0
    %132 = vmatprep.subr.mxu0 0.0
    %133 = vmatpush2.msra.mxu0 0.0
    %134 = vmatprep.subr.mxu0 0.0
    %135 = vmatpush2.msra.mxu0 0.0
    %136 = vmatprep.subr.mxu0 0.0
    %137 = vmatpush2.msra.mxu0 0.0
    %138 = vmatprep.subr.mxu0 0.0
    %139 = vmatpush2.msra.mxu0 0.0
    %140 = vmatprep.subr.mxu0 0.0
    %141 = vmatpush2.msra.mxu0 0.0
    %142 = vmatprep.subr.mxu0 0.0
    %143 = vmatpush2.msra.mxu0 0.0
    %144 = vmatprep.subr.mxu0 0.0
    %145 = vmatpush2.msra.mxu0 0.0
    %146 = vmatprep.subr.mxu0 0.0
    %147 = vmatpush2.msra.mxu0 0.0
    %148 = vmatprep.subr.mxu0 0.0
    %149 = vmatpush2.msra.mxu0 0.0
    %150 = vmatprep.subr.mxu0 0.0
    %151 = vmatpush2.msra.mxu0 0.0
    %152 = vmatprep.subr.mxu0 0.0
    %153 = vmatpush2.msra.mxu0 0.0
    %154 = vmatprep.subr.mxu0 0.0
    %155 = vmatpush2.msra.mxu0 0.0
    %156 = vmatprep.subr.mxu0 0.0
    %157 = vmatpush2.msra.mxu0 0.0
    %158 = vmatprep.subr.mxu0 0.0
    %159 = vmatpush2.msra.mxu0 0.0
    %160 = vmatprep.mubr.f32.mxu0 0.0
    %161 = vmatmul.mubr.f32.gmra.mxu0 %v91
    %v162 = vpop.f32.mrf.mxu0
    %v163 = vadd.f32 0.0, %v162
    %v164 = vpop.f32.mrf.mxu0
    %165 = vmatprep.mubr.f32.mxu0 0.0
    %166 = vmatmul.mubr.f32.gmra.mxu0 %v94
    %v167 = vpop.f32.mrf.mxu0
    %v168 = vadd.f32 0.0, %v167
    %v169 = vpop.f32.mrf.mxu0
    %170 = vdwg.mxu0
    %v171 = vld [vmem:[#allocation7] sm:$0xff]
    %v172 = vld [vmem:[#allocation7 + $0x8] sm:$0xff]
    %v173 = vld [vmem:[#allocation7 + $0x10] sm:$0xff]
    %v174 = vld [vmem:[#allocation7 + $0x18] sm:$0xff]
    %v175 = vld [vmem:[#allocation7 + $0x20] sm:$0xff]
    %v176 = vld [vmem:[#allocation7 + $0x28] sm:$0xff]
    %v177 = vld [vmem:[#allocation7 + $0x30] sm:$0xff]
    %v178 = vld [vmem:[#allocation7 + $0x38] sm:$0xff]
    %v179 = vld [vmem:[#allocation7 + $0x40] sm:$0xff]
    %v180 = vld [vmem:[#allocation7 + $0x48] sm:$0xff]
    %v181 = vld [vmem:[#allocation7 + $0x50] sm:$0xff]
    %v182 = vld [vmem:[#allocation7 + $0x58] sm:$0xff]
    %v183 = vld [vmem:[#allocation7 + $0x60] sm:$0xff]
    %v184 = vld [vmem:[#allocation7 + $0x68] sm:$0xff]
    %v185 = vld [vmem:[#allocation7 + $0x70] sm:$0xff]
    %v186 = vld [vmem:[#allocation7 + $0x78] sm:$0xff]
    %v187 = vld [vmem:[#allocation7 + $0x80] sm:$0xff]
    %v188 = vld [vmem:[#allocation7 + $0x88] sm:$0xff]
    %v189 = vld [vmem:[#allocation7 + $0x90] sm:$0xff]
    %v190 = vld [vmem:[#allocation7 + $0x98] sm:$0xff]
    %v191 = vld [vmem:[#allocation7 + $0xa0] sm:$0xff]
    %v192 = vld [vmem:[#allocation7 + $0xa8] sm:$0xff]
    %v193 = vld [vmem:[#allocation7 + $0xb0] sm:$0xff]
    %v194 = vld [vmem:[#allocation7 + $0xb8] sm:$0xff]
    %v195 = vld [vmem:[#allocation7 + $0xc0] sm:$0xff]
    %v196 = vld [vmem:[#allocation7 + $0xc8] sm:$0xff]
    %v197 = vld [vmem:[#allocation7 + $0xd0] sm:$0xff]
    %v198 = vld [vmem:[#allocation7 + $0xd8] sm:$0xff]
    %v199 = vld [vmem:[#allocation7 + $0xe0] sm:$0xff]
    %v200 = vld [vmem:[#allocation7 + $0xe8] sm:$0xff]
    %v201 = vld [vmem:[#allocation7 + $0xf0] sm:$0xff]
    %v202 = vld [vmem:[#allocation7 + $0xf8] sm:$0xff]
    %203 = vmatprep.subr.mxu0 %v202
    %204 = vmatpush1.msra.mxu0 %v201
    %205 = vmatprep.subr.mxu0 %v200
    %206 = vmatpush1.msra.mxu0 %v199
    %207 = vmatprep.subr.mxu0 %v198
    %208 = vmatpush1.msra.mxu0 %v197
    %209 = vmatprep.subr.mxu0 %v196
    %210 = vmatpush1.msra.mxu0 %v195
    %211 = vmatprep.subr.mxu0 %v194
    %212 = vmatpush1.msra.mxu0 %v193
    %213 = vmatprep.subr.mxu0 %v192
    %214 = vmatpush1.msra.mxu0 %v191
    %215 = vmatprep.subr.mxu0 %v190
    %216 = vmatpush1.msra.mxu0 %v189
    %217 = vmatprep.subr.mxu0 %v188
    %218 = vmatpush1.msra.mxu0 %v187
    %219 = vmatprep.subr.mxu0 %v186
    %220 = vmatpush1.msra.mxu0 %v185
    %221 = vmatprep.subr.mxu0 %v184
    %222 = vmatpush1.msra.mxu0 %v183
    %223 = vmatprep.subr.mxu0 %v182
    %224 = vmatpush1.msra.mxu0 %v181
    %225 = vmatprep.subr.mxu0 %v180
    %226 = vmatpush1.msra.mxu0 %v179
    %227 = vmatprep.subr.mxu0 %v178
    %228 = vmatpush1.msra.mxu0 %v177
    %229 = vmatprep.subr.mxu0 %v176
    %230 = vmatpush1.msra.mxu0 %v175
    %231 = vmatprep.subr.mxu0 %v174
    %232 = vmatpush1.msra.mxu0 %v173
    %233 = vmatprep.subr.mxu0 %v172
    %234 = vmatpush1.msra.mxu0 %v171
    %235 = vmatprep.subr.mxu0 0.0
    %236 = vmatpush2.msra.mxu0 0.0
    %237 = vmatprep.subr.mxu0 0.0
    %238 = vmatpush2.msra.mxu0 0.0
    %239 = vmatprep.subr.mxu0 0.0
    %240 = vmatpush2.msra.mxu0 0.0
    %241 = vmatprep.subr.mxu0 0.0
    %242 = vmatpush2.msra.mxu0 0.0
    %243 = vmatprep.subr.mxu0 0.0
    %244 = vmatpush2.msra.mxu0 0.0
    %245 = vmatprep.subr.mxu0 0.0
    %246 = vmatpush2.msra.mxu0 0.0
    %247 = vmatprep.subr.mxu0 0.0
    %248 = vmatpush2.msra.mxu0 0.0
    %249 = vmatprep.subr.mxu0 0.0
    %250 = vmatpush2.msra.mxu0 0.0
    %251 = vmatprep.subr.mxu0 0.0
    %252 = vmatpush2.msra.mxu0 0.0
    %253 = vmatprep.subr.mxu0 0.0
    %254 = vmatpush2.msra.mxu0 0.0
    %255 = vmatprep.subr.mxu0 0.0
    %256 = vmatpush2.msra.mxu0 0.0
    %257 = vmatprep.subr.mxu0 0.0
    %258 = vmatpush2.msra.mxu0 0.0
    %259 = vmatprep.subr.mxu0 0.0
    %260 = vmatpush2.msra.mxu0 0.0
    %261 = vmatprep.subr.mxu0 0.0
    %262 = vmatpush2.msra.mxu0 0.0
    %263 = vmatprep.subr.mxu0 0.0
    %264 = vmatpush2.msra.mxu0 0.0
    %265 = vmatprep.subr.mxu0 0.0
    %266 = vmatpush2.msra.mxu0 0.0
    %267 = vmatprep.mubr.f32.mxu0 0.0
    %268 = vmatmul.mubr.f32.gmra.mxu0 %v163
    %v269 = vpop.f32.mrf.mxu0
    %v270 = vadd.f32 0.0, %v269
    %v271 = vpop.f32.mrf.mxu0
    %v272 = vadd.f32 0.0, %v271
    %273 = vmatprep.mubr.f32.mxu0 0.0
    %274 = vmatmul.mubr.f32.gmra.mxu0 %v168
    %v275 = vpop.f32.mrf.mxu0
    %v276 = vadd.f32 0.0, %v275
    %v277 = vpop.f32.mrf.mxu0
    %v278 = vadd.f32 0.0, %v277
    %279 = vdwg.mxu0
    %v280 = vld [vmem:[#allocation8] sm:$0xff]
    %v281 = vld [vmem:[#allocation8 + $0x8] sm:$0xff]
    %v282 = vld [vmem:[#allocation8 + $0x10] sm:$0xff]
    %v283 = vld [vmem:[#allocation8 + $0x18] sm:$0xff]
    %v284 = vld [vmem:[#allocation8 + $0x20] sm:$0xff]
    %v285 = vld [vmem:[#allocation8 + $0x28] sm:$0xff]
    %v286 = vld [vmem:[#allocation8 + $0x30] sm:$0xff]
    %v287 = vld [vmem:[#allocation8 + $0x38] sm:$0xff]
    %v288 = vld [vmem:[#allocation8 + $0x40] sm:$0xff]
    %v289 = vld [vmem:[#allocation8 + $0x48] sm:$0xff]
    %v290 = vld [vmem:[#allocation8 + $0x50] sm:$0xff]
    %v291 = vld [vmem:[#allocation8 + $0x58] sm:$0xff]
    %v292 = vld [vmem:[#allocation8 + $0x60] sm:$0xff]
    %v293 = vld [vmem:[#allocation8 + $0x68] sm:$0xff]
    %v294 = vld [vmem:[#allocation8 + $0x70] sm:$0xff]
    %v295 = vld [vmem:[#allocation8 + $0x78] sm:$0xff]
    %v296 = vld [vmem:[#allocation8 + $0x80] sm:$0xff]
    %v297 = vld [vmem:[#allocation8 + $0x88] sm:$0xff]
    %v298 = vld [vmem:[#allocation8 + $0x90] sm:$0xff]
    %v299 = vld [vmem:[#allocation8 + $0x98] sm:$0xff]
    %v300 = vld [vmem:[#allocation8 + $0xa0] sm:$0xff]
    %v301 = vld [vmem:[#allocation8 + $0xa8] sm:$0xff]
    %v302 = vld [vmem:[#allocation8 + $0xb0] sm:$0xff]
    %v303 = vld [vmem:[#allocation8 + $0xb8] sm:$0xff]
    %v304 = vld [vmem:[#allocation8 + $0xc0] sm:$0xff]
    %v305 = vld [vmem:[#allocation8 + $0xc8] sm:$0xff]
    %v306 = vld [vmem:[#allocation8 + $0xd0] sm:$0xff]
    %v307 = vld [vmem:[#allocation8 + $0xd8] sm:$0xff]
    %v308 = vld [vmem:[#allocation8 + $0xe0] sm:$0xff]
    %v309 = vld [vmem:[#allocation8 + $0xe8] sm:$0xff]
    %v310 = vld [vmem:[#allocation8 + $0xf0] sm:$0xff]
    %v311 = vld [vmem:[#allocation8 + $0xf8] sm:$0xff]
    %v312 = vld [vmem:[#allocation8 + $0x100] sm:$0xff]
    %v313 = vld [vmem:[#allocation8 + $0x108] sm:$0xff]
    %v314 = vld [vmem:[#allocation8 + $0x110] sm:$0xff]
    %v315 = vld [vmem:[#allocation8 + $0x118] sm:$0xff]
    %v316 = vld [vmem:[#allocation8 + $0x120] sm:$0xff]
    %v317 = vld [vmem:[#allocation8 + $0x128] sm:$0xff]
    %v318 = vld [vmem:[#allocation8 + $0x130] sm:$0xff]
    %v319 = vld [vmem:[#allocation8 + $0x138] sm:$0xff]
    %v320 = vld [vmem:[#allocation8 + $0x140] sm:$0xff]
    %v321 = vld [vmem:[#allocation8 + $0x148] sm:$0xff]
    %v322 = vld [vmem:[#allocation8 + $0x150] sm:$0xff]
    %v323 = vld [vmem:[#allocation8 + $0x158] sm:$0xff]
    %v324 = vld [vmem:[#allocation8 + $0x160] sm:$0xff]
    %v325 = vld [vmem:[#allocation8 + $0x168] sm:$0xff]
    %v326 = vld [vmem:[#allocation8 + $0x170] sm:$0xff]
    %v327 = vld [vmem:[#allocation8 + $0x178] sm:$0xff]
    %v328 = vld [vmem:[#allocation8 + $0x180] sm:$0xff]
    %v329 = vld [vmem:[#allocation8 + $0x188] sm:$0xff]
    %v330 = vld [vmem:[#allocation8 + $0x190] sm:$0xff]
    %v331 = vld [vmem:[#allocation8 + $0x198] sm:$0xff]
    %v332 = vld [vmem:[#allocation8 + $0x1a0] sm:$0xff]
    %v333 = vld [vmem:[#allocation8 + $0x1a8] sm:$0xff]
    %v334 = vld [vmem:[#allocation8 + $0x1b0] sm:$0xff]
    %v335 = vld [vmem:[#allocation8 + $0x1b8] sm:$0xff]
    %v336 = vld [vmem:[#allocation8 + $0x1c0] sm:$0xff]
    %v337 = vld [vmem:[#allocation8 + $0x1c8] sm:$0xff]
    %v338 = vld [vmem:[#allocation8 + $0x1d0] sm:$0xff]
    %v339 = vld [vmem:[#allocation8 + $0x1d8] sm:$0xff]
    %v340 = vld [vmem:[#allocation8 + $0x1e0] sm:$0xff]
    %v341 = vld [vmem:[#allocation8 + $0x1e8] sm:$0xff]
    %v342 = vld [vmem:[#allocation8 + $0x1f0] sm:$0xff]
    %v343 = vld [vmem:[#allocation8 + $0x1f8] sm:$0xff]
    %v344 = vld [vmem:[#allocation8 + $0x200] sm:$0xff]
    %v345 = vld [vmem:[#allocation8 + $0x208] sm:$0xff]
    %v346 = vld [vmem:[#allocation8 + $0x210] sm:$0xff]
    %v347 = vld [vmem:[#allocation8 + $0x218] sm:$0xff]
    %v348 = vld [vmem:[#allocation8 + $0x220] sm:$0xff]
    %v349 = vld [vmem:[#allocation8 + $0x228] sm:$0xff]
    %v350 = vld [vmem:[#allocation8 + $0x230] sm:$0xff]
    %v351 = vld [vmem:[#allocation8 + $0x238] sm:$0xff]
    %v352 = vld [vmem:[#allocation8 + $0x240] sm:$0xff]
    %v353 = vld [vmem:[#allocation8 + $0x248] sm:$0xff]
    %v354 = vld [vmem:[#allocation8 + $0x250] sm:$0xff]
    %v355 = vld [vmem:[#allocation8 + $0x258] sm:$0xff]
    %v356 = vld [vmem:[#allocation8 + $0x260] sm:$0xff]
    %v357 = vld [vmem:[#allocation8 + $0x268] sm:$0xff]
    %v358 = vld [vmem:[#allocation8 + $0x270] sm:$0xff]
    %v359 = vld [vmem:[#allocation8 + $0x278] sm:$0xff]
    %v360 = vld [vmem:[#allocation8 + $0x280] sm:$0xff]
    %v361 = vld [vmem:[#allocation8 + $0x288] sm:$0xff]
    %v362 = vld [vmem:[#allocation8 + $0x290] sm:$0xff]
    %v363 = vld [vmem:[#allocation8 + $0x298] sm:$0xff]
    %v364 = vld [vmem:[#allocation8 + $0x2a0] sm:$0xff]
    %v365 = vld [vmem:[#allocation8 + $0x2a8] sm:$0xff]
    %v366 = vld [vmem:[#allocation8 + $0x2b0] sm:$0xff]
    %v367 = vld [vmem:[#allocation8 + $0x2b8] sm:$0xff]
    %v368 = vld [vmem:[#allocation8 + $0x2c0] sm:$0xff]
    %v369 = vld [vmem:[#allocation8 + $0x2c8] sm:$0xff]
    %v370 = vld [vmem:[#allocation8 + $0x2d0] sm:$0xff]
    %v371 = vld [vmem:[#allocation8 + $0x2d8] sm:$0xff]
    %v372 = vld [vmem:[#allocation8 + $0x2e0] sm:$0xff]
    %v373 = vld [vmem:[#allocation8 + $0x2e8] sm:$0xff]
    %v374 = vld [vmem:[#allocation8 + $0x2f0] sm:$0xff]
    %v375 = vld [vmem:[#allocation8 + $0x2f8] sm:$0xff]
    %v376 = vld [vmem:[#allocation8 + $0x300] sm:$0xff]
    %v377 = vld [vmem:[#allocation8 + $0x308] sm:$0xff]
    %v378 = vld [vmem:[#allocation8 + $0x310] sm:$0xff]
    %v379 = vld [vmem:[#allocation8 + $0x318] sm:$0xff]
    %v380 = vld [vmem:[#allocation8 + $0x320] sm:$0xff]
    %v381 = vld [vmem:[#allocation8 + $0x328] sm:$0xff]
    %v382 = vld [vmem:[#allocation8 + $0x330] sm:$0xff]
    %v383 = vld [vmem:[#allocation8 + $0x338] sm:$0xff]
    %v384 = vld [vmem:[#allocation8 + $0x340] sm:$0xff]
    %v385 = vld [vmem:[#allocation8 + $0x348] sm:$0xff]
    %v386 = vld [vmem:[#allocation8 + $0x350] sm:$0xff]
    %v387 = vld [vmem:[#allocation8 + $0x358] sm:$0xff]
    %v388 = vld [vmem:[#allocation8 + $0x360] sm:$0xff]
    %v389 = vld [vmem:[#allocation8 + $0x368] sm:$0xff]
    %v390 = vld [vmem:[#allocation8 + $0x370] sm:$0xff]
    %v391 = vld [vmem:[#allocation8 + $0x378] sm:$0xff]
    %v392 = vld [vmem:[#allocation8 + $0x380] sm:$0xff]
    %v393 = vld [vmem:[#allocation8 + $0x388] sm:$0xff]
    %v394 = vld [vmem:[#allocation8 + $0x390] sm:$0xff]
    %v395 = vld [vmem:[#allocation8 + $0x398] sm:$0xff]
    %v396 = vld [vmem:[#allocation8 + $0x3a0] sm:$0xff]
    %v397 = vld [vmem:[#allocation8 + $0x3a8] sm:$0xff]
    %v398 = vld [vmem:[#allocation8 + $0x3b0] sm:$0xff]
    %v399 = vld [vmem:[#allocation8 + $0x3b8] sm:$0xff]
    %v400 = vld [vmem:[#allocation8 + $0x3c0] sm:$0xff]
    %v401 = vld [vmem:[#allocation8 + $0x3c8] sm:$0xff]
    %v402 = vld [vmem:[#allocation8 + $0x3d0] sm:$0xff]
    %v403 = vld [vmem:[#allocation8 + $0x3d8] sm:$0xff]
    %v404 = vld [vmem:[#allocation8 + $0x3e0] sm:$0xff]
    %v405 = vld [vmem:[#allocation8 + $0x3e8] sm:$0xff]
    %v406 = vld [vmem:[#allocation8 + $0x3f0] sm:$0xff]
    %v407 = vld [vmem:[#allocation8 + $0x3f8] sm:$0xff]
    %408 = vmatprep.subr.mxu0 %v341
    %409 = vmatpush1.msra.mxu0 %v340
    %410 = vmatprep.subr.mxu0 %v337
    %411 = vmatpush1.msra.mxu0 %v336
    %412 = vmatprep.subr.mxu0 %v333
    %413 = vmatpush1.msra.mxu0 %v332
    %414 = vmatprep.subr.mxu0 %v329
    %415 = vmatpush1.msra.mxu0 %v328
    %416 = vmatprep.subr.mxu0 %v325
    %417 = vmatpush1.msra.mxu0 %v324
    %418 = vmatprep.subr.mxu0 %v321
    %419 = vmatpush1.msra.mxu0 %v320
    %420 = vmatprep.subr.mxu0 %v317
    %421 = vmatpush1.msra.mxu0 %v316
    %422 = vmatprep.subr.mxu0 %v313
    %423 = vmatpush1.msra.mxu0 %v312
    %424 = vmatprep.subr.mxu0 %v309
    %425 = vmatpush1.msra.mxu0 %v308
    %426 = vmatprep.subr.mxu0 %v305
    %427 = vmatpush1.msra.mxu0 %v304
    %428 = vmatprep.subr.mxu0 %v301
    %429 = vmatpush1.msra.mxu0 %v300
    %430 = vmatprep.subr.mxu0 %v297
    %431 = vmatpush1.msra.mxu0 %v296
    %432 = vmatprep.subr.mxu0 %v293
    %433 = vmatpush1.msra.mxu0 %v292
    %434 = vmatprep.subr.mxu0 %v289
    %435 = vmatpush1.msra.mxu0 %v288
    %436 = vmatprep.subr.mxu0 %v285
    %437 = vmatpush1.msra.mxu0 %v284
    %438 = vmatprep.subr.mxu0 %v281
    %439 = vmatpush1.msra.mxu0 %v280
    %440 = vmatprep.subr.mxu0 %v405
    %441 = vmatpush2.msra.mxu0 %v404
    %442 = vmatprep.subr.mxu0 %v401
    %443 = vmatpush2.msra.mxu0 %v400
    %444 = vmatprep.subr.mxu0 %v397
    %445 = vmatpush2.msra.mxu0 %v396
    %446 = vmatprep.subr.mxu0 %v393
    %447 = vmatpush2.msra.mxu0 %v392
    %448 = vmatprep.subr.mxu0 %v389
    %449 = vmatpush2.msra.mxu0 %v388
    %450 = vmatprep.subr.mxu0 %v385
    %451 = vmatpush2.msra.mxu0 %v384
    %452 = vmatprep.subr.mxu0 %v381
    %453 = vmatpush2.msra.mxu0 %v380
    %454 = vmatprep.subr.mxu0 %v377
    %455 = vmatpush2.msra.mxu0 %v376
    %456 = vmatprep.subr.mxu0 %v373
    %457 = vmatpush2.msra.mxu0 %v372
    %458 = vmatprep.subr.mxu0 %v369
    %459 = vmatpush2.msra.mxu0 %v368
    %460 = vmatprep.subr.mxu0 %v365
    %461 = vmatpush2.msra.mxu0 %v364
    %462 = vmatprep.subr.mxu0 %v361
    %463 = vmatpush2.msra.mxu0 %v360
    %464 = vmatprep.subr.mxu0 %v357
    %465 = vmatpush2.msra.mxu0 %v356
    %466 = vmatprep.subr.mxu0 %v353
    %467 = vmatpush2.msra.mxu0 %v352
    %468 = vmatprep.subr.mxu0 %v349
    %469 = vmatpush2.msra.mxu0 %v348
    %470 = vmatprep.subr.mxu0 %v345
    %471 = vmatpush2.msra.mxu0 %v344
    %472 = vmatprep.mubr.f32.mxu0 %v272
    %473 = vmatmul.mubr.f32.gmra.mxu0 %v270
    %v474 = vpop.f32.mrf.mxu0
    %v475 = vadd.f32 0.0, %v474
    %v476 = vpop.f32.mrf.mxu0
    %v477 = vadd.f32 0.0, %v476
    %478 = vmatprep.mubr.f32.mxu0 %v278
    %479 = vmatmul.mubr.f32.gmra.mxu0 %v276
    %v480 = vpop.f32.mrf.mxu0
    %v481 = vadd.f32 0.0, %v480
    %v482 = vpop.f32.mrf.mxu0
    %v483 = vadd.f32 0.0, %v482
    %484 = vdwg.mxu0
    %485 = vmatprep.subr.mxu0 %v343
    %486 = vmatpush1.msra.mxu0 %v342
    %487 = vmatprep.subr.mxu0 %v339
    %488 = vmatpush1.msra.mxu0 %v338
    %489 = vmatprep.subr.mxu0 %v335
    %490 = vmatpush1.msra.mxu0 %v334
    %491 = vmatprep.subr.mxu0 %v331
    %492 = vmatpush1.msra.mxu0 %v330
    %493 = vmatprep.subr.mxu0 %v327
    %494 = vmatpush1.msra.mxu0 %v326
    %495 = vmatprep.subr.mxu0 %v323
    %496 = vmatpush1.msra.mxu0 %v322
    %497 = vmatprep.subr.mxu0 %v319
    %498 = vmatpush1.msra.mxu0 %v318
    %499 = vmatprep.subr.mxu0 %v315
    %500 = vmatpush1.msra.mxu0 %v314
    %501 = vmatprep.subr.mxu0 %v311
    %502 = vmatpush1.msra.mxu0 %v310
    %503 = vmatprep.subr.mxu0 %v307
    %504 = vmatpush1.msra.mxu0 %v306
    %505 = vmatprep.subr.mxu0 %v303
    %506 = vmatpush1.msra.mxu0 %v302
    %507 = vmatprep.subr.mxu0 %v299
    %508 = vmatpush1.msra.mxu0 %v298
    %509 = vmatprep.subr.mxu0 %v295
    %510 = vmatpush1.msra.mxu0 %v294
    %511 = vmatprep.subr.mxu0 %v291
    %512 = vmatpush1.msra.mxu0 %v290
    %513 = vmatprep.subr.mxu0 %v287
    %514 = vmatpush1.msra.mxu0 %v286
    %515 = vmatprep.subr.mxu0 %v283
    %516 = vmatpush1.msra.mxu0 %v282
    %517 = vmatprep.subr.mxu0 %v407
    %518 = vmatpush2.msra.mxu0 %v406
    %519 = vmatprep.subr.mxu0 %v403
    %520 = vmatpush2.msra.mxu0 %v402
    %521 = vmatprep.subr.mxu0 %v399
    %522 = vmatpush2.msra.mxu0 %v398
    %523 = vmatprep.subr.mxu0 %v395
    %524 = vmatpush2.msra.mxu0 %v394
    %525 = vmatprep.subr.mxu0 %v391
    %526 = vmatpush2.msra.mxu0 %v390
    %527 = vmatprep.subr.mxu0 %v387
    %528 = vmatpush2.msra.mxu0 %v386
    %529 = vmatprep.subr.mxu0 %v383
    %530 = vmatpush2.msra.mxu0 %v382
    %531 = vmatprep.subr.mxu0 %v379
    %532 = vmatpush2.msra.mxu0 %v378
    %533 = vmatprep.subr.mxu0 %v375
    %534 = vmatpush2.msra.mxu0 %v374
    %535 = vmatprep.subr.mxu0 %v371
    %536 = vmatpush2.msra.mxu0 %v370
    %537 = vmatprep.subr.mxu0 %v367
    %538 = vmatpush2.msra.mxu0 %v366
    %539 = vmatprep.subr.mxu0 %v363
    %540 = vmatpush2.msra.mxu0 %v362
    %541 = vmatprep.subr.mxu0 %v359
    %542 = vmatpush2.msra.mxu0 %v358
    %543 = vmatprep.subr.mxu0 %v355
    %544 = vmatpush2.msra.mxu0 %v354
    %545 = vmatprep.subr.mxu0 %v351
    %546 = vmatpush2.msra.mxu0 %v350
    %547 = vmatprep.subr.mxu0 %v347
    %548 = vmatpush2.msra.mxu0 %v346
    %549 = vmatprep.mubr.f32.mxu0 %v272
    %550 = vmatmul.mubr.f32.gmra.mxu0 %v270
    %v551 = vpop.f32.mrf.mxu0
    %v552 = vadd.f32 0.0, %v551
    %v553 = vpop.f32.mrf.mxu0
    %v554 = vadd.f32 0.0, %v553
    %555 = vmatprep.mubr.f32.mxu0 %v278
    %556 = vmatmul.mubr.f32.gmra.mxu0 %v276
    %v557 = vpop.f32.mrf.mxu0
    %v558 = vadd.f32 0.0, %v557
    %v559 = vpop.f32.mrf.mxu0
    %v560 = vadd.f32 0.0, %v559
    %561 = vdwg.mxu0
    %v562 = vld [vmem:[%s4] sm:$0xff]
    %v563 = vld [vmem:[%s4 + $0x8] sm:$0xff]
    %v564 = vld [vmem:[%s4 + $0x10] sm:$0xff]
    %v565 = vld [vmem:[%s4 + $0x18] sm:$0xff]
    %v566 = vld [vmem:[%s4 + $0x20] sm:$0xff]
    %v567 = vld [vmem:[%s4 + $0x28] sm:$0xff]
    %v568 = vld [vmem:[%s4 + $0x30] sm:$0xff]
    %v569 = vld [vmem:[%s4 + $0x38] sm:$0xff]
    %v570 = vld [vmem:[%s4 + $0x40] sm:$0xff]
    %v571 = vld [vmem:[%s4 + $0x48] sm:$0xff]
    %v572 = vld [vmem:[%s4 + $0x50] sm:$0xff]
    %v573 = vld [vmem:[%s4 + $0x58] sm:$0xff]
    %v574 = vld [vmem:[%s4 + $0x60] sm:$0xff]
    %v575 = vld [vmem:[%s4 + $0x68] sm:$0xff]
    %v576 = vld [vmem:[%s4 + $0x70] sm:$0xff]
    %v577 = vld [vmem:[%s4 + $0x78] sm:$0xff]
    %v578 = vld [vmem:[%s4 + $0x80] sm:$0xff]
    %v579 = vld [vmem:[%s4 + $0x88] sm:$0xff]
    %v580 = vld [vmem:[%s4 + $0x90] sm:$0xff]
    %v581 = vld [vmem:[%s4 + $0x98] sm:$0xff]
    %v582 = vld [vmem:[%s4 + $0xa0] sm:$0xff]
    %v583 = vld [vmem:[%s4 + $0xa8] sm:$0xff]
    %v584 = vld [vmem:[%s4 + $0xb0] sm:$0xff]
    %v585 = vld [vmem:[%s4 + $0xb8] sm:$0xff]
    %v586 = vld [vmem:[%s4 + $0xc0] sm:$0xff]
    %v587 = vld [vmem:[%s4 + $0xc8] sm:$0xff]
    %v588 = vld [vmem:[%s4 + $0xd0] sm:$0xff]
    %v589 = vld [vmem:[%s4 + $0xd8] sm:$0xff]
    %v590 = vld [vmem:[%s4 + $0xe0] sm:$0xff]
    %v591 = vld [vmem:[%s4 + $0xe8] sm:$0xff]
    %v592 = vld [vmem:[%s4 + $0xf0] sm:$0xff]
    %v593 = vld [vmem:[%s4 + $0xf8] sm:$0xff]
    %v594 = vld [vmem:[%s4 + $0x100] sm:$0xff]
    %v595 = vld [vmem:[%s4 + $0x108] sm:$0xff]
    %v596 = vld [vmem:[%s4 + $0x110] sm:$0xff]
    %v597 = vld [vmem:[%s4 + $0x118] sm:$0xff]
    %v598 = vld [vmem:[%s4 + $0x120] sm:$0xff]
    %v599 = vld [vmem:[%s4 + $0x128] sm:$0xff]
    %v600 = vld [vmem:[%s4 + $0x130] sm:$0xff]
    %v601 = vld [vmem:[%s4 + $0x138] sm:$0xff]
    %v602 = vld [vmem:[%s4 + $0x140] sm:$0xff]
    %v603 = vld [vmem:[%s4 + $0x148] sm:$0xff]
    %v604 = vld [vmem:[%s4 + $0x150] sm:$0xff]
    %v605 = vld [vmem:[%s4 + $0x158] sm:$0xff]
    %v606 = vld [vmem:[%s4 + $0x160] sm:$0xff]
    %v607 = vld [vmem:[%s4 + $0x168] sm:$0xff]
    %v608 = vld [vmem:[%s4 + $0x170] sm:$0xff]
    %v609 = vld [vmem:[%s4 + $0x178] sm:$0xff]
    %v610 = vld [vmem:[%s4 + $0x180] sm:$0xff]
    %v611 = vld [vmem:[%s4 + $0x188] sm:$0xff]
    %v612 = vld [vmem:[%s4 + $0x190] sm:$0xff]
    %v613 = vld [vmem:[%s4 + $0x198] sm:$0xff]
    %v614 = vld [vmem:[%s4 + $0x1a0] sm:$0xff]
    %v615 = vld [vmem:[%s4 + $0x1a8] sm:$0xff]
    %v616 = vld [vmem:[%s4 + $0x1b0] sm:$0xff]
    %v617 = vld [vmem:[%s4 + $0x1b8] sm:$0xff]
    %v618 = vld [vmem:[%s4 + $0x1c0] sm:$0xff]
    %v619 = vld [vmem:[%s4 + $0x1c8] sm:$0xff]
    %v620 = vld [vmem:[%s4 + $0x1d0] sm:$0xff]
    %v621 = vld [vmem:[%s4 + $0x1d8] sm:$0xff]
    %v622 = vld [vmem:[%s4 + $0x1e0] sm:$0xff]
    %v623 = vld [vmem:[%s4 + $0x1e8] sm:$0xff]
    %v624 = vld [vmem:[%s4 + $0x1f0] sm:$0xff]
    %v625 = vld [vmem:[%s4 + $0x1f8] sm:$0xff]
    %626 = vmatprep.subr.mxu0 0.0
    %627 = vmatpush1.msra.mxu0 %v577
    %628 = vmatprep.subr.mxu0 0.0
    %629 = vmatpush1.msra.mxu0 %v576
    %630 = vmatprep.subr.mxu0 0.0
    %631 = vmatpush1.msra.mxu0 %v575
    %632 = vmatprep.subr.mxu0 0.0
    %633 = vmatpush1.msra.mxu0 %v574
    %634 = vmatprep.subr.mxu0 0.0
    %635 = vmatpush1.msra.mxu0 %v573
    %636 = vmatprep.subr.mxu0 0.0
    %637 = vmatpush1.msra.mxu0 %v572
    %638 = vmatprep.subr.mxu0 0.0
    %639 = vmatpush1.msra.mxu0 %v571
    %640 = vmatprep.subr.mxu0 0.0
    %641 = vmatpush1.msra.mxu0 %v570
    %642 = vmatprep.subr.mxu0 0.0
    %643 = vmatpush1.msra.mxu0 %v569
    %644 = vmatprep.subr.mxu0 0.0
    %645 = vmatpush1.msra.mxu0 %v568
    %646 = vmatprep.subr.mxu0 0.0
    %647 = vmatpush1.msra.mxu0 %v567
    %648 = vmatprep.subr.mxu0 0.0
    %649 = vmatpush1.msra.mxu0 %v566
    %650 = vmatprep.subr.mxu0 0.0
    %651 = vmatpush1.msra.mxu0 %v565
    %652 = vmatprep.subr.mxu0 0.0
    %653 = vmatpush1.msra.mxu0 %v564
    %654 = vmatprep.subr.mxu0 0.0
    %655 = vmatpush1.msra.mxu0 %v563
    %656 = vmatprep.subr.mxu0 0.0
    %657 = vmatpush1.msra.mxu0 %v562
    %658 = vmatprep.subr.mxu0 0.0
    %659 = vmatpush2.msra.mxu0 %v593
    %660 = vmatprep.subr.mxu0 0.0
    %661 = vmatpush2.msra.mxu0 %v592
    %662 = vmatprep.subr.mxu0 0.0
    %663 = vmatpush2.msra.mxu0 %v591
    %664 = vmatprep.subr.mxu0 0.0
    %665 = vmatpush2.msra.mxu0 %v590
    %666 = vmatprep.subr.mxu0 0.0
    %667 = vmatpush2.msra.mxu0 %v589
    %668 = vmatprep.subr.mxu0 0.0
    %669 = vmatpush2.msra.mxu0 %v588
    %670 = vmatprep.subr.mxu0 0.0
    %671 = vmatpush2.msra.mxu0 %v587
    %672 = vmatprep.subr.mxu0 0.0
    %673 = vmatpush2.msra.mxu0 %v586
    %674 = vmatprep.subr.mxu0 0.0
    %675 = vmatpush2.msra.mxu0 %v585
    %676 = vmatprep.subr.mxu0 0.0
    %677 = vmatpush2.msra.mxu0 %v584
    %678 = vmatprep.subr.mxu0 0.0
    %679 = vmatpush2.msra.mxu0 %v583
    %680 = vmatprep.subr.mxu0 0.0
    %681 = vmatpush2.msra.mxu0 %v582
    %682 = vmatprep.subr.mxu0 0.0
    %683 = vmatpush2.msra.mxu0 %v581
    %684 = vmatprep.subr.mxu0 0.0
    %685 = vmatpush2.msra.mxu0 %v580
    %686 = vmatprep.subr.mxu0 0.0
    %687 = vmatpush2.msra.mxu0 %v579
    %688 = vmatprep.subr.mxu0 0.0
    %689 = vmatpush2.msra.mxu0 %v578
    %690 = vmatprep.mubr.f32.mxu0 %v477
    %691 = vmatmul.mubr.f32.gmra.mxu0 %v475
    %v692 = vpop.f32.mrf.mxu0
    %v693 = vadd.f32 0.0, %v692
    %v694 = vpop.f32.mrf.mxu0
    %695 = vmatprep.mubr.f32.mxu0 %v483
    %696 = vmatmul.mubr.f32.gmra.mxu0 %v481
    %v697 = vpop.f32.mrf.mxu0
    %v698 = vadd.f32 0.0, %v697
    %v699 = vpop.f32.mrf.mxu0
    %700 = vdwg.mxu0
    %701 = vmatprep.subr.mxu0 0.0
    %702 = vmatpush1.msra.mxu0 %v609
    %703 = vmatprep.subr.mxu0 0.0
    %704 = vmatpush1.msra.mxu0 %v608
    %705 = vmatprep.subr.mxu0 0.0
    %706 = vmatpush1.msra.mxu0 %v607
    %707 = vmatprep.subr.mxu0 0.0
    %708 = vmatpush1.msra.mxu0 %v606
    %709 = vmatprep.subr.mxu0 0.0
    %710 = vmatpush1.msra.mxu0 %v605
    %711 = vmatprep.subr.mxu0 0.0
    %712 = vmatpush1.msra.mxu0 %v604
    %713 = vmatprep.subr.mxu0 0.0
    %714 = vmatpush1.msra.mxu0 %v603
    %715 = vmatprep.subr.mxu0 0.0
    %716 = vmatpush1.msra.mxu0 %v602
    %717 = vmatprep.subr.mxu0 0.0
    %718 = vmatpush1.msra.mxu0 %v601
    %719 = vmatprep.subr.mxu0 0.0
    %720 = vmatpush1.msra.mxu0 %v600
    %721 = vmatprep.subr.mxu0 0.0
    %722 = vmatpush1.msra.mxu0 %v599
    %723 = vmatprep.subr.mxu0 0.0
    %724 = vmatpush1.msra.mxu0 %v598
    %725 = vmatprep.subr.mxu0 0.0
    %726 = vmatpush1.msra.mxu0 %v597
    %727 = vmatprep.subr.mxu0 0.0
    %728 = vmatpush1.msra.mxu0 %v596
    %729 = vmatprep.subr.mxu0 0.0
    %730 = vmatpush1.msra.mxu0 %v595
    %731 = vmatprep.subr.mxu0 0.0
    %732 = vmatpush1.msra.mxu0 %v594
    %733 = vmatprep.subr.mxu0 0.0
    %734 = vmatpush2.msra.mxu0 %v625
    %735 = vmatprep.subr.mxu0 0.0
    %736 = vmatpush2.msra.mxu0 %v624
    %737 = vmatprep.subr.mxu0 0.0
    %738 = vmatpush2.msra.mxu0 %v623
    %739 = vmatprep.subr.mxu0 0.0
    %740 = vmatpush2.msra.mxu0 %v622
    %741 = vmatprep.subr.mxu0 0.0
    %742 = vmatpush2.msra.mxu0 %v621
    %743 = vmatprep.subr.mxu0 0.0
    %744 = vmatpush2.msra.mxu0 %v620
    %745 = vmatprep.subr.mxu0 0.0
    %746 = vmatpush2.msra.mxu0 %v619
    %747 = vmatprep.subr.mxu0 0.0
    %748 = vmatpush2.msra.mxu0 %v618
    %749 = vmatprep.subr.mxu0 0.0
    %750 = vmatpush2.msra.mxu0 %v617
    %751 = vmatprep.subr.mxu0 0.0
    %752 = vmatpush2.msra.mxu0 %v616
    %753 = vmatprep.subr.mxu0 0.0
    %754 = vmatpush2.msra.mxu0 %v615
    %755 = vmatprep.subr.mxu0 0.0
    %756 = vmatpush2.msra.mxu0 %v614
    %757 = vmatprep.subr.mxu0 0.0
    %758 = vmatpush2.msra.mxu0 %v613
    %759 = vmatprep.subr.mxu0 0.0
    %760 = vmatpush2.msra.mxu0 %v612
    %761 = vmatprep.subr.mxu0 0.0
    %762 = vmatpush2.msra.mxu0 %v611
    %763 = vmatprep.subr.mxu0 0.0
    %764 = vmatpush2.msra.mxu0 %v610
    %765 = vmatprep.mubr.f32.mxu0 %v554
    %766 = vmatmul.mubr.f32.gmra.mxu0 %v552
    %v767 = vpop.f32.mrf.mxu0
    %v768 = vadd.f32 %v693, %v767
    %v769 = vpop.f32.mrf.mxu0
    %770 = vmatprep.mubr.f32.mxu0 %v560
    %771 = vmatmul.mubr.f32.gmra.mxu0 %v558
    %v772 = vpop.f32.mrf.mxu0
    %v773 = vadd.f32 %v698, %v772
    %v774 = vpop.f32.mrf.mxu0
    %775 = vdwg.mxu0
    %v776 = vmax.f32 %v768, 0.0
    %v777 = vmax.f32 %v773, 0.0
    %s778 = scalar_lea.vmem [#allocation2], 16
    %v779 = vld [vmem:[%s778] sm:$0xff]
    %v780 = vld [vmem:[%s778 + $0x8] sm:$0xff]
    %s781 = scalar_lea.vmem [#allocation5], 64
    %v782 = vld [vmem:[%s781] sm:$0xff]
    %v783 = vld [vmem:[%s781 + $0x8] sm:$0xff]
    %v784 = vld [vmem:[%s781 + $0x10] sm:$0xff]
    %v785 = vld [vmem:[%s781 + $0x18] sm:$0xff]
    %v786 = vld [vmem:[%s781 + $0x20] sm:$0xff]
    %v787 = vld [vmem:[%s781 + $0x28] sm:$0xff]
    %v788 = vld [vmem:[%s781 + $0x30] sm:$0xff]
    %v789 = vld [vmem:[%s781 + $0x38] sm:$0xff]
    %v791 = vsel %vm89, %v779, 0
    %v794 = vsel %vm89, %v780, 0
    %796 = vmatprep.subr.mxu0 0.0
    %797 = vmatpush1.msra.mxu0 0.0
    %798 = vmatprep.subr.mxu0 0.0
    %799 = vmatpush1.msra.mxu0 0.0
    %800 = vmatprep.subr.mxu0 0.0
    %801 = vmatpush1.msra.mxu0 0.0
    %802 = vmatprep.subr.mxu0 0.0
    %803 = vmatpush1.msra.mxu0 0.0
    %804 = vmatprep.subr.mxu0 0.0
    %805 = vmatpush1.msra.mxu0 0.0
    %806 = vmatprep.subr.mxu0 0.0
    %807 = vmatpush1.msra.mxu0 0.0
    %808 = vmatprep.subr.mxu0 0.0
    %809 = vmatpush1.msra.mxu0 0.0
    %810 = vmatprep.subr.mxu0 0.0
    %811 = vmatpush1.msra.mxu0 0.0
    %812 = vmatprep.subr.mxu0 0.0
    %813 = vmatpush1.msra.mxu0 %v789
    %814 = vmatprep.subr.mxu0 0.0
    %815 = vmatpush1.msra.mxu0 %v788
    %816 = vmatprep.subr.mxu0 0.0
    %817 = vmatpush1.msra.mxu0 %v787
    %818 = vmatprep.subr.mxu0 0.0
    %819 = vmatpush1.msra.mxu0 %v786
    %820 = vmatprep.subr.mxu0 0.0
    %821 = vmatpush1.msra.mxu0 %v785
    %822 = vmatprep.subr.mxu0 0.0
    %823 = vmatpush1.msra.mxu0 %v784
    %824 = vmatprep.subr.mxu0 0.0
    %825 = vmatpush1.msra.mxu0 %v783
    %826 = vmatprep.subr.mxu0 0.0
    %827 = vmatpush1.msra.mxu0 %v782
    %828 = vmatprep.subr.mxu0 0.0
    %829 = vmatpush2.msra.mxu0 0.0
    %830 = vmatprep.subr.mxu0 0.0
    %831 = vmatpush2.msra.mxu0 0.0
    %832 = vmatprep.subr.mxu0 0.0
    %833 = vmatpush2.msra.mxu0 0.0
    %834 = vmatprep.subr.mxu0 0.0
    %835 = vmatpush2.msra.mxu0 0.0
    %836 = vmatprep.subr.mxu0 0.0
    %837 = vmatpush2.msra.mxu0 0.0
    %838 = vmatprep.subr.mxu0 0.0
    %839 = vmatpush2.msra.mxu0 0.0
    %840 = vmatprep.subr.mxu0 0.0
    %841 = vmatpush2.msra.mxu0 0.0
    %842 = vmatprep.subr.mxu0 0.0
    %843 = vmatpush2.msra.mxu0 0.0
    %844 = vmatprep.subr.mxu0 0.0
    %845 = vmatpush2.msra.mxu0 0.0
    %846 = vmatprep.subr.mxu0 0.0
    %847 = vmatpush2.msra.mxu0 0.0
    %848 = vmatprep.subr.mxu0 0.0
    %849 = vmatpush2.msra.mxu0 0.0
    %850 = vmatprep.subr.mxu0 0.0
    %851 = vmatpush2.msra.mxu0 0.0
    %852 = vmatprep.subr.mxu0 0.0
    %853 = vmatpush2.msra.mxu0 0.0
    %854 = vmatprep.subr.mxu0 0.0
    %855 = vmatpush2.msra.mxu0 0.0
    %856 = vmatprep.subr.mxu0 0.0
    %857 = vmatpush2.msra.mxu0 0.0
    %858 = vmatprep.subr.mxu0 0.0
    %859 = vmatpush2.msra.mxu0 0.0
    %860 = vmatprep.mubr.f32.mxu0 0.0
    %861 = vmatmul.mubr.f32.gmra.mxu0 %v791
    %v862 = vpop.f32.mrf.mxu0
    %v863 = vadd.f32 0.0, %v862
    %v864 = vpop.f32.mrf.mxu0
    %865 = vmatprep.mubr.f32.mxu0 0.0
    %866 = vmatmul.mubr.f32.gmra.mxu0 %v794
    %v867 = vpop.f32.mrf.mxu0
    %v868 = vadd.f32 0.0, %v867
    %v869 = vpop.f32.mrf.mxu0
    %870 = vdwg.mxu0
    %s871 = scalar_lea.vmem [#allocation7], 256
    %v872 = vld [vmem:[%s871] sm:$0xff]
    %v873 = vld [vmem:[%s871 + $0x8] sm:$0xff]
    %v874 = vld [vmem:[%s871 + $0x10] sm:$0xff]
    %v875 = vld [vmem:[%s871 + $0x18] sm:$0xff]
    %v876 = vld [vmem:[%s871 + $0x20] sm:$0xff]
    %v877 = vld [vmem:[%s871 + $0x28] sm:$0xff]
    %v878 = vld [vmem:[%s871 + $0x30] sm:$0xff]
    %v879 = vld [vmem:[%s871 + $0x38] sm:$0xff]
    %v880 = vld [vmem:[%s871 + $0x40] sm:$0xff]
    %v881 = vld [vmem:[%s871 + $0x48] sm:$0xff]
    %v882 = vld [vmem:[%s871 + $0x50] sm:$0xff]
    %v883 = vld [vmem:[%s871 + $0x58] sm:$0xff]
    %v884 = vld [vmem:[%s871 + $0x60] sm:$0xff]
    %v885 = vld [vmem:[%s871 + $0x68] sm:$0xff]
    %v886 = vld [vmem:[%s871 + $0x70] sm:$0xff]
    %v887 = vld [vmem:[%s871 + $0x78] sm:$0xff]
    %v888 = vld [vmem:[%s871 + $0x80] sm:$0xff]
    %v889 = vld [vmem:[%s871 + $0x88] sm:$0xff]
    %v890 = vld [vmem:[%s871 + $0x90] sm:$0xff]
    %v891 = vld [vmem:[%s871 + $0x98] sm:$0xff]
    %v892 = vld [vmem:[%s871 + $0xa0] sm:$0xff]
    %v893 = vld [vmem:[%s871 + $0xa8] sm:$0xff]
    %v894 = vld [vmem:[%s871 + $0xb0] sm:$0xff]
    %v895 = vld [vmem:[%s871 + $0xb8] sm:$0xff]
    %v896 = vld [vmem:[%s871 + $0xc0] sm:$0xff]
    %v897 = vld [vmem:[%s871 + $0xc8] sm:$0xff]
    %v898 = vld [vmem:[%s871 + $0xd0] sm:$0xff]
    %v899 = vld [vmem:[%s871 + $0xd8] sm:$0xff]
    %v900 = vld [vmem:[%s871 + $0xe0] sm:$0xff]
    %v901 = vld [vmem:[%s871 + $0xe8] sm:$0xff]
    %v902 = vld [vmem:[%s871 + $0xf0] sm:$0xff]
    %v903 = vld [vmem:[%s871 + $0xf8] sm:$0xff]
    %904 = vmatprep.subr.mxu0 %v903
    %905 = vmatpush1.msra.mxu0 %v902
    %906 = vmatprep.subr.mxu0 %v901
    %907 = vmatpush1.msra.mxu0 %v900
    %908 = vmatprep.subr.mxu0 %v899
    %909 = vmatpush1.msra.mxu0 %v898
    %910 = vmatprep.subr.mxu0 %v897
    %911 = vmatpush1.msra.mxu0 %v896
    %912 = vmatprep.subr.mxu0 %v895
    %913 = vmatpush1.msra.mxu0 %v894
    %914 = vmatprep.subr.mxu0 %v893
    %915 = vmatpush1.msra.mxu0 %v892
    %916 = vmatprep.subr.mxu0 %v891
    %917 = vmatpush1.msra.mxu0 %v890
    %918 = vmatprep.subr.mxu0 %v889
    %919 = vmatpush1.msra.mxu0 %v888
    %920 = vmatprep.subr.mxu0 %v887
    %921 = vmatpush1.msra.mxu0 %v886
    %922 = vmatprep.subr.mxu0 %v885
    %923 = vmatpush1.msra.mxu0 %v884
    %924 = vmatprep.subr.mxu0 %v883
    %925 = vmatpush1.msra.mxu0 %v882
    %926 = vmatprep.subr.mxu0 %v881
    %927 = vmatpush1.msra.mxu0 %v880
    %928 = vmatprep.subr.mxu0 %v879
    %929 = vmatpush1.msra.mxu0 %v878
    %930 = vmatprep.subr.mxu0 %v877
    %931 = vmatpush1.msra.mxu0 %v876
    %932 = vmatprep.subr.mxu0 %v875
    %933 = vmatpush1.msra.mxu0 %v874
    %934 = vmatprep.subr.mxu0 %v873
    %935 = vmatpush1.msra.mxu0 %v872
    %936 = vmatprep.subr.mxu0 0.0
    %937 = vmatpush2.msra.mxu0 0.0
    %938 = vmatprep.subr.mxu0 0.0
    %939 = vmatpush2.msra.mxu0 0.0
    %940 = vmatprep.subr.mxu0 0.0
    %941 = vmatpush2.msra.mxu0 0.0
    %942 = vmatprep.subr.mxu0 0.0
    %943 = vmatpush2.msra.mxu0 0.0
    %944 = vmatprep.subr.mxu0 0.0
    %945 = vmatpush2.msra.mxu0 0.0
    %946 = vmatprep.subr.mxu0 0.0
    %947 = vmatpush2.msra.mxu0 0.0
    %948 = vmatprep.subr.mxu0 0.0
    %949 = vmatpush2.msra.mxu0 0.0
    %950 = vmatprep.subr.mxu0 0.0
    %951 = vmatpush2.msra.mxu0 0.0
    %952 = vmatprep.subr.mxu0 0.0
    %953 = vmatpush2.msra.mxu0 0.0
    %954 = vmatprep.subr.mxu0 0.0
    %955 = vmatpush2.msra.mxu0 0.0
    %956 = vmatprep.subr.mxu0 0.0
    %957 = vmatpush2.msra.mxu0 0.0
    %958 = vmatprep.subr.mxu0 0.0
    %959 = vmatpush2.msra.mxu0 0.0
    %960 = vmatprep.subr.mxu0 0.0
    %961 = vmatpush2.msra.mxu0 0.0
    %962 = vmatprep.subr.mxu0 0.0
    %963 = vmatpush2.msra.mxu0 0.0
    %964 = vmatprep.subr.mxu0 0.0
    %965 = vmatpush2.msra.mxu0 0.0
    %966 = vmatprep.subr.mxu0 0.0
    %967 = vmatpush2.msra.mxu0 0.0
    %968 = vmatprep.mubr.f32.mxu0 0.0
    %969 = vmatmul.mubr.f32.gmra.mxu0 %v863
    %v970 = vpop.f32.mrf.mxu0
    %v971 = vadd.f32 0.0, %v970
    %v972 = vpop.f32.mrf.mxu0
    %v973 = vadd.f32 0.0, %v972
    %974 = vmatprep.mubr.f32.mxu0 0.0
    %975 = vmatmul.mubr.f32.gmra.mxu0 %v868
    %v976 = vpop.f32.mrf.mxu0
    %v977 = vadd.f32 0.0, %v976
    %v978 = vpop.f32.mrf.mxu0
    %v979 = vadd.f32 0.0, %v978
    %980 = vdwg.mxu0
    %s981 = scalar_lea.vmem [#allocation8], 1024
    %v982 = vld [vmem:[%s981] sm:$0xff]
    %v983 = vld [vmem:[%s981 + $0x8] sm:$0xff]
    %v984 = vld [vmem:[%s981 + $0x10] sm:$0xff]
    %v985 = vld [vmem:[%s981 + $0x18] sm:$0xff]
    %v986 = vld [vmem:[%s981 + $0x20] sm:$0xff]
    %v987 = vld [vmem:[%s981 + $0x28] sm:$0xff]
    %v988 = vld [vmem:[%s981 + $0x30] sm:$0xff]
    %v989 = vld [vmem:[%s981 + $0x38] sm:$0xff]
    %v990 = vld [vmem:[%s981 + $0x40] sm:$0xff]
    %v991 = vld [vmem:[%s981 + $0x48] sm:$0xff]
    %v992 = vld [vmem:[%s981 + $0x50] sm:$0xff]
    %v993 = vld [vmem:[%s981 + $0x58] sm:$0xff]
    %v994 = vld [vmem:[%s981 + $0x60] sm:$0xff]
    %v995 = vld [vmem:[%s981 + $0x68] sm:$0xff]
    %v996 = vld [vmem:[%s981 + $0x70] sm:$0xff]
    %v997 = vld [vmem:[%s981 + $0x78] sm:$0xff]
    %v998 = vld [vmem:[%s981 + $0x80] sm:$0xff]
    %v999 = vld [vmem:[%s981 + $0x88] sm:$0xff]
    %v1000 = vld [vmem:[%s981 + $0x90] sm:$0xff]
    %v1001 = vld [vmem:[%s981 + $0x98] sm:$0xff]
    %v1002 = vld [vmem:[%s981 + $0xa0] sm:$0xff]
    %v1003 = vld [vmem:[%s981 + $0xa8] sm:$0xff]
    %v1004 = vld [vmem:[%s981 + $0xb0] sm:$0xff]
    %v1005 = vld [vmem:[%s981 + $0xb8] sm:$0xff]
    %v1006 = vld [vmem:[%s981 + $0xc0] sm:$0xff]
    %v1007 = vld [vmem:[%s981 + $0xc8] sm:$0xff]
    %v1008 = vld [vmem:[%s981 + $0xd0] sm:$0xff]
    %v1009 = vld [vmem:[%s981 + $0xd8] sm:$0xff]
    %v1010 = vld [vmem:[%s981 + $0xe0] sm:$0xff]
    %v1011 = vld [vmem:[%s981 + $0xe8] sm:$0xff]
    %v1012 = vld [vmem:[%s981 + $0xf0] sm:$0xff]
    %v1013 = vld [vmem:[%s981 + $0xf8] sm:$0xff]
    %v1014 = vld [vmem:[%s981 + $0x100] sm:$0xff]
    %v1015 = vld [vmem:[%s981 + $0x108] sm:$0xff]
    %v1016 = vld [vmem:[%s981 + $0x110] sm:$0xff]
    %v1017 = vld [vmem:[%s981 + $0x118] sm:$0xff]
    %v1018 = vld [vmem:[%s981 + $0x120] sm:$0xff]
    %v1019 = vld [vmem:[%s981 + $0x128] sm:$0xff]
    %v1020 = vld [vmem:[%s981 + $0x130] sm:$0xff]
    %v1021 = vld [vmem:[%s981 + $0x138] sm:$0xff]
    %v1022 = vld [vmem:[%s981 + $0x140] sm:$0xff]
    %v1023 = vld [vmem:[%s981 + $0x148] sm:$0xff]
    %v1024 = vld [vmem:[%s981 + $0x150] sm:$0xff]
    %v1025 = vld [vmem:[%s981 + $0x158] sm:$0xff]
    %v1026 = vld [vmem:[%s981 + $0x160] sm:$0xff]
    %v1027 = vld [vmem:[%s981 + $0x168] sm:$0xff]
    %v1028 = vld [vmem:[%s981 + $0x170] sm:$0xff]
    %v1029 = vld [vmem:[%s981 + $0x178] sm:$0xff]
    %v1030 = vld [vmem:[%s981 + $0x180] sm:$0xff]
    %v1031 = vld [vmem:[%s981 + $0x188] sm:$0xff]
    %v1032 = vld [vmem:[%s981 + $0x190] sm:$0xff]
    %v1033 = vld [vmem:[%s981 + $0x198] sm:$0xff]
    %v1034 = vld [vmem:[%s981 + $0x1a0] sm:$0xff]
    %v1035 = vld [vmem:[%s981 + $0x1a8] sm:$0xff]
    %v1036 = vld [vmem:[%s981 + $0x1b0] sm:$0xff]
    %v1037 = vld [vmem:[%s981 + $0x1b8] sm:$0xff]
    %v1038 = vld [vmem:[%s981 + $0x1c0] sm:$0xff]
    %v1039 = vld [vmem:[%s981 + $0x1c8] sm:$0xff]
    %v1040 = vld [vmem:[%s981 + $0x1d0] sm:$0xff]
    %v1041 = vld [vmem:[%s981 + $0x1d8] sm:$0xff]
    %v1042 = vld [vmem:[%s981 + $0x1e0] sm:$0xff]
    %v1043 = vld [vmem:[%s981 + $0x1e8] sm:$0xff]
    %v1044 = vld [vmem:[%s981 + $0x1f0] sm:$0xff]
    %v1045 = vld [vmem:[%s981 + $0x1f8] sm:$0xff]
    %v1046 = vld [vmem:[%s981 + $0x200] sm:$0xff]
    %v1047 = vld [vmem:[%s981 + $0x208] sm:$0xff]
    %v1048 = vld [vmem:[%s981 + $0x210] sm:$0xff]
    %v1049 = vld [vmem:[%s981 + $0x218] sm:$0xff]
    %v1050 = vld [vmem:[%s981 + $0x220] sm:$0xff]
    %v1051 = vld [vmem:[%s981 + $0x228] sm:$0xff]
    %v1052 = vld [vmem:[%s981 + $0x230] sm:$0xff]
    %v1053 = vld [vmem:[%s981 + $0x238] sm:$0xff]
    %v1054 = vld [vmem:[%s981 + $0x240] sm:$0xff]
    %v1055 = vld [vmem:[%s981 + $0x248] sm:$0xff]
    %v1056 = vld [vmem:[%s981 + $0x250] sm:$0xff]
    %v1057 = vld [vmem:[%s981 + $0x258] sm:$0xff]
    %v1058 = vld [vmem:[%s981 + $0x260] sm:$0xff]
    %v1059 = vld [vmem:[%s981 + $0x268] sm:$0xff]
    %v1060 = vld [vmem:[%s981 + $0x270] sm:$0xff]
    %v1061 = vld [vmem:[%s981 + $0x278] sm:$0xff]
    %v1062 = vld [vmem:[%s981 + $0x280] sm:$0xff]
    %v1063 = vld [vmem:[%s981 + $0x288] sm:$0xff]
    %v1064 = vld [vmem:[%s981 + $0x290] sm:$0xff]
    %v1065 = vld [vmem:[%s981 + $0x298] sm:$0xff]
    %v1066 = vld [vmem:[%s981 + $0x2a0] sm:$0xff]
    %v1067 = vld [vmem:[%s981 + $0x2a8] sm:$0xff]
    %v1068 = vld [vmem:[%s981 + $0x2b0] sm:$0xff]
    %v1069 = vld [vmem:[%s981 + $0x2b8] sm:$0xff]
    %v1070 = vld [vmem:[%s981 + $0x2c0] sm:$0xff]
    %v1071 = vld [vmem:[%s981 + $0x2c8] sm:$0xff]
    %v1072 = vld [vmem:[%s981 + $0x2d0] sm:$0xff]
    %v1073 = vld [vmem:[%s981 + $0x2d8] sm:$0xff]
    %v1074 = vld [vmem:[%s981 + $0x2e0] sm:$0xff]
    %v1075 = vld [vmem:[%s981 + $0x2e8] sm:$0xff]
    %v1076 = vld [vmem:[%s981 + $0x2f0] sm:$0xff]
    %v1077 = vld [vmem:[%s981 + $0x2f8] sm:$0xff]
    %v1078 = vld [vmem:[%s981 + $0x300] sm:$0xff]
    %v1079 = vld [vmem:[%s981 + $0x308] sm:$0xff]
    %v1080 = vld [vmem:[%s981 + $0x310] sm:$0xff]
    %v1081 = vld [vmem:[%s981 + $0x318] sm:$0xff]
    %v1082 = vld [vmem:[%s981 + $0x320] sm:$0xff]
    %v1083 = vld [vmem:[%s981 + $0x328] sm:$0xff]
    %v1084 = vld [vmem:[%s981 + $0x330] sm:$0xff]
    %v1085 = vld [vmem:[%s981 + $0x338] sm:$0xff]
    %v1086 = vld [vmem:[%s981 + $0x340] sm:$0xff]
    %v1087 = vld [vmem:[%s981 + $0x348] sm:$0xff]
    %v1088 = vld [vmem:[%s981 + $0x350] sm:$0xff]
    %v1089 = vld [vmem:[%s981 + $0x358] sm:$0xff]
    %v1090 = vld [vmem:[%s981 + $0x360] sm:$0xff]
    %v1091 = vld [vmem:[%s981 + $0x368] sm:$0xff]
    %v1092 = vld [vmem:[%s981 + $0x370] sm:$0xff]
    %v1093 = vld [vmem:[%s981 + $0x378] sm:$0xff]
    %v1094 = vld [vmem:[%s981 + $0x380] sm:$0xff]
    %v1095 = vld [vmem:[%s981 + $0x388] sm:$0xff]
    %v1096 = vld [vmem:[%s981 + $0x390] sm:$0xff]
    %v1097 = vld [vmem:[%s981 + $0x398] sm:$0xff]
    %v1098 = vld [vmem:[%s981 + $0x3a0] sm:$0xff]
    %v1099 = vld [vmem:[%s981 + $0x3a8] sm:$0xff]
    %v1100 = vld [vmem:[%s981 + $0x3b0] sm:$0xff]
    %v1101 = vld [vmem:[%s981 + $0x3b8] sm:$0xff]
    %v1102 = vld [vmem:[%s981 + $0x3c0] sm:$0xff]
    %v1103 = vld [vmem:[%s981 + $0x3c8] sm:$0xff]
    %v1104 = vld [vmem:[%s981 + $0x3d0] sm:$0xff]
    %v1105 = vld [vmem:[%s981 + $0x3d8] sm:$0xff]
    %v1106 = vld [vmem:[%s981 + $0x3e0] sm:$0xff]
    %v1107 = vld [vmem:[%s981 + $0x3e8] sm:$0xff]
    %v1108 = vld [vmem:[%s981 + $0x3f0] sm:$0xff]
    %v1109 = vld [vmem:[%s981 + $0x3f8] sm:$0xff]
    %1110 = vmatprep.subr.mxu0 %v1043
    %1111 = vmatpush1.msra.mxu0 %v1042
    %1112 = vmatprep.subr.mxu0 %v1039
    %1113 = vmatpush1.msra.mxu0 %v1038
    %1114 = vmatprep.subr.mxu0 %v1035
    %1115 = vmatpush1.msra.mxu0 %v1034
    %1116 = vmatprep.subr.mxu0 %v1031
    %1117 = vmatpush1.msra.mxu0 %v1030
    %1118 = vmatprep.subr.mxu0 %v1027
    %1119 = vmatpush1.msra.mxu0 %v1026
    %1120 = vmatprep.subr.mxu0 %v1023
    %1121 = vmatpush1.msra.mxu0 %v1022
    %1122 = vmatprep.subr.mxu0 %v1019
    %1123 = vmatpush1.msra.mxu0 %v1018
    %1124 = vmatprep.subr.mxu0 %v1015
    %1125 = vmatpush1.msra.mxu0 %v1014
    %1126 = vmatprep.subr.mxu0 %v1011
    %1127 = vmatpush1.msra.mxu0 %v1010
    %1128 = vmatprep.subr.mxu0 %v1007
    %1129 = vmatpush1.msra.mxu0 %v1006
    %1130 = vmatprep.subr.mxu0 %v1003
    %1131 = vmatpush1.msra.mxu0 %v1002
    %1132 = vmatprep.subr.mxu0 %v999
    %1133 = vmatpush1.msra.mxu0 %v998
    %1134 = vmatprep.subr.mxu0 %v995
    %1135 = vmatpush1.msra.mxu0 %v994
    %1136 = vmatprep.subr.mxu0 %v991
    %1137 = vmatpush1.msra.mxu0 %v990
    %1138 = vmatprep.subr.mxu0 %v987
    %1139 = vmatpush1.msra.mxu0 %v986
    %1140 = vmatprep.subr.mxu0 %v983
    %1141 = vmatpush1.msra.mxu0 %v982
    %1142 = vmatprep.subr.mxu0 %v1107
    %1143 = vmatpush2.msra.mxu0 %v1106
    %1144 = vmatprep.subr.mxu0 %v1103
    %1145 = vmatpush2.msra.mxu0 %v1102
    %1146 = vmatprep.subr.mxu0 %v1099
    %1147 = vmatpush2.msra.mxu0 %v1098
    %1148 = vmatprep.subr.mxu0 %v1095
    %1149 = vmatpush2.msra.mxu0 %v1094
    %1150 = vmatprep.subr.mxu0 %v1091
    %1151 = vmatpush2.msra.mxu0 %v1090
    %1152 = vmatprep.subr.mxu0 %v1087
    %1153 = vmatpush2.msra.mxu0 %v1086
    %1154 = vmatprep.subr.mxu0 %v1083
    %1155 = vmatpush2.msra.mxu0 %v1082
    %1156 = vmatprep.subr.mxu0 %v1079
    %1157 = vmatpush2.msra.mxu0 %v1078
    %1158 = vmatprep.subr.mxu0 %v1075
    %1159 = vmatpush2.msra.mxu0 %v1074
    %1160 = vmatprep.subr.mxu0 %v1071
    %1161 = vmatpush2.msra.mxu0 %v1070
    %1162 = vmatprep.subr.mxu0 %v1067
    %1163 = vmatpush2.msra.mxu0 %v1066
    %1164 = vmatprep.subr.mxu0 %v1063
    %1165 = vmatpush2.msra.mxu0 %v1062
    %1166 = vmatprep.subr.mxu0 %v1059
    %1167 = vmatpush2.msra.mxu0 %v1058
    %1168 = vmatprep.subr.mxu0 %v1055
    %1169 = vmatpush2.msra.mxu0 %v1054
    %1170 = vmatprep.subr.mxu0 %v1051
    %1171 = vmatpush2.msra.mxu0 %v1050
    %1172 = vmatprep.subr.mxu0 %v1047
    %1173 = vmatpush2.msra.mxu0 %v1046
    %1174 = vmatprep.mubr.f32.mxu0 %v973
    %1175 = vmatmul.mubr.f32.gmra.mxu0 %v971
    %v1176 = vpop.f32.mrf.mxu0
    %v1177 = vadd.f32 0.0, %v1176
    %v1178 = vpop.f32.mrf.mxu0
    %v1179 = vadd.f32 0.0, %v1178
    %1180 = vmatprep.mubr.f32.mxu0 %v979
    %1181 = vmatmul.mubr.f32.gmra.mxu0 %v977
    %v1182 = vpop.f32.mrf.mxu0
    %v1183 = vadd.f32 0.0, %v1182
    %v1184 = vpop.f32.mrf.mxu0
    %v1185 = vadd.f32 0.0, %v1184
    %1186 = vdwg.mxu0
    %1187 = vmatprep.subr.mxu0 %v1045
    %1188 = vmatpush1.msra.mxu0 %v1044
    %1189 = vmatprep.subr.mxu0 %v1041
    %1190 = vmatpush1.msra.mxu0 %v1040
    %1191 = vmatprep.subr.mxu0 %v1037
    %1192 = vmatpush1.msra.mxu0 %v1036
    %1193 = vmatprep.subr.mxu0 %v1033
    %1194 = vmatpush1.msra.mxu0 %v1032
    %1195 = vmatprep.subr.mxu0 %v1029
    %1196 = vmatpush1.msra.mxu0 %v1028
    %1197 = vmatprep.subr.mxu0 %v1025
    %1198 = vmatpush1.msra.mxu0 %v1024
    %1199 = vmatprep.subr.mxu0 %v1021
    %1200 = vmatpush1.msra.mxu0 %v1020
    %1201 = vmatprep.subr.mxu0 %v1017
    %1202 = vmatpush1.msra.mxu0 %v1016
    %1203 = vmatprep.subr.mxu0 %v1013
    %1204 = vmatpush1.msra.mxu0 %v1012
    %1205 = vmatprep.subr.mxu0 %v1009
    %1206 = vmatpush1.msra.mxu0 %v1008
    %1207 = vmatprep.subr.mxu0 %v1005
    %1208 = vmatpush1.msra.mxu0 %v1004
    %1209 = vmatprep.subr.mxu0 %v1001
    %1210 = vmatpush1.msra.mxu0 %v1000
    %1211 = vmatprep.subr.mxu0 %v997
    %1212 = vmatpush1.msra.mxu0 %v996
    %1213 = vmatprep.subr.mxu0 %v993
    %1214 = vmatpush1.msra.mxu0 %v992
    %1215 = vmatprep.subr.mxu0 %v989
    %1216 = vmatpush1.msra.mxu0 %v988
    %1217 = vmatprep.subr.mxu0 %v985
    %1218 = vmatpush1.msra.mxu0 %v984
    %1219 = vmatprep.subr.mxu0 %v1109
    %1220 = vmatpush2.msra.mxu0 %v1108
    %1221 = vmatprep.subr.mxu0 %v1105
    %1222 = vmatpush2.msra.mxu0 %v1104
    %1223 = vmatprep.subr.mxu0 %v1101
    %1224 = vmatpush2.msra.mxu0 %v1100
    %1225 = vmatprep.subr.mxu0 %v1097
    %1226 = vmatpush2.msra.mxu0 %v1096
    %1227 = vmatprep.subr.mxu0 %v1093
    %1228 = vmatpush2.msra.mxu0 %v1092
    %1229 = vmatprep.subr.mxu0 %v1089
    %1230 = vmatpush2.msra.mxu0 %v1088
    %1231 = vmatprep.subr.mxu0 %v1085
    %1232 = vmatpush2.msra.mxu0 %v1084
    %1233 = vmatprep.subr.mxu0 %v1081
    %1234 = vmatpush2.msra.mxu0 %v1080
    %1235 = vmatprep.subr.mxu0 %v1077
    %1236 = vmatpush2.msra.mxu0 %v1076
    %1237 = vmatprep.subr.mxu0 %v1073
    %1238 = vmatpush2.msra.mxu0 %v1072
    %1239 = vmatprep.subr.mxu0 %v1069
    %1240 = vmatpush2.msra.mxu0 %v1068
    %1241 = vmatprep.subr.mxu0 %v1065
    %1242 = vmatpush2.msra.mxu0 %v1064
    %1243 = vmatprep.subr.mxu0 %v1061
    %1244 = vmatpush2.msra.mxu0 %v1060
    %1245 = vmatprep.subr.mxu0 %v1057
    %1246 = vmatpush2.msra.mxu0 %v1056
    %1247 = vmatprep.subr.mxu0 %v1053
    %1248 = vmatpush2.msra.mxu0 %v1052
    %1249 = vmatprep.subr.mxu0 %v1049
    %1250 = vmatpush2.msra.mxu0 %v1048
    %1251 = vmatprep.mubr.f32.mxu0 %v973
    %1252 = vmatmul.mubr.f32.gmra.mxu0 %v971
    %v1253 = vpop.f32.mrf.mxu0
    %v1254 = vadd.f32 0.0, %v1253
    %v1255 = vpop.f32.mrf.mxu0
    %v1256 = vadd.f32 0.0, %v1255
    %1257 = vmatprep.mubr.f32.mxu0 %v979
    %1258 = vmatmul.mubr.f32.gmra.mxu0 %v977
    %v1259 = vpop.f32.mrf.mxu0
    %v1260 = vadd.f32 0.0, %v1259
    %v1261 = vpop.f32.mrf.mxu0
    %v1262 = vadd.f32 0.0, %v1261
    %1263 = vdwg.mxu0
    %s1264 = scalar_lea.vmem %s4, 512
    %v1265 = vld [vmem:[%s1264] sm:$0xff]
    %v1266 = vld [vmem:[%s1264 + $0x8] sm:$0xff]
    %v1267 = vld [vmem:[%s1264 + $0x10] sm:$0xff]
    %v1268 = vld [vmem:[%s1264 + $0x18] sm:$0xff]
    %v1269 = vld [vmem:[%s1264 + $0x20] sm:$0xff]
    %v1270 = vld [vmem:[%s1264 + $0x28] sm:$0xff]
    %v1271 = vld [vmem:[%s1264 + $0x30] sm:$0xff]
    %v1272 = vld [vmem:[%s1264 + $0x38] sm:$0xff]
    %v1273 = vld [vmem:[%s1264 + $0x40] sm:$0xff]
    %v1274 = vld [vmem:[%s1264 + $0x48] sm:$0xff]
    %v1275 = vld [vmem:[%s1264 + $0x50] sm:$0xff]
    %v1276 = vld [vmem:[%s1264 + $0x58] sm:$0xff]
    %v1277 = vld [vmem:[%s1264 + $0x60] sm:$0xff]
    %v1278 = vld [vmem:[%s1264 + $0x68] sm:$0xff]
    %v1279 = vld [vmem:[%s1264 + $0x70] sm:$0xff]
    %v1280 = vld [vmem:[%s1264 + $0x78] sm:$0xff]
    %v1281 = vld [vmem:[%s1264 + $0x80] sm:$0xff]
    %v1282 = vld [vmem:[%s1264 + $0x88] sm:$0xff]
    %v1283 = vld [vmem:[%s1264 + $0x90] sm:$0xff]
    %v1284 = vld [vmem:[%s1264 + $0x98] sm:$0xff]
    %v1285 = vld [vmem:[%s1264 + $0xa0] sm:$0xff]
    %v1286 = vld [vmem:[%s1264 + $0xa8] sm:$0xff]
    %v1287 = vld [vmem:[%s1264 + $0xb0] sm:$0xff]
    %v1288 = vld [vmem:[%s1264 + $0xb8] sm:$0xff]
    %v1289 = vld [vmem:[%s1264 + $0xc0] sm:$0xff]
    %v1290 = vld [vmem:[%s1264 + $0xc8] sm:$0xff]
    %v1291 = vld [vmem:[%s1264 + $0xd0] sm:$0xff]
    %v1292 = vld [vmem:[%s1264 + $0xd8] sm:$0xff]
    %v1293 = vld [vmem:[%s1264 + $0xe0] sm:$0xff]
    %v1294 = vld [vmem:[%s1264 + $0xe8] sm:$0xff]
    %v1295 = vld [vmem:[%s1264 + $0xf0] sm:$0xff]
    %v1296 = vld [vmem:[%s1264 + $0xf8] sm:$0xff]
    %v1297 = vld [vmem:[%s1264 + $0x100] sm:$0xff]
    %v1298 = vld [vmem:[%s1264 + $0x108] sm:$0xff]
    %v1299 = vld [vmem:[%s1264 + $0x110] sm:$0xff]
    %v1300 = vld [vmem:[%s1264 + $0x118] sm:$0xff]
    %v1301 = vld [vmem:[%s1264 + $0x120] sm:$0xff]
    %v1302 = vld [vmem:[%s1264 + $0x128] sm:$0xff]
    %v1303 = vld [vmem:[%s1264 + $0x130] sm:$0xff]
    %v1304 = vld [vmem:[%s1264 + $0x138] sm:$0xff]
    %v1305 = vld [vmem:[%s1264 + $0x140] sm:$0xff]
    %v1306 = vld [vmem:[%s1264 + $0x148] sm:$0xff]
    %v1307 = vld [vmem:[%s1264 + $0x150] sm:$0xff]
    %v1308 = vld [vmem:[%s1264 + $0x158] sm:$0xff]
    %v1309 = vld [vmem:[%s1264 + $0x160] sm:$0xff]
    %v1310 = vld [vmem:[%s1264 + $0x168] sm:$0xff]
    %v1311 = vld [vmem:[%s1264 + $0x170] sm:$0xff]
    %v1312 = vld [vmem:[%s1264 + $0x178] sm:$0xff]
    %v1313 = vld [vmem:[%s1264 + $0x180] sm:$0xff]
    %v1314 = vld [vmem:[%s1264 + $0x188] sm:$0xff]
    %v1315 = vld [vmem:[%s1264 + $0x190] sm:$0xff]
    %v1316 = vld [vmem:[%s1264 + $0x198] sm:$0xff]
    %v1317 = vld [vmem:[%s1264 + $0x1a0] sm:$0xff]
    %v1318 = vld [vmem:[%s1264 + $0x1a8] sm:$0xff]
    %v1319 = vld [vmem:[%s1264 + $0x1b0] sm:$0xff]
    %v1320 = vld [vmem:[%s1264 + $0x1b8] sm:$0xff]
    %v1321 = vld [vmem:[%s1264 + $0x1c0] sm:$0xff]
    %v1322 = vld [vmem:[%s1264 + $0x1c8] sm:$0xff]
    %v1323 = vld [vmem:[%s1264 + $0x1d0] sm:$0xff]
    %v1324 = vld [vmem:[%s1264 + $0x1d8] sm:$0xff]
    %v1325 = vld [vmem:[%s1264 + $0x1e0] sm:$0xff]
    %v1326 = vld [vmem:[%s1264 + $0x1e8] sm:$0xff]
    %v1327 = vld [vmem:[%s1264 + $0x1f0] sm:$0xff]
    %v1328 = vld [vmem:[%s1264 + $0x1f8] sm:$0xff]
    %1329 = vmatprep.subr.mxu0 0.0
    %1330 = vmatpush1.msra.mxu0 %v1280
    %1331 = vmatprep.subr.mxu0 0.0
    %1332 = vmatpush1.msra.mxu0 %v1279
    %1333 = vmatprep.subr.mxu0 0.0
    %1334 = vmatpush1.msra.mxu0 %v1278
    %1335 = vmatprep.subr.mxu0 0.0
    %1336 = vmatpush1.msra.mxu0 %v1277
    %1337 = vmatprep.subr.mxu0 0.0
    %1338 = vmatpush1.msra.mxu0 %v1276
    %1339 = vmatprep.subr.mxu0 0.0
    %1340 = vmatpush1.msra.mxu0 %v1275
    %1341 = vmatprep.subr.mxu0 0.0
    %1342 = vmatpush1.msra.mxu0 %v1274
    %1343 = vmatprep.subr.mxu0 0.0
    %1344 = vmatpush1.msra.mxu0 %v1273
    %1345 = vmatprep.subr.mxu0 0.0
    %1346 = vmatpush1.msra.mxu0 %v1272
    %1347 = vmatprep.subr.mxu0 0.0
    %1348 = vmatpush1.msra.mxu0 %v1271
    %1349 = vmatprep.subr.mxu0 0.0
    %1350 = vmatpush1.msra.mxu0 %v1270
    %1351 = vmatprep.subr.mxu0 0.0
    %1352 = vmatpush1.msra.mxu0 %v1269
    %1353 = vmatprep.subr.mxu0 0.0
    %1354 = vmatpush1.msra.mxu0 %v1268
    %1355 = vmatprep.subr.mxu0 0.0
    %1356 = vmatpush1.msra.mxu0 %v1267
    %1357 = vmatprep.subr.mxu0 0.0
    %1358 = vmatpush1.msra.mxu0 %v1266
    %1359 = vmatprep.subr.mxu0 0.0
    %1360 = vmatpush1.msra.mxu0 %v1265
    %1361 = vmatprep.subr.mxu0 0.0
    %1362 = vmatpush2.msra.mxu0 %v1296
    %1363 = vmatprep.subr.mxu0 0.0
    %1364 = vmatpush2.msra.mxu0 %v1295
    %1365 = vmatprep.subr.mxu0 0.0
    %1366 = vmatpush2.msra.mxu0 %v1294
    %1367 = vmatprep.subr.mxu0 0.0
    %1368 = vmatpush2.msra.mxu0 %v1293
    %1369 = vmatprep.subr.mxu0 0.0
    %1370 = vmatpush2.msra.mxu0 %v1292
    %1371 = vmatprep.subr.mxu0 0.0
    %1372 = vmatpush2.msra.mxu0 %v1291
    %1373 = vmatprep.subr.mxu0 0.0
    %1374 = vmatpush2.msra.mxu0 %v1290
    %1375 = vmatprep.subr.mxu0 0.0
    %1376 = vmatpush2.msra.mxu0 %v1289
    %1377 = vmatprep.subr.mxu0 0.0
    %1378 = vmatpush2.msra.mxu0 %v1288
    %1379 = vmatprep.subr.mxu0 0.0
    %1380 = vmatpush2.msra.mxu0 %v1287
    %1381 = vmatprep.subr.mxu0 0.0
    %1382 = vmatpush2.msra.mxu0 %v1286
    %1383 = vmatprep.subr.mxu0 0.0
    %1384 = vmatpush2.msra.mxu0 %v1285
    %1385 = vmatprep.subr.mxu0 0.0
    %1386 = vmatpush2.msra.mxu0 %v1284
    %1387 = vmatprep.subr.mxu0 0.0
    %1388 = vmatpush2.msra.mxu0 %v1283
    %1389 = vmatprep.subr.mxu0 0.0
    %1390 = vmatpush2.msra.mxu0 %v1282
    %1391 = vmatprep.subr.mxu0 0.0
    %1392 = vmatpush2.msra.mxu0 %v1281
    %1393 = vmatprep.mubr.f32.mxu0 %v1179
    %1394 = vmatmul.mubr.f32.gmra.mxu0 %v1177
    %v1395 = vpop.f32.mrf.mxu0
    %v1396 = vadd.f32 0.0, %v1395
    %v1397 = vpop.f32.mrf.mxu0
    %1398 = vmatprep.mubr.f32.mxu0 %v1185
    %1399 = vmatmul.mubr.f32.gmra.mxu0 %v1183
    %v1400 = vpop.f32.mrf.mxu0
    %v1401 = vadd.f32 0.0, %v1400
    %v1402 = vpop.f32.mrf.mxu0
    %1403 = vdwg.mxu0
    %1404 = vmatprep.subr.mxu0 0.0
    %1405 = vmatpush1.msra.mxu0 %v1312
    %1406 = vmatprep.subr.mxu0 0.0
    %1407 = vmatpush1.msra.mxu0 %v1311
    %1408 = vmatprep.subr.mxu0 0.0
    %1409 = vmatpush1.msra.mxu0 %v1310
    %1410 = vmatprep.subr.mxu0 0.0
    %1411 = vmatpush1.msra.mxu0 %v1309
    %1412 = vmatprep.subr.mxu0 0.0
    %1413 = vmatpush1.msra.mxu0 %v1308
    %1414 = vmatprep.subr.mxu0 0.0
    %1415 = vmatpush1.msra.mxu0 %v1307
    %1416 = vmatprep.subr.mxu0 0.0
    %1417 = vmatpush1.msra.mxu0 %v1306
    %1418 = vmatprep.subr.mxu0 0.0
    %1419 = vmatpush1.msra.mxu0 %v1305
    %1420 = vmatprep.subr.mxu0 0.0
    %1421 = vmatpush1.msra.mxu0 %v1304
    %1422 = vmatprep.subr.mxu0 0.0
    %1423 = vmatpush1.msra.mxu0 %v1303
    %1424 = vmatprep.subr.mxu0 0.0
    %1425 = vmatpush1.msra.mxu0 %v1302
    %1426 = vmatprep.subr.mxu0 0.0
    %1427 = vmatpush1.msra.mxu0 %v1301
    %1428 = vmatprep.subr.mxu0 0.0
    %1429 = vmatpush1.msra.mxu0 %v1300
    %1430 = vmatprep.subr.mxu0 0.0
    %1431 = vmatpush1.msra.mxu0 %v1299
    %1432 = vmatprep.subr.mxu0 0.0
    %1433 = vmatpush1.msra.mxu0 %v1298
    %1434 = vmatprep.subr.mxu0 0.0
    %1435 = vmatpush1.msra.mxu0 %v1297
    %1436 = vmatprep.subr.mxu0 0.0
    %1437 = vmatpush2.msra.mxu0 %v1328
    %1438 = vmatprep.subr.mxu0 0.0
    %1439 = vmatpush2.msra.mxu0 %v1327
    %1440 = vmatprep.subr.mxu0 0.0
    %1441 = vmatpush2.msra.mxu0 %v1326
    %1442 = vmatprep.subr.mxu0 0.0
    %1443 = vmatpush2.msra.mxu0 %v1325
    %1444 = vmatprep.subr.mxu0 0.0
    %1445 = vmatpush2.msra.mxu0 %v1324
    %1446 = vmatprep.subr.mxu0 0.0
    %1447 = vmatpush2.msra.mxu0 %v1323
    %1448 = vmatprep.subr.mxu0 0.0
    %1449 = vmatpush2.msra.mxu0 %v1322
    %1450 = vmatprep.subr.mxu0 0.0
    %1451 = vmatpush2.msra.mxu0 %v1321
    %1452 = vmatprep.subr.mxu0 0.0
    %1453 = vmatpush2.msra.mxu0 %v1320
    %1454 = vmatprep.subr.mxu0 0.0
    %1455 = vmatpush2.msra.mxu0 %v1319
    %1456 = vmatprep.subr.mxu0 0.0
    %1457 = vmatpush2.msra.mxu0 %v1318
    %1458 = vmatprep.subr.mxu0 0.0
    %1459 = vmatpush2.msra.mxu0 %v1317
    %1460 = vmatprep.subr.mxu0 0.0
    %1461 = vmatpush2.msra.mxu0 %v1316
    %1462 = vmatprep.subr.mxu0 0.0
    %1463 = vmatpush2.msra.mxu0 %v1315
    %1464 = vmatprep.subr.mxu0 0.0
    %1465 = vmatpush2.msra.mxu0 %v1314
    %1466 = vmatprep.subr.mxu0 0.0
    %1467 = vmatpush2.msra.mxu0 %v1313
    %1468 = vmatprep.mubr.f32.mxu0 %v1256
    %1469 = vmatmul.mubr.f32.gmra.mxu0 %v1254
    %v1470 = vpop.f32.mrf.mxu0
    %v1471 = vadd.f32 %v1396, %v1470
    %v1472 = vpop.f32.mrf.mxu0
    %1473 = vmatprep.mubr.f32.mxu0 %v1262
    %1474 = vmatmul.mubr.f32.gmra.mxu0 %v1260
    %v1475 = vpop.f32.mrf.mxu0
    %v1476 = vadd.f32 %v1401, %v1475
    %v1477 = vpop.f32.mrf.mxu0
    %1478 = vdwg.mxu0
    %v1479 = vmax.f32 %v1471, 0.0
    %v1480 = vmax.f32 %v1476, 0.0
    %s1481 = scalar_lea.vmem [#allocation2], 32
    %v1482 = vld [vmem:[%s1481] sm:$0xff]
    %v1483 = vld [vmem:[%s1481 + $0x8] sm:$0xff]
    %s1484 = scalar_lea.vmem [#allocation5], 128
    %v1485 = vld [vmem:[%s1484] sm:$0xff]
    %v1486 = vld [vmem:[%s1484 + $0x8] sm:$0xff]
    %v1487 = vld [vmem:[%s1484 + $0x10] sm:$0xff]
    %v1488 = vld [vmem:[%s1484 + $0x18] sm:$0xff]
    %v1489 = vld [vmem:[%s1484 + $0x20] sm:$0xff]
    %v1490 = vld [vmem:[%s1484 + $0x28] sm:$0xff]
    %v1491 = vld [vmem:[%s1484 + $0x30] sm:$0xff]
    %v1492 = vld [vmem:[%s1484 + $0x38] sm:$0xff]
    %v1494 = vsel %vm89, %v1482, 0
    %v1497 = vsel %vm89, %v1483, 0
    %1499 = vmatprep.subr.mxu0 0.0
    %1500 = vmatpush1.msra.mxu0 0.0
    %1501 = vmatprep.subr.mxu0 0.0
    %1502 = vmatpush1.msra.mxu0 0.0
    %1503 = vmatprep.subr.mxu0 0.0
    %1504 = vmatpush1.msra.mxu0 0.0
    %1505 = vmatprep.subr.mxu0 0.0
    %1506 = vmatpush1.msra.mxu0 0.0
    %1507 = vmatprep.subr.mxu0 0.0
    %1508 = vmatpush1.msra.mxu0 0.0
    %1509 = vmatprep.subr.mxu0 0.0
    %1510 = vmatpush1.msra.mxu0 0.0
    %1511 = vmatprep.subr.mxu0 0.0
    %1512 = vmatpush1.msra.mxu0 0.0
    %1513 = vmatprep.subr.mxu0 0.0
    %1514 = vmatpush1.msra.mxu0 0.0
    %1515 = vmatprep.subr.mxu0 0.0
    %1516 = vmatpush1.msra.mxu0 %v1492
    %1517 = vmatprep.subr.mxu0 0.0
    %1518 = vmatpush1.msra.mxu0 %v1491
    %1519 = vmatprep.subr.mxu0 0.0
    %1520 = vmatpush1.msra.mxu0 %v1490
    %1521 = vmatprep.subr.mxu0 0.0
    %1522 = vmatpush1.msra.mxu0 %v1489
    %1523 = vmatprep.subr.mxu0 0.0
    %1524 = vmatpush1.msra.mxu0 %v1488
    %1525 = vmatprep.subr.mxu0 0.0
    %1526 = vmatpush1.msra.mxu0 %v1487
    %1527 = vmatprep.subr.mxu0 0.0
    %1528 = vmatpush1.msra.mxu0 %v1486
    %1529 = vmatprep.subr.mxu0 0.0
    %1530 = vmatpush1.msra.mxu0 %v1485
    %1531 = vmatprep.subr.mxu0 0.0
    %1532 = vmatpush2.msra.mxu0 0.0
    %1533 = vmatprep.subr.mxu0 0.0
    %1534 = vmatpush2.msra.mxu0 0.0
    %1535 = vmatprep.subr.mxu0 0.0
    %1536 = vmatpush2.msra.mxu0 0.0
    %1537 = vmatprep.subr.mxu0 0.0
    %1538 = vmatpush2.msra.mxu0 0.0
    %1539 = vmatprep.subr.mxu0 0.0
    %1540 = vmatpush2.msra.mxu0 0.0
    %1541 = vmatprep.subr.mxu0 0.0
    %1542 = vmatpush2.msra.mxu0 0.0
    %1543 = vmatprep.subr.mxu0 0.0
    %1544 = vmatpush2.msra.mxu0 0.0
    %1545 = vmatprep.subr.mxu0 0.0
    %1546 = vmatpush2.msra.mxu0 0.0
    %1547 = vmatprep.subr.mxu0 0.0
    %1548 = vmatpush2.msra.mxu0 0.0
    %1549 = vmatprep.subr.mxu0 0.0
    %1550 = vmatpush2.msra.mxu0 0.0
    %1551 = vmatprep.subr.mxu0 0.0
    %1552 = vmatpush2.msra.mxu0 0.0
    %1553 = vmatprep.subr.mxu0 0.0
    %1554 = vmatpush2.msra.mxu0 0.0
    %1555 = vmatprep.subr.mxu0 0.0
    %1556 = vmatpush2.msra.mxu0 0.0
    %1557 = vmatprep.subr.mxu0 0.0
    %1558 = vmatpush2.msra.mxu0 0.0
    %1559 = vmatprep.subr.mxu0 0.0
    %1560 = vmatpush2.msra.mxu0 0.0
    %1561 = vmatprep.subr.mxu0 0.0
    %1562 = vmatpush2.msra.mxu0 0.0
    %1563 = vmatprep.mubr.f32.mxu0 0.0
    %1564 = vmatmul.mubr.f32.gmra.mxu0 %v1494
    %v1565 = vpop.f32.mrf.mxu0
    %v1566 = vadd.f32 0.0, %v1565
    %v1567 = vpop.f32.mrf.mxu0
    %1568 = vmatprep.mubr.f32.mxu0 0.0
    %1569 = vmatmul.mubr.f32.gmra.mxu0 %v1497
    %v1570 = vpop.f32.mrf.mxu0
    %v1571 = vadd.f32 0.0, %v1570
    %v1572 = vpop.f32.mrf.mxu0
    %1573 = vdwg.mxu0
    %s1574 = scalar_lea.vmem [#allocation7], 512
    %v1575 = vld [vmem:[%s1574] sm:$0xff]
    %v1576 = vld [vmem:[%s1574 + $0x8] sm:$0xff]
    %v1577 = vld [vmem:[%s1574 + $0x10] sm:$0xff]
    %v1578 = vld [vmem:[%s1574 + $0x18] sm:$0xff]
    %v1579 = vld [vmem:[%s1574 + $0x20] sm:$0xff]
    %v1580 = vld [vmem:[%s1574 + $0x28] sm:$0xff]
    %v1581 = vld [vmem:[%s1574 + $0x30] sm:$0xff]
    %v1582 = vld [vmem:[%s1574 + $0x38] sm:$0xff]
    %v1583 = vld [vmem:[%s1574 + $0x40] sm:$0xff]
    %v1584 = vld [vmem:[%s1574 + $0x48] sm:$0xff]
    %v1585 = vld [vmem:[%s1574 + $0x50] sm:$0xff]
    %v1586 = vld [vmem:[%s1574 + $0x58] sm:$0xff]
    %v1587 = vld [vmem:[%s1574 + $0x60] sm:$0xff]
    %v1588 = vld [vmem:[%s1574 + $0x68] sm:$0xff]
    %v1589 = vld [vmem:[%s1574 + $0x70] sm:$0xff]
    %v1590 = vld [vmem:[%s1574 + $0x78] sm:$0xff]
    %v1591 = vld [vmem:[%s1574 + $0x80] sm:$0xff]
    %v1592 = vld [vmem:[%s1574 + $0x88] sm:$0xff]
    %v1593 = vld [vmem:[%s1574 + $0x90] sm:$0xff]
    %v1594 = vld [vmem:[%s1574 + $0x98] sm:$0xff]
    %v1595 = vld [vmem:[%s1574 + $0xa0] sm:$0xff]
    %v1596 = vld [vmem:[%s1574 + $0xa8] sm:$0xff]
    %v1597 = vld [vmem:[%s1574 + $0xb0] sm:$0xff]
    %v1598 = vld [vmem:[%s1574 + $0xb8] sm:$0xff]
    %v1599 = vld [vmem:[%s1574 + $0xc0] sm:$0xff]
    %v1600 = vld [vmem:[%s1574 + $0xc8] sm:$0xff]
    %v1601 = vld [vmem:[%s1574 + $0xd0] sm:$0xff]
    %v1602 = vld [vmem:[%s1574 + $0xd8] sm:$0xff]
    %v1603 = vld [vmem:[%s1574 + $0xe0] sm:$0xff]
    %v1604 = vld [vmem:[%s1574 + $0xe8] sm:$0xff]
    %v1605 = vld [vmem:[%s1574 + $0xf0] sm:$0xff]
    %v1606 = vld [vmem:[%s1574 + $0xf8] sm:$0xff]
    %1607 = vmatprep.subr.mxu0 %v1606
    %1608 = vmatpush1.msra.mxu0 %v1605
    %1609 = vmatprep.subr.mxu0 %v1604
    %1610 = vmatpush1.msra.mxu0 %v1603
    %1611 = vmatprep.subr.mxu0 %v1602
    %1612 = vmatpush1.msra.mxu0 %v1601
    %1613 = vmatprep.subr.mxu0 %v1600
    %1614 = vmatpush1.msra.mxu0 %v1599
    %1615 = vmatprep.subr.mxu0 %v1598
    %1616 = vmatpush1.msra.mxu0 %v1597
    %1617 = vmatprep.subr.mxu0 %v1596
    %1618 = vmatpush1.msra.mxu0 %v1595
    %1619 = vmatprep.subr.mxu0 %v1594
    %1620 = vmatpush1.msra.mxu0 %v1593
    %1621 = vmatprep.subr.mxu0 %v1592
    %1622 = vmatpush1.msra.mxu0 %v1591
    %1623 = vmatprep.subr.mxu0 %v1590
    %1624 = vmatpush1.msra.mxu0 %v1589
    %1625 = vmatprep.subr.mxu0 %v1588
    %1626 = vmatpush1.msra.mxu0 %v1587
    %1627 = vmatprep.subr.mxu0 %v1586
    %1628 = vmatpush1.msra.mxu0 %v1585
    %1629 = vmatprep.subr.mxu0 %v1584
    %1630 = vmatpush1.msra.mxu0 %v1583
    %1631 = vmatprep.subr.mxu0 %v1582
    %1632 = vmatpush1.msra.mxu0 %v1581
    %1633 = vmatprep.subr.mxu0 %v1580
    %1634 = vmatpush1.msra.mxu0 %v1579
    %1635 = vmatprep.subr.mxu0 %v1578
    %1636 = vmatpush1.msra.mxu0 %v1577
    %1637 = vmatprep.subr.mxu0 %v1576
    %1638 = vmatpush1.msra.mxu0 %v1575
    %1639 = vmatprep.subr.mxu0 0.0
    %1640 = vmatpush2.msra.mxu0 0.0
    %1641 = vmatprep.subr.mxu0 0.0
    %1642 = vmatpush2.msra.mxu0 0.0
    %1643 = vmatprep.subr.mxu0 0.0
    %1644 = vmatpush2.msra.mxu0 0.0
    %1645 = vmatprep.subr.mxu0 0.0
    %1646 = vmatpush2.msra.mxu0 0.0
    %1647 = vmatprep.subr.mxu0 0.0
    %1648 = vmatpush2.msra.mxu0 0.0
    %1649 = vmatprep.subr.mxu0 0.0
    %1650 = vmatpush2.msra.mxu0 0.0
    %1651 = vmatprep.subr.mxu0 0.0
    %1652 = vmatpush2.msra.mxu0 0.0
    %1653 = vmatprep.subr.mxu0 0.0
    %1654 = vmatpush2.msra.mxu0 0.0
    %1655 = vmatprep.subr.mxu0 0.0
    %1656 = vmatpush2.msra.mxu0 0.0
    %1657 = vmatprep.subr.mxu0 0.0
    %1658 = vmatpush2.msra.mxu0 0.0
    %1659 = vmatprep.subr.mxu0 0.0
    %1660 = vmatpush2.msra.mxu0 0.0
    %1661 = vmatprep.subr.mxu0 0.0
    %1662 = vmatpush2.msra.mxu0 0.0
    %1663 = vmatprep.subr.mxu0 0.0
    %1664 = vmatpush2.msra.mxu0 0.0
    %1665 = vmatprep.subr.mxu0 0.0
    %1666 = vmatpush2.msra.mxu0 0.0
    %1667 = vmatprep.subr.mxu0 0.0
    %1668 = vmatpush2.msra.mxu0 0.0
    %1669 = vmatprep.subr.mxu0 0.0
    %1670 = vmatpush2.msra.mxu0 0.0
    %1671 = vmatprep.mubr.f32.mxu0 0.0
    %1672 = vmatmul.mubr.f32.gmra.mxu0 %v1566
    %v1673 = vpop.f32.mrf.mxu0
    %v1674 = vadd.f32 0.0, %v1673
    %v1675 = vpop.f32.mrf.mxu0
    %v1676 = vadd.f32 0.0, %v1675
    %1677 = vmatprep.mubr.f32.mxu0 0.0
    %1678 = vmatmul.mubr.f32.gmra.mxu0 %v1571
    %v1679 = vpop.f32.mrf.mxu0
    %v1680 = vadd.f32 0.0, %v1679
    %v1681 = vpop.f32.mrf.mxu0
    %v1682 = vadd.f32 0.0, %v1681
    %1683 = vdwg.mxu0
    %s1684 = scalar_lea.vmem [#allocation8], 2048
    %v1685 = vld [vmem:[%s1684] sm:$0xff]
    %v1686 = vld [vmem:[%s1684 + $0x8] sm:$0xff]
    %v1687 = vld [vmem:[%s1684 + $0x10] sm:$0xff]
    %v1688 = vld [vmem:[%s1684 + $0x18] sm:$0xff]
    %v1689 = vld [vmem:[%s1684 + $0x20] sm:$0xff]
    %v1690 = vld [vmem:[%s1684 + $0x28] sm:$0xff]
    %v1691 = vld [vmem:[%s1684 + $0x30] sm:$0xff]
    %v1692 = vld [vmem:[%s1684 + $0x38] sm:$0xff]
    %v1693 = vld [vmem:[%s1684 + $0x40] sm:$0xff]
    %v1694 = vld [vmem:[%s1684 + $0x48] sm:$0xff]
    %v1695 = vld [vmem:[%s1684 + $0x50] sm:$0xff]
    %v1696 = vld [vmem:[%s1684 + $0x58] sm:$0xff]
    %v1697 = vld [vmem:[%s1684 + $0x60] sm:$0xff]
    %v1698 = vld [vmem:[%s1684 + $0x68] sm:$0xff]
    %v1699 = vld [vmem:[%s1684 + $0x70] sm:$0xff]
    %v1700 = vld [vmem:[%s1684 + $0x78] sm:$0xff]
    %v1701 = vld [vmem:[%s1684 + $0x80] sm:$0xff]
    %v1702 = vld [vmem:[%s1684 + $0x88] sm:$0xff]
    %v1703 = vld [vmem:[%s1684 + $0x90] sm:$0xff]
    %v1704 = vld [vmem:[%s1684 + $0x98] sm:$0xff]
    %v1705 = vld [vmem:[%s1684 + $0xa0] sm:$0xff]
    %v1706 = vld [vmem:[%s1684 + $0xa8] sm:$0xff]
    %v1707 = vld [vmem:[%s1684 + $0xb0] sm:$0xff]
    %v1708 = vld [vmem:[%s1684 + $0xb8] sm:$0xff]
    %v1709 = vld [vmem:[%s1684 + $0xc0] sm:$0xff]
    %v1710 = vld [vmem:[%s1684 + $0xc8] sm:$0xff]
    %v1711 = vld [vmem:[%s1684 + $0xd0] sm:$0xff]
    %v1712 = vld [vmem:[%s1684 + $0xd8] sm:$0xff]
    %v1713 = vld [vmem:[%s1684 + $0xe0] sm:$0xff]
    %v1714 = vld [vmem:[%s1684 + $0xe8] sm:$0xff]
    %v1715 = vld [vmem:[%s1684 + $0xf0] sm:$0xff]
    %v1716 = vld [vmem:[%s1684 + $0xf8] sm:$0xff]
    %v1717 = vld [vmem:[%s1684 + $0x100] sm:$0xff]
    %v1718 = vld [vmem:[%s1684 + $0x108] sm:$0xff]
    %v1719 = vld [vmem:[%s1684 + $0x110] sm:$0xff]
    %v1720 = vld [vmem:[%s1684 + $0x118] sm:$0xff]
    %v1721 = vld [vmem:[%s1684 + $0x120] sm:$0xff]
    %v1722 = vld [vmem:[%s1684 + $0x128] sm:$0xff]
    %v1723 = vld [vmem:[%s1684 + $0x130] sm:$0xff]
    %v1724 = vld [vmem:[%s1684 + $0x138] sm:$0xff]
    %v1725 = vld [vmem:[%s1684 + $0x140] sm:$0xff]
    %v1726 = vld [vmem:[%s1684 + $0x148] sm:$0xff]
    %v1727 = vld [vmem:[%s1684 + $0x150] sm:$0xff]
    %v1728 = vld [vmem:[%s1684 + $0x158] sm:$0xff]
    %v1729 = vld [vmem:[%s1684 + $0x160] sm:$0xff]
    %v1730 = vld [vmem:[%s1684 + $0x168] sm:$0xff]
    %v1731 = vld [vmem:[%s1684 + $0x170] sm:$0xff]
    %v1732 = vld [vmem:[%s1684 + $0x178] sm:$0xff]
    %v1733 = vld [vmem:[%s1684 + $0x180] sm:$0xff]
    %v1734 = vld [vmem:[%s1684 + $0x188] sm:$0xff]
    %v1735 = vld [vmem:[%s1684 + $0x190] sm:$0xff]
    %v1736 = vld [vmem:[%s1684 + $0x198] sm:$0xff]
    %v1737 = vld [vmem:[%s1684 + $0x1a0] sm:$0xff]
    %v1738 = vld [vmem:[%s1684 + $0x1a8] sm:$0xff]
    %v1739 = vld [vmem:[%s1684 + $0x1b0] sm:$0xff]
    %v1740 = vld [vmem:[%s1684 + $0x1b8] sm:$0xff]
    %v1741 = vld [vmem:[%s1684 + $0x1c0] sm:$0xff]
    %v1742 = vld [vmem:[%s1684 + $0x1c8] sm:$0xff]
    %v1743 = vld [vmem:[%s1684 + $0x1d0] sm:$0xff]
    %v1744 = vld [vmem:[%s1684 + $0x1d8] sm:$0xff]
    %v1745 = vld [vmem:[%s1684 + $0x1e0] sm:$0xff]
    %v1746 = vld [vmem:[%s1684 + $0x1e8] sm:$0xff]
    %v1747 = vld [vmem:[%s1684 + $0x1f0] sm:$0xff]
    %v1748 = vld [vmem:[%s1684 + $0x1f8] sm:$0xff]
    %v1749 = vld [vmem:[%s1684 + $0x200] sm:$0xff]
    %v1750 = vld [vmem:[%s1684 + $0x208] sm:$0xff]
    %v1751 = vld [vmem:[%s1684 + $0x210] sm:$0xff]
    %v1752 = vld [vmem:[%s1684 + $0x218] sm:$0xff]
    %v1753 = vld [vmem:[%s1684 + $0x220] sm:$0xff]
    %v1754 = vld [vmem:[%s1684 + $0x228] sm:$0xff]
    %v1755 = vld [vmem:[%s1684 + $0x230] sm:$0xff]
    %v1756 = vld [vmem:[%s1684 + $0x238] sm:$0xff]
    %v1757 = vld [vmem:[%s1684 + $0x240] sm:$0xff]
    %v1758 = vld [vmem:[%s1684 + $0x248] sm:$0xff]
    %v1759 = vld [vmem:[%s1684 + $0x250] sm:$0xff]
    %v1760 = vld [vmem:[%s1684 + $0x258] sm:$0xff]
    %v1761 = vld [vmem:[%s1684 + $0x260] sm:$0xff]
    %v1762 = vld [vmem:[%s1684 + $0x268] sm:$0xff]
    %v1763 = vld [vmem:[%s1684 + $0x270] sm:$0xff]
    %v1764 = vld [vmem:[%s1684 + $0x278] sm:$0xff]
    %v1765 = vld [vmem:[%s1684 + $0x280] sm:$0xff]
    %v1766 = vld [vmem:[%s1684 + $0x288] sm:$0xff]
    %v1767 = vld [vmem:[%s1684 + $0x290] sm:$0xff]
    %v1768 = vld [vmem:[%s1684 + $0x298] sm:$0xff]
    %v1769 = vld [vmem:[%s1684 + $0x2a0] sm:$0xff]
    %v1770 = vld [vmem:[%s1684 + $0x2a8] sm:$0xff]
    %v1771 = vld [vmem:[%s1684 + $0x2b0] sm:$0xff]
    %v1772 = vld [vmem:[%s1684 + $0x2b8] sm:$0xff]
    %v1773 = vld [vmem:[%s1684 + $0x2c0] sm:$0xff]
    %v1774 = vld [vmem:[%s1684 + $0x2c8] sm:$0xff]
    %v1775 = vld [vmem:[%s1684 + $0x2d0] sm:$0xff]
    %v1776 = vld [vmem:[%s1684 + $0x2d8] sm:$0xff]
    %v1777 = vld [vmem:[%s1684 + $0x2e0] sm:$0xff]
    %v1778 = vld [vmem:[%s1684 + $0x2e8] sm:$0xff]
    %v1779 = vld [vmem:[%s1684 + $0x2f0] sm:$0xff]
    %v1780 = vld [vmem:[%s1684 + $0x2f8] sm:$0xff]
    %v1781 = vld [vmem:[%s1684 + $0x300] sm:$0xff]
    %v1782 = vld [vmem:[%s1684 + $0x308] sm:$0xff]
    %v1783 = vld [vmem:[%s1684 + $0x310] sm:$0xff]
    %v1784 = vld [vmem:[%s1684 + $0x318] sm:$0xff]
    %v1785 = vld [vmem:[%s1684 + $0x320] sm:$0xff]
    %v1786 = vld [vmem:[%s1684 + $0x328] sm:$0xff]
    %v1787 = vld [vmem:[%s1684 + $0x330] sm:$0xff]
    %v1788 = vld [vmem:[%s1684 + $0x338] sm:$0xff]
    %v1789 = vld [vmem:[%s1684 + $0x340] sm:$0xff]
    %v1790 = vld [vmem:[%s1684 + $0x348] sm:$0xff]
    %v1791 = vld [vmem:[%s1684 + $0x350] sm:$0xff]
    %v1792 = vld [vmem:[%s1684 + $0x358] sm:$0xff]
    %v1793 = vld [vmem:[%s1684 + $0x360] sm:$0xff]
    %v1794 = vld [vmem:[%s1684 + $0x368] sm:$0xff]
    %v1795 = vld [vmem:[%s1684 + $0x370] sm:$0xff]
    %v1796 = vld [vmem:[%s1684 + $0x378] sm:$0xff]
    %v1797 = vld [vmem:[%s1684 + $0x380] sm:$0xff]
    %v1798 = vld [vmem:[%s1684 + $0x388] sm:$0xff]
    %v1799 = vld [vmem:[%s1684 + $0x390] sm:$0xff]
    %v1800 = vld [vmem:[%s1684 + $0x398] sm:$0xff]
    %v1801 = vld [vmem:[%s1684 + $0x3a0] sm:$0xff]
    %v1802 = vld [vmem:[%s1684 + $0x3a8] sm:$0xff]
    %v1803 = vld [vmem:[%s1684 + $0x3b0] sm:$0xff]
    %v1804 = vld [vmem:[%s1684 + $0x3b8] sm:$0xff]
    %v1805 = vld [vmem:[%s1684 + $0x3c0] sm:$0xff]
    %v1806 = vld [vmem:[%s1684 + $0x3c8] sm:$0xff]
    %v1807 = vld [vmem:[%s1684 + $0x3d0] sm:$0xff]
    %v1808 = vld [vmem:[%s1684 + $0x3d8] sm:$0xff]
    %v1809 = vld [vmem:[%s1684 + $0x3e0] sm:$0xff]
    %v1810 = vld [vmem:[%s1684 + $0x3e8] sm:$0xff]
    %v1811 = vld [vmem:[%s1684 + $0x3f0] sm:$0xff]
    %v1812 = vld [vmem:[%s1684 + $0x3f8] sm:$0xff]
    %1813 = vmatprep.subr.mxu0 %v1746
    %1814 = vmatpush1.msra.mxu0 %v1745
    %1815 = vmatprep.subr.mxu0 %v1742
    %1816 = vmatpush1.msra.mxu0 %v1741
    %1817 = vmatprep.subr.mxu0 %v1738
    %1818 = vmatpush1.msra.mxu0 %v1737
    %1819 = vmatprep.subr.mxu0 %v1734
    %1820 = vmatpush1.msra.mxu0 %v1733
    %1821 = vmatprep.subr.mxu0 %v1730
    %1822 = vmatpush1.msra.mxu0 %v1729
    %1823 = vmatprep.subr.mxu0 %v1726
    %1824 = vmatpush1.msra.mxu0 %v1725
    %1825 = vmatprep.subr.mxu0 %v1722
    %1826 = vmatpush1.msra.mxu0 %v1721
    %1827 = vmatprep.subr.mxu0 %v1718
    %1828 = vmatpush1.msra.mxu0 %v1717
    %1829 = vmatprep.subr.mxu0 %v1714
    %1830 = vmatpush1.msra.mxu0 %v1713
    %1831 = vmatprep.subr.mxu0 %v1710
    %1832 = vmatpush1.msra.mxu0 %v1709
    %1833 = vmatprep.subr.mxu0 %v1706
    %1834 = vmatpush1.msra.mxu0 %v1705
    %1835 = vmatprep.subr.mxu0 %v1702
    %1836 = vmatpush1.msra.mxu0 %v1701
    %1837 = vmatprep.subr.mxu0 %v1698
    %1838 = vmatpush1.msra.mxu0 %v1697
    %1839 = vmatprep.subr.mxu0 %v1694
    %1840 = vmatpush1.msra.mxu0 %v1693
    %1841 = vmatprep.subr.mxu0 %v1690
    %1842 = vmatpush1.msra.mxu0 %v1689
    %1843 = vmatprep.subr.mxu0 %v1686
    %1844 = vmatpush1.msra.mxu0 %v1685
    %1845 = vmatprep.subr.mxu0 %v1810
    %1846 = vmatpush2.msra.mxu0 %v1809
    %1847 = vmatprep.subr.mxu0 %v1806
    %1848 = vmatpush2.msra.mxu0 %v1805
    %1849 = vmatprep.subr.mxu0 %v1802
    %1850 = vmatpush2.msra.mxu0 %v1801
    %1851 = vmatprep.subr.mxu0 %v1798
    %1852 = vmatpush2.msra.mxu0 %v1797
    %1853 = vmatprep.subr.mxu0 %v1794
    %1854 = vmatpush2.msra.mxu0 %v1793
    %1855 = vmatprep.subr.mxu0 %v1790
    %1856 = vmatpush2.msra.mxu0 %v1789
    %1857 = vmatprep.subr.mxu0 %v1786
    %1858 = vmatpush2.msra.mxu0 %v1785
    %1859 = vmatprep.subr.mxu0 %v1782
    %1860 = vmatpush2.msra.mxu0 %v1781
    %1861 = vmatprep.subr.mxu0 %v1778
    %1862 = vmatpush2.msra.mxu0 %v1777
    %1863 = vmatprep.subr.mxu0 %v1774
    %1864 = vmatpush2.msra.mxu0 %v1773
    %1865 = vmatprep.subr.mxu0 %v1770
    %1866 = vmatpush2.msra.mxu0 %v1769
    %1867 = vmatprep.subr.mxu0 %v1766
    %1868 = vmatpush2.msra.mxu0 %v1765
    %1869 = vmatprep.subr.mxu0 %v1762
    %1870 = vmatpush2.msra.mxu0 %v1761
    %1871 = vmatprep.subr.mxu0 %v1758
    %1872 = vmatpush2.msra.mxu0 %v1757
    %1873 = vmatprep.subr.mxu0 %v1754
    %1874 = vmatpush2.msra.mxu0 %v1753
    %1875 = vmatprep.subr.mxu0 %v1750
    %1876 = vmatpush2.msra.mxu0 %v1749
    %1877 = vmatprep.mubr.f32.mxu0 %v1676
    %1878 = vmatmul.mubr.f32.gmra.mxu0 %v1674
    %v1879 = vpop.f32.mrf.mxu0
    %v1880 = vadd.f32 0.0, %v1879
    %v1881 = vpop.f32.mrf.mxu0
    %v1882 = vadd.f32 0.0, %v1881
    %1883 = vmatprep.mubr.f32.mxu0 %v1682
    %1884 = vmatmul.mubr.f32.gmra.mxu0 %v1680
    %v1885 = vpop.f32.mrf.mxu0
    %v1886 = vadd.f32 0.0, %v1885
    %v1887 = vpop.f32.mrf.mxu0
    %v1888 = vadd.f32 0.0, %v1887
    %1889 = vdwg.mxu0
    %1890 = vmatprep.subr.mxu0 %v1748
    %1891 = vmatpush1.msra.mxu0 %v1747
    %1892 = vmatprep.subr.mxu0 %v1744
    %1893 = vmatpush1.msra.mxu0 %v1743
    %1894 = vmatprep.subr.mxu0 %v1740
    %1895 = vmatpush1.msra.mxu0 %v1739
    %1896 = vmatprep.subr.mxu0 %v1736
    %1897 = vmatpush1.msra.mxu0 %v1735
    %1898 = vmatprep.subr.mxu0 %v1732
    %1899 = vmatpush1.msra.mxu0 %v1731
    %1900 = vmatprep.subr.mxu0 %v1728
    %1901 = vmatpush1.msra.mxu0 %v1727
    %1902 = vmatprep.subr.mxu0 %v1724
    %1903 = vmatpush1.msra.mxu0 %v1723
    %1904 = vmatprep.subr.mxu0 %v1720
    %1905 = vmatpush1.msra.mxu0 %v1719
    %1906 = vmatprep.subr.mxu0 %v1716
    %1907 = vmatpush1.msra.mxu0 %v1715
    %1908 = vmatprep.subr.mxu0 %v1712
    %1909 = vmatpush1.msra.mxu0 %v1711
    %1910 = vmatprep.subr.mxu0 %v1708
    %1911 = vmatpush1.msra.mxu0 %v1707
    %1912 = vmatprep.subr.mxu0 %v1704
    %1913 = vmatpush1.msra.mxu0 %v1703
    %1914 = vmatprep.subr.mxu0 %v1700
    %1915 = vmatpush1.msra.mxu0 %v1699
    %1916 = vmatprep.subr.mxu0 %v1696
    %1917 = vmatpush1.msra.mxu0 %v1695
    %1918 = vmatprep.subr.mxu0 %v1692
    %1919 = vmatpush1.msra.mxu0 %v1691
    %1920 = vmatprep.subr.mxu0 %v1688
    %1921 = vmatpush1.msra.mxu0 %v1687
    %1922 = vmatprep.subr.mxu0 %v1812
    %1923 = vmatpush2.msra.mxu0 %v1811
    %1924 = vmatprep.subr.mxu0 %v1808
    %1925 = vmatpush2.msra.mxu0 %v1807
    %1926 = vmatprep.subr.mxu0 %v1804
    %1927 = vmatpush2.msra.mxu0 %v1803
    %1928 = vmatprep.subr.mxu0 %v1800
    %1929 = vmatpush2.msra.mxu0 %v1799
    %1930 = vmatprep.subr.mxu0 %v1796
    %1931 = vmatpush2.msra.mxu0 %v1795
    %1932 = vmatprep.subr.mxu0 %v1792
    %1933 = vmatpush2.msra.mxu0 %v1791
    %1934 = vmatprep.subr.mxu0 %v1788
    %1935 = vmatpush2.msra.mxu0 %v1787
    %1936 = vmatprep.subr.mxu0 %v1784
    %1937 = vmatpush2.msra.mxu0 %v1783
    %1938 = vmatprep.subr.mxu0 %v1780
    %1939 = vmatpush2.msra.mxu0 %v1779
    %1940 = vmatprep.subr.mxu0 %v1776
    %1941 = vmatpush2.msra.mxu0 %v1775
    %1942 = vmatprep.subr.mxu0 %v1772
    %1943 = vmatpush2.msra.mxu0 %v1771
    %1944 = vmatprep.subr.mxu0 %v1768
    %1945 = vmatpush2.msra.mxu0 %v1767
    %1946 = vmatprep.subr.mxu0 %v1764
    %1947 = vmatpush2.msra.mxu0 %v1763
    %1948 = vmatprep.subr.mxu0 %v1760
    %1949 = vmatpush2.msra.mxu0 %v1759
    %1950 = vmatprep.subr.mxu0 %v1756
    %1951 = vmatpush2.msra.mxu0 %v1755
    %1952 = vmatprep.subr.mxu0 %v1752
    %1953 = vmatpush2.msra.mxu0 %v1751
    %1954 = vmatprep.mubr.f32.mxu0 %v1676
    %1955 = vmatmul.mubr.f32.gmra.mxu0 %v1674
    %v1956 = vpop.f32.mrf.mxu0
    %v1957 = vadd.f32 0.0, %v1956
    %v1958 = vpop.f32.mrf.mxu0
    %v1959 = vadd.f32 0.0, %v1958
    %1960 = vmatprep.mubr.f32.mxu0 %v1682
    %1961 = vmatmul.mubr.f32.gmra.mxu0 %v1680
    %v1962 = vpop.f32.mrf.mxu0
    %v1963 = vadd.f32 0.0, %v1962
    %v1964 = vpop.f32.mrf.mxu0
    %v1965 = vadd.f32 0.0, %v1964
    %1966 = vdwg.mxu0
    %s1967 = scalar_lea.vmem %s4, 1024
    %v1968 = vld [vmem:[%s1967] sm:$0xff]
    %v1969 = vld [vmem:[%s1967 + $0x8] sm:$0xff]
    %v1970 = vld [vmem:[%s1967 + $0x10] sm:$0xff]
    %v1971 = vld [vmem:[%s1967 + $0x18] sm:$0xff]
    %v1972 = vld [vmem:[%s1967 + $0x20] sm:$0xff]
    %v1973 = vld [vmem:[%s1967 + $0x28] sm:$0xff]
    %v1974 = vld [vmem:[%s1967 + $0x30] sm:$0xff]
    %v1975 = vld [vmem:[%s1967 + $0x38] sm:$0xff]
    %v1976 = vld [vmem:[%s1967 + $0x40] sm:$0xff]
    %v1977 = vld [vmem:[%s1967 + $0x48] sm:$0xff]
    %v1978 = vld [vmem:[%s1967 + $0x50] sm:$0xff]
    %v1979 = vld [vmem:[%s1967 + $0x58] sm:$0xff]
    %v1980 = vld [vmem:[%s1967 + $0x60] sm:$0xff]
    %v1981 = vld [vmem:[%s1967 + $0x68] sm:$0xff]
    %v1982 = vld [vmem:[%s1967 + $0x70] sm:$0xff]
    %v1983 = vld [vmem:[%s1967 + $0x78] sm:$0xff]
    %v1984 = vld [vmem:[%s1967 + $0x80] sm:$0xff]
    %v1985 = vld [vmem:[%s1967 + $0x88] sm:$0xff]
    %v1986 = vld [vmem:[%s1967 + $0x90] sm:$0xff]
    %v1987 = vld [vmem:[%s1967 + $0x98] sm:$0xff]
    %v1988 = vld [vmem:[%s1967 + $0xa0] sm:$0xff]
    %v1989 = vld [vmem:[%s1967 + $0xa8] sm:$0xff]
    %v1990 = vld [vmem:[%s1967 + $0xb0] sm:$0xff]
    %v1991 = vld [vmem:[%s1967 + $0xb8] sm:$0xff]
    %v1992 = vld [vmem:[%s1967 + $0xc0] sm:$0xff]
    %v1993 = vld [vmem:[%s1967 + $0xc8] sm:$0xff]
    %v1994 = vld [vmem:[%s1967 + $0xd0] sm:$0xff]
    %v1995 = vld [vmem:[%s1967 + $0xd8] sm:$0xff]
    %v1996 = vld [vmem:[%s1967 + $0xe0] sm:$0xff]
    %v1997 = vld [vmem:[%s1967 + $0xe8] sm:$0xff]
    %v1998 = vld [vmem:[%s1967 + $0xf0] sm:$0xff]
    %v1999 = vld [vmem:[%s1967 + $0xf8] sm:$0xff]
    %v2000 = vld [vmem:[%s1967 + $0x100] sm:$0xff]
    %v2001 = vld [vmem:[%s1967 + $0x108] sm:$0xff]
    %v2002 = vld [vmem:[%s1967 + $0x110] sm:$0xff]
    %v2003 = vld [vmem:[%s1967 + $0x118] sm:$0xff]
    %v2004 = vld [vmem:[%s1967 + $0x120] sm:$0xff]
    %v2005 = vld [vmem:[%s1967 + $0x128] sm:$0xff]
    %v2006 = vld [vmem:[%s1967 + $0x130] sm:$0xff]
    %v2007 = vld [vmem:[%s1967 + $0x138] sm:$0xff]
    %v2008 = vld [vmem:[%s1967 + $0x140] sm:$0xff]
    %v2009 = vld [vmem:[%s1967 + $0x148] sm:$0xff]
    %v2010 = vld [vmem:[%s1967 + $0x150] sm:$0xff]
    %v2011 = vld [vmem:[%s1967 + $0x158] sm:$0xff]
    %v2012 = vld [vmem:[%s1967 + $0x160] sm:$0xff]
    %v2013 = vld [vmem:[%s1967 + $0x168] sm:$0xff]
    %v2014 = vld [vmem:[%s1967 + $0x170] sm:$0xff]
    %v2015 = vld [vmem:[%s1967 + $0x178] sm:$0xff]
    %v2016 = vld [vmem:[%s1967 + $0x180] sm:$0xff]
    %v2017 = vld [vmem:[%s1967 + $0x188] sm:$0xff]
    %v2018 = vld [vmem:[%s1967 + $0x190] sm:$0xff]
    %v2019 = vld [vmem:[%s1967 + $0x198] sm:$0xff]
    %v2020 = vld [vmem:[%s1967 + $0x1a0] sm:$0xff]
    %v2021 = vld [vmem:[%s1967 + $0x1a8] sm:$0xff]
    %v2022 = vld [vmem:[%s1967 + $0x1b0] sm:$0xff]
    %v2023 = vld [vmem:[%s1967 + $0x1b8] sm:$0xff]
    %v2024 = vld [vmem:[%s1967 + $0x1c0] sm:$0xff]
    %v2025 = vld [vmem:[%s1967 + $0x1c8] sm:$0xff]
    %v2026 = vld [vmem:[%s1967 + $0x1d0] sm:$0xff]
    %v2027 = vld [vmem:[%s1967 + $0x1d8] sm:$0xff]
    %v2028 = vld [vmem:[%s1967 + $0x1e0] sm:$0xff]
    %v2029 = vld [vmem:[%s1967 + $0x1e8] sm:$0xff]
    %v2030 = vld [vmem:[%s1967 + $0x1f0] sm:$0xff]
    %v2031 = vld [vmem:[%s1967 + $0x1f8] sm:$0xff]
    %2032 = vmatprep.subr.mxu0 0.0
    %2033 = vmatpush1.msra.mxu0 %v1983
    %2034 = vmatprep.subr.mxu0 0.0
    %2035 = vmatpush1.msra.mxu0 %v1982
    %2036 = vmatprep.subr.mxu0 0.0
    %2037 = vmatpush1.msra.mxu0 %v1981
    %2038 = vmatprep.subr.mxu0 0.0
    %2039 = vmatpush1.msra.mxu0 %v1980
    %2040 = vmatprep.subr.mxu0 0.0
    %2041 = vmatpush1.msra.mxu0 %v1979
    %2042 = vmatprep.subr.mxu0 0.0
    %2043 = vmatpush1.msra.mxu0 %v1978
    %2044 = vmatprep.subr.mxu0 0.0
    %2045 = vmatpush1.msra.mxu0 %v1977
    %2046 = vmatprep.subr.mxu0 0.0
    %2047 = vmatpush1.msra.mxu0 %v1976
    %2048 = vmatprep.subr.mxu0 0.0
    %2049 = vmatpush1.msra.mxu0 %v1975
    %2050 = vmatprep.subr.mxu0 0.0
    %2051 = vmatpush1.msra.mxu0 %v1974
    %2052 = vmatprep.subr.mxu0 0.0
    %2053 = vmatpush1.msra.mxu0 %v1973
    %2054 = vmatprep.subr.mxu0 0.0
    %2055 = vmatpush1.msra.mxu0 %v1972
    %2056 = vmatprep.subr.mxu0 0.0
    %2057 = vmatpush1.msra.mxu0 %v1971
    %2058 = vmatprep.subr.mxu0 0.0
    %2059 = vmatpush1.msra.mxu0 %v1970
    %2060 = vmatprep.subr.mxu0 0.0
    %2061 = vmatpush1.msra.mxu0 %v1969
    %2062 = vmatprep.subr.mxu0 0.0
    %2063 = vmatpush1.msra.mxu0 %v1968
    %2064 = vmatprep.subr.mxu0 0.0
    %2065 = vmatpush2.msra.mxu0 %v1999
    %2066 = vmatprep.subr.mxu0 0.0
    %2067 = vmatpush2.msra.mxu0 %v1998
    %2068 = vmatprep.subr.mxu0 0.0
    %2069 = vmatpush2.msra.mxu0 %v1997
    %2070 = vmatprep.subr.mxu0 0.0
    %2071 = vmatpush2.msra.mxu0 %v1996
    %2072 = vmatprep.subr.mxu0 0.0
    %2073 = vmatpush2.msra.mxu0 %v1995
    %2074 = vmatprep.subr.mxu0 0.0
    %2075 = vmatpush2.msra.mxu0 %v1994
    %2076 = vmatprep.subr.mxu0 0.0
    %2077 = vmatpush2.msra.mxu0 %v1993
    %2078 = vmatprep.subr.mxu0 0.0
    %2079 = vmatpush2.msra.mxu0 %v1992
    %2080 = vmatprep.subr.mxu0 0.0
    %2081 = vmatpush2.msra.mxu0 %v1991
    %2082 = vmatprep.subr.mxu0 0.0
    %2083 = vmatpush2.msra.mxu0 %v1990
    %2084 = vmatprep.subr.mxu0 0.0
    %2085 = vmatpush2.msra.mxu0 %v1989
    %2086 = vmatprep.subr.mxu0 0.0
    %2087 = vmatpush2.msra.mxu0 %v1988
    %2088 = vmatprep.subr.mxu0 0.0
    %2089 = vmatpush2.msra.mxu0 %v1987
    %2090 = vmatprep.subr.mxu0 0.0
    %2091 = vmatpush2.msra.mxu0 %v1986
    %2092 = vmatprep.subr.mxu0 0.0
    %2093 = vmatpush2.msra.mxu0 %v1985
    %2094 = vmatprep.subr.mxu0 0.0
    %2095 = vmatpush2.msra.mxu0 %v1984
    %2096 = vmatprep.mubr.f32.mxu0 %v1882
    %2097 = vmatmul.mubr.f32.gmra.mxu0 %v1880
    %v2098 = vpop.f32.mrf.mxu0
    %v2099 = vadd.f32 0.0, %v2098
    %v2100 = vpop.f32.mrf.mxu0
    %2101 = vmatprep.mubr.f32.mxu0 %v1888
    %2102 = vmatmul.mubr.f32.gmra.mxu0 %v1886
    %v2103 = vpop.f32.mrf.mxu0
    %v2104 = vadd.f32 0.0, %v2103
    %v2105 = vpop.f32.mrf.mxu0
    %2106 = vdwg.mxu0
    %2107 = vmatprep.subr.mxu0 0.0
    %2108 = vmatpush1.msra.mxu0 %v2015
    %2109 = vmatprep.subr.mxu0 0.0
    %2110 = vmatpush1.msra.mxu0 %v2014
    %2111 = vmatprep.subr.mxu0 0.0
    %2112 = vmatpush1.msra.mxu0 %v2013
    %2113 = vmatprep.subr.mxu0 0.0
    %2114 = vmatpush1.msra.mxu0 %v2012
    %2115 = vmatprep.subr.mxu0 0.0
    %2116 = vmatpush1.msra.mxu0 %v2011
    %2117 = vmatprep.subr.mxu0 0.0
    %2118 = vmatpush1.msra.mxu0 %v2010
    %2119 = vmatprep.subr.mxu0 0.0
    %2120 = vmatpush1.msra.mxu0 %v2009
    %2121 = vmatprep.subr.mxu0 0.0
    %2122 = vmatpush1.msra.mxu0 %v2008
    %2123 = vmatprep.subr.mxu0 0.0
    %2124 = vmatpush1.msra.mxu0 %v2007
    %2125 = vmatprep.subr.mxu0 0.0
    %2126 = vmatpush1.msra.mxu0 %v2006
    %2127 = vmatprep.subr.mxu0 0.0
    %2128 = vmatpush1.msra.mxu0 %v2005
    %2129 = vmatprep.subr.mxu0 0.0
    %2130 = vmatpush1.msra.mxu0 %v2004
    %2131 = vmatprep.subr.mxu0 0.0
    %2132 = vmatpush1.msra.mxu0 %v2003
    %2133 = vmatprep.subr.mxu0 0.0
    %2134 = vmatpush1.msra.mxu0 %v2002
    %2135 = vmatprep.subr.mxu0 0.0
    %2136 = vmatpush1.msra.mxu0 %v2001
    %2137 = vmatprep.subr.mxu0 0.0
    %2138 = vmatpush1.msra.mxu0 %v2000
    %2139 = vmatprep.subr.mxu0 0.0
    %2140 = vmatpush2.msra.mxu0 %v2031
    %2141 = vmatprep.subr.mxu0 0.0
    %2142 = vmatpush2.msra.mxu0 %v2030
    %2143 = vmatprep.subr.mxu0 0.0
    %2144 = vmatpush2.msra.mxu0 %v2029
    %2145 = vmatprep.subr.mxu0 0.0
    %2146 = vmatpush2.msra.mxu0 %v2028
    %2147 = vmatprep.subr.mxu0 0.0
    %2148 = vmatpush2.msra.mxu0 %v2027
    %2149 = vmatprep.subr.mxu0 0.0
    %2150 = vmatpush2.msra.mxu0 %v2026
    %2151 = vmatprep.subr.mxu0 0.0
    %2152 = vmatpush2.msra.mxu0 %v2025
    %2153 = vmatprep.subr.mxu0 0.0
    %2154 = vmatpush2.msra.mxu0 %v2024
    %2155 = vmatprep.subr.mxu0 0.0
    %2156 = vmatpush2.msra.mxu0 %v2023
    %2157 = vmatprep.subr.mxu0 0.0
    %2158 = vmatpush2.msra.mxu0 %v2022
    %2159 = vmatprep.subr.mxu0 0.0
    %2160 = vmatpush2.msra.mxu0 %v2021
    %2161 = vmatprep.subr.mxu0 0.0
    %2162 = vmatpush2.msra.mxu0 %v2020
    %2163 = vmatprep.subr.mxu0 0.0
    %2164 = vmatpush2.msra.mxu0 %v2019
    %2165 = vmatprep.subr.mxu0 0.0
    %2166 = vmatpush2.msra.mxu0 %v2018
    %2167 = vmatprep.subr.mxu0 0.0
    %2168 = vmatpush2.msra.mxu0 %v2017
    %2169 = vmatprep.subr.mxu0 0.0
    %2170 = vmatpush2.msra.mxu0 %v2016
    %2171 = vmatprep.mubr.f32.mxu0 %v1959
    %2172 = vmatmul.mubr.f32.gmra.mxu0 %v1957
    %v2173 = vpop.f32.mrf.mxu0
    %v2174 = vadd.f32 %v2099, %v2173
    %v2175 = vpop.f32.mrf.mxu0
    %2176 = vmatprep.mubr.f32.mxu0 %v1965
    %2177 = vmatmul.mubr.f32.gmra.mxu0 %v1963
    %v2178 = vpop.f32.mrf.mxu0
    %v2179 = vadd.f32 %v2104, %v2178
    %v2180 = vpop.f32.mrf.mxu0
    %2181 = vdwg.mxu0
    %v2182 = vmax.f32 %v2174, 0.0
    %v2183 = vmax.f32 %v2179, 0.0
    %s2184 = scalar_lea.vmem [#allocation2], 48
    %v2185 = vld [vmem:[%s2184] sm:$0xff]
    %v2186 = vld [vmem:[%s2184 + $0x8] sm:$0xff]
    %s2187 = scalar_lea.vmem [#allocation5], 192
    %v2188 = vld [vmem:[%s2187] sm:$0xff]
    %v2189 = vld [vmem:[%s2187 + $0x8] sm:$0xff]
    %v2190 = vld [vmem:[%s2187 + $0x10] sm:$0xff]
    %v2191 = vld [vmem:[%s2187 + $0x18] sm:$0xff]
    %v2192 = vld [vmem:[%s2187 + $0x20] sm:$0xff]
    %v2193 = vld [vmem:[%s2187 + $0x28] sm:$0xff]
    %v2194 = vld [vmem:[%s2187 + $0x30] sm:$0xff]
    %v2195 = vld [vmem:[%s2187 + $0x38] sm:$0xff]
    %v2197 = vsel %vm89, %v2185, 0
    %v2200 = vsel %vm89, %v2186, 0
    %2202 = vmatprep.subr.mxu0 0.0
    %2203 = vmatpush1.msra.mxu0 0.0
    %2204 = vmatprep.subr.mxu0 0.0
    %2205 = vmatpush1.msra.mxu0 0.0
    %2206 = vmatprep.subr.mxu0 0.0
    %2207 = vmatpush1.msra.mxu0 0.0
    %2208 = vmatprep.subr.mxu0 0.0
    %2209 = vmatpush1.msra.mxu0 0.0
    %2210 = vmatprep.subr.mxu0 0.0
    %2211 = vmatpush1.msra.mxu0 0.0
    %2212 = vmatprep.subr.mxu0 0.0
    %2213 = vmatpush1.msra.mxu0 0.0
    %2214 = vmatprep.subr.mxu0 0.0
    %2215 = vmatpush1.msra.mxu0 0.0
    %2216 = vmatprep.subr.mxu0 0.0
    %2217 = vmatpush1.msra.mxu0 0.0
    %2218 = vmatprep.subr.mxu0 0.0
    %2219 = vmatpush1.msra.mxu0 %v2195
    %2220 = vmatprep.subr.mxu0 0.0
    %2221 = vmatpush1.msra.mxu0 %v2194
    %2222 = vmatprep.subr.mxu0 0.0
    %2223 = vmatpush1.msra.mxu0 %v2193
    %2224 = vmatprep.subr.mxu0 0.0
    %2225 = vmatpush1.msra.mxu0 %v2192
    %2226 = vmatprep.subr.mxu0 0.0
    %2227 = vmatpush1.msra.mxu0 %v2191
    %2228 = vmatprep.subr.mxu0 0.0
    %2229 = vmatpush1.msra.mxu0 %v2190
    %2230 = vmatprep.subr.mxu0 0.0
    %2231 = vmatpush1.msra.mxu0 %v2189
    %2232 = vmatprep.subr.mxu0 0.0
    %2233 = vmatpush1.msra.mxu0 %v2188
    %2234 = vmatprep.subr.mxu0 0.0
    %2235 = vmatpush2.msra.mxu0 0.0
    %2236 = vmatprep.subr.mxu0 0.0
    %2237 = vmatpush2.msra.mxu0 0.0
    %2238 = vmatprep.subr.mxu0 0.0
    %2239 = vmatpush2.msra.mxu0 0.0
    %2240 = vmatprep.subr.mxu0 0.0
    %2241 = vmatpush2.msra.mxu0 0.0
    %2242 = vmatprep.subr.mxu0 0.0
    %2243 = vmatpush2.msra.mxu0 0.0
    %2244 = vmatprep.subr.mxu0 0.0
    %2245 = vmatpush2.msra.mxu0 0.0
    %2246 = vmatprep.subr.mxu0 0.0
    %2247 = vmatpush2.msra.mxu0 0.0
    %2248 = vmatprep.subr.mxu0 0.0
    %2249 = vmatpush2.msra.mxu0 0.0
    %2250 = vmatprep.subr.mxu0 0.0
    %2251 = vmatpush2.msra.mxu0 0.0
    %2252 = vmatprep.subr.mxu0 0.0
    %2253 = vmatpush2.msra.mxu0 0.0
    %2254 = vmatprep.subr.mxu0 0.0
    %2255 = vmatpush2.msra.mxu0 0.0
    %2256 = vmatprep.subr.mxu0 0.0
    %2257 = vmatpush2.msra.mxu0 0.0
    %2258 = vmatprep.subr.mxu0 0.0
    %2259 = vmatpush2.msra.mxu0 0.0
    %2260 = vmatprep.subr.mxu0 0.0
    %2261 = vmatpush2.msra.mxu0 0.0
    %2262 = vmatprep.subr.mxu0 0.0
    %2263 = vmatpush2.msra.mxu0 0.0
    %2264 = vmatprep.subr.mxu0 0.0
    %2265 = vmatpush2.msra.mxu0 0.0
    %2266 = vmatprep.mubr.f32.mxu0 0.0
    %2267 = vmatmul.mubr.f32.gmra.mxu0 %v2197
    %v2268 = vpop.f32.mrf.mxu0
    %v2269 = vadd.f32 0.0, %v2268
    %v2270 = vpop.f32.mrf.mxu0
    %2271 = vmatprep.mubr.f32.mxu0 0.0
    %2272 = vmatmul.mubr.f32.gmra.mxu0 %v2200
    %v2273 = vpop.f32.mrf.mxu0
    %v2274 = vadd.f32 0.0, %v2273
    %v2275 = vpop.f32.mrf.mxu0
    %2276 = vdwg.mxu0
    %s2277 = scalar_lea.vmem [#allocation7], 768
    %v2278 = vld [vmem:[%s2277] sm:$0xff]
    %v2279 = vld [vmem:[%s2277 + $0x8] sm:$0xff]
    %v2280 = vld [vmem:[%s2277 + $0x10] sm:$0xff]
    %v2281 = vld [vmem:[%s2277 + $0x18] sm:$0xff]
    %v2282 = vld [vmem:[%s2277 + $0x20] sm:$0xff]
    %v2283 = vld [vmem:[%s2277 + $0x28] sm:$0xff]
    %v2284 = vld [vmem:[%s2277 + $0x30] sm:$0xff]
    %v2285 = vld [vmem:[%s2277 + $0x38] sm:$0xff]
    %v2286 = vld [vmem:[%s2277 + $0x40] sm:$0xff]
    %v2287 = vld [vmem:[%s2277 + $0x48] sm:$0xff]
    %v2288 = vld [vmem:[%s2277 + $0x50] sm:$0xff]
    %v2289 = vld [vmem:[%s2277 + $0x58] sm:$0xff]
    %v2290 = vld [vmem:[%s2277 + $0x60] sm:$0xff]
    %v2291 = vld [vmem:[%s2277 + $0x68] sm:$0xff]
    %v2292 = vld [vmem:[%s2277 + $0x70] sm:$0xff]
    %v2293 = vld [vmem:[%s2277 + $0x78] sm:$0xff]
    %v2294 = vld [vmem:[%s2277 + $0x80] sm:$0xff]
    %v2295 = vld [vmem:[%s2277 + $0x88] sm:$0xff]
    %v2296 = vld [vmem:[%s2277 + $0x90] sm:$0xff]
    %v2297 = vld [vmem:[%s2277 + $0x98] sm:$0xff]
    %v2298 = vld [vmem:[%s2277 + $0xa0] sm:$0xff]
    %v2299 = vld [vmem:[%s2277 + $0xa8] sm:$0xff]
    %v2300 = vld [vmem:[%s2277 + $0xb0] sm:$0xff]
    %v2301 = vld [vmem:[%s2277 + $0xb8] sm:$0xff]
    %v2302 = vld [vmem:[%s2277 + $0xc0] sm:$0xff]
    %v2303 = vld [vmem:[%s2277 + $0xc8] sm:$0xff]
    %v2304 = vld [vmem:[%s2277 + $0xd0] sm:$0xff]
    %v2305 = vld [vmem:[%s2277 + $0xd8] sm:$0xff]
    %v2306 = vld [vmem:[%s2277 + $0xe0] sm:$0xff]
    %v2307 = vld [vmem:[%s2277 + $0xe8] sm:$0xff]
    %v2308 = vld [vmem:[%s2277 + $0xf0] sm:$0xff]
    %v2309 = vld [vmem:[%s2277 + $0xf8] sm:$0xff]
    %2310 = vmatprep.subr.mxu0 %v2309
    %2311 = vmatpush1.msra.mxu0 %v2308
    %2312 = vmatprep.subr.mxu0 %v2307
    %2313 = vmatpush1.msra.mxu0 %v2306
    %2314 = vmatprep.subr.mxu0 %v2305
    %2315 = vmatpush1.msra.mxu0 %v2304
    %2316 = vmatprep.subr.mxu0 %v2303
    %2317 = vmatpush1.msra.mxu0 %v2302
    %2318 = vmatprep.subr.mxu0 %v2301
    %2319 = vmatpush1.msra.mxu0 %v2300
    %2320 = vmatprep.subr.mxu0 %v2299
    %2321 = vmatpush1.msra.mxu0 %v2298
    %2322 = vmatprep.subr.mxu0 %v2297
    %2323 = vmatpush1.msra.mxu0 %v2296
    %2324 = vmatprep.subr.mxu0 %v2295
    %2325 = vmatpush1.msra.mxu0 %v2294
    %2326 = vmatprep.subr.mxu0 %v2293
    %2327 = vmatpush1.msra.mxu0 %v2292
    %2328 = vmatprep.subr.mxu0 %v2291
    %2329 = vmatpush1.msra.mxu0 %v2290
    %2330 = vmatprep.subr.mxu0 %v2289
    %2331 = vmatpush1.msra.mxu0 %v2288
    %2332 = vmatprep.subr.mxu0 %v2287
    %2333 = vmatpush1.msra.mxu0 %v2286
    %2334 = vmatprep.subr.mxu0 %v2285
    %2335 = vmatpush1.msra.mxu0 %v2284
    %2336 = vmatprep.subr.mxu0 %v2283
    %2337 = vmatpush1.msra.mxu0 %v2282
    %2338 = vmatprep.subr.mxu0 %v2281
    %2339 = vmatpush1.msra.mxu0 %v2280
    %2340 = vmatprep.subr.mxu0 %v2279
    %2341 = vmatpush1.msra.mxu0 %v2278
    %2342 = vmatprep.subr.mxu0 0.0
    %2343 = vmatpush2.msra.mxu0 0.0
    %2344 = vmatprep.subr.mxu0 0.0
    %2345 = vmatpush2.msra.mxu0 0.0
    %2346 = vmatprep.subr.mxu0 0.0
    %2347 = vmatpush2.msra.mxu0 0.0
    %2348 = vmatprep.subr.mxu0 0.0
    %2349 = vmatpush2.msra.mxu0 0.0
    %2350 = vmatprep.subr.mxu0 0.0
    %2351 = vmatpush2.msra.mxu0 0.0
    %2352 = vmatprep.subr.mxu0 0.0
    %2353 = vmatpush2.msra.mxu0 0.0
    %2354 = vmatprep.subr.mxu0 0.0
    %2355 = vmatpush2.msra.mxu0 0.0
    %2356 = vmatprep.subr.mxu0 0.0
    %2357 = vmatpush2.msra.mxu0 0.0
    %2358 = vmatprep.subr.mxu0 0.0
    %2359 = vmatpush2.msra.mxu0 0.0
    %2360 = vmatprep.subr.mxu0 0.0
    %2361 = vmatpush2.msra.mxu0 0.0
    %2362 = vmatprep.subr.mxu0 0.0
    %2363 = vmatpush2.msra.mxu0 0.0
    %2364 = vmatprep.subr.mxu0 0.0
    %2365 = vmatpush2.msra.mxu0 0.0
    %2366 = vmatprep.subr.mxu0 0.0
    %2367 = vmatpush2.msra.mxu0 0.0
    %2368 = vmatprep.subr.mxu0 0.0
    %2369 = vmatpush2.msra.mxu0 0.0
    %2370 = vmatprep.subr.mxu0 0.0
    %2371 = vmatpush2.msra.mxu0 0.0
    %2372 = vmatprep.subr.mxu0 0.0
    %2373 = vmatpush2.msra.mxu0 0.0
    %2374 = vmatprep.mubr.f32.mxu0 0.0
    %2375 = vmatmul.mubr.f32.gmra.mxu0 %v2269
    %v2376 = vpop.f32.mrf.mxu0
    %v2377 = vadd.f32 0.0, %v2376
    %v2378 = vpop.f32.mrf.mxu0
    %v2379 = vadd.f32 0.0, %v2378
    %2380 = vmatprep.mubr.f32.mxu0 0.0
    %2381 = vmatmul.mubr.f32.gmra.mxu0 %v2274
    %v2382 = vpop.f32.mrf.mxu0
    %v2383 = vadd.f32 0.0, %v2382
    %v2384 = vpop.f32.mrf.mxu0
    %v2385 = vadd.f32 0.0, %v2384
    %2386 = vdwg.mxu0
    %s2387 = scalar_lea.vmem [#allocation8], 3072
    %v2388 = vld [vmem:[%s2387] sm:$0xff]
    %v2389 = vld [vmem:[%s2387 + $0x8] sm:$0xff]
    %v2390 = vld [vmem:[%s2387 + $0x10] sm:$0xff]
    %v2391 = vld [vmem:[%s2387 + $0x18] sm:$0xff]
    %v2392 = vld [vmem:[%s2387 + $0x20] sm:$0xff]
    %v2393 = vld [vmem:[%s2387 + $0x28] sm:$0xff]
    %v2394 = vld [vmem:[%s2387 + $0x30] sm:$0xff]
    %v2395 = vld [vmem:[%s2387 + $0x38] sm:$0xff]
    %v2396 = vld [vmem:[%s2387 + $0x40] sm:$0xff]
    %v2397 = vld [vmem:[%s2387 + $0x48] sm:$0xff]
    %v2398 = vld [vmem:[%s2387 + $0x50] sm:$0xff]
    %v2399 = vld [vmem:[%s2387 + $0x58] sm:$0xff]
    %v2400 = vld [vmem:[%s2387 + $0x60] sm:$0xff]
    %v2401 = vld [vmem:[%s2387 + $0x68] sm:$0xff]
    %v2402 = vld [vmem:[%s2387 + $0x70] sm:$0xff]
    %v2403 = vld [vmem:[%s2387 + $0x78] sm:$0xff]
    %v2404 = vld [vmem:[%s2387 + $0x80] sm:$0xff]
    %v2405 = vld [vmem:[%s2387 + $0x88] sm:$0xff]
    %v2406 = vld [vmem:[%s2387 + $0x90] sm:$0xff]
    %v2407 = vld [vmem:[%s2387 + $0x98] sm:$0xff]
    %v2408 = vld [vmem:[%s2387 + $0xa0] sm:$0xff]
    %v2409 = vld [vmem:[%s2387 + $0xa8] sm:$0xff]
    %v2410 = vld [vmem:[%s2387 + $0xb0] sm:$0xff]
    %v2411 = vld [vmem:[%s2387 + $0xb8] sm:$0xff]
    %v2412 = vld [vmem:[%s2387 + $0xc0] sm:$0xff]
    %v2413 = vld [vmem:[%s2387 + $0xc8] sm:$0xff]
    %v2414 = vld [vmem:[%s2387 + $0xd0] sm:$0xff]
    %v2415 = vld [vmem:[%s2387 + $0xd8] sm:$0xff]
    %v2416 = vld [vmem:[%s2387 + $0xe0] sm:$0xff]
    %v2417 = vld [vmem:[%s2387 + $0xe8] sm:$0xff]
    %v2418 = vld [vmem:[%s2387 + $0xf0] sm:$0xff]
    %v2419 = vld [vmem:[%s2387 + $0xf8] sm:$0xff]
    %v2420 = vld [vmem:[%s2387 + $0x100] sm:$0xff]
    %v2421 = vld [vmem:[%s2387 + $0x108] sm:$0xff]
    %v2422 = vld [vmem:[%s2387 + $0x110] sm:$0xff]
    %v2423 = vld [vmem:[%s2387 + $0x118] sm:$0xff]
    %v2424 = vld [vmem:[%s2387 + $0x120] sm:$0xff]
    %v2425 = vld [vmem:[%s2387 + $0x128] sm:$0xff]
    %v2426 = vld [vmem:[%s2387 + $0x130] sm:$0xff]
    %v2427 = vld [vmem:[%s2387 + $0x138] sm:$0xff]
    %v2428 = vld [vmem:[%s2387 + $0x140] sm:$0xff]
    %v2429 = vld [vmem:[%s2387 + $0x148] sm:$0xff]
    %v2430 = vld [vmem:[%s2387 + $0x150] sm:$0xff]
    %v2431 = vld [vmem:[%s2387 + $0x158] sm:$0xff]
    %v2432 = vld [vmem:[%s2387 + $0x160] sm:$0xff]
    %v2433 = vld [vmem:[%s2387 + $0x168] sm:$0xff]
    %v2434 = vld [vmem:[%s2387 + $0x170] sm:$0xff]
    %v2435 = vld [vmem:[%s2387 + $0x178] sm:$0xff]
    %v2436 = vld [vmem:[%s2387 + $0x180] sm:$0xff]
    %v2437 = vld [vmem:[%s2387 + $0x188] sm:$0xff]
    %v2438 = vld [vmem:[%s2387 + $0x190] sm:$0xff]
    %v2439 = vld [vmem:[%s2387 + $0x198] sm:$0xff]
    %v2440 = vld [vmem:[%s2387 + $0x1a0] sm:$0xff]
    %v2441 = vld [vmem:[%s2387 + $0x1a8] sm:$0xff]
    %v2442 = vld [vmem:[%s2387 + $0x1b0] sm:$0xff]
    %v2443 = vld [vmem:[%s2387 + $0x1b8] sm:$0xff]
    %v2444 = vld [vmem:[%s2387 + $0x1c0] sm:$0xff]
    %v2445 = vld [vmem:[%s2387 + $0x1c8] sm:$0xff]
    %v2446 = vld [vmem:[%s2387 + $0x1d0] sm:$0xff]
    %v2447 = vld [vmem:[%s2387 + $0x1d8] sm:$0xff]
    %v2448 = vld [vmem:[%s2387 + $0x1e0] sm:$0xff]
    %v2449 = vld [vmem:[%s2387 + $0x1e8] sm:$0xff]
    %v2450 = vld [vmem:[%s2387 + $0x1f0] sm:$0xff]
    %v2451 = vld [vmem:[%s2387 + $0x1f8] sm:$0xff]
    %v2452 = vld [vmem:[%s2387 + $0x200] sm:$0xff]
    %v2453 = vld [vmem:[%s2387 + $0x208] sm:$0xff]
    %v2454 = vld [vmem:[%s2387 + $0x210] sm:$0xff]
    %v2455 = vld [vmem:[%s2387 + $0x218] sm:$0xff]
    %v2456 = vld [vmem:[%s2387 + $0x220] sm:$0xff]
    %v2457 = vld [vmem:[%s2387 + $0x228] sm:$0xff]
    %v2458 = vld [vmem:[%s2387 + $0x230] sm:$0xff]
    %v2459 = vld [vmem:[%s2387 + $0x238] sm:$0xff]
    %v2460 = vld [vmem:[%s2387 + $0x240] sm:$0xff]
    %v2461 = vld [vmem:[%s2387 + $0x248] sm:$0xff]
    %v2462 = vld [vmem:[%s2387 + $0x250] sm:$0xff]
    %v2463 = vld [vmem:[%s2387 + $0x258] sm:$0xff]
    %v2464 = vld [vmem:[%s2387 + $0x260] sm:$0xff]
    %v2465 = vld [vmem:[%s2387 + $0x268] sm:$0xff]
    %v2466 = vld [vmem:[%s2387 + $0x270] sm:$0xff]
    %v2467 = vld [vmem:[%s2387 + $0x278] sm:$0xff]
    %v2468 = vld [vmem:[%s2387 + $0x280] sm:$0xff]
    %v2469 = vld [vmem:[%s2387 + $0x288] sm:$0xff]
    %v2470 = vld [vmem:[%s2387 + $0x290] sm:$0xff]
    %v2471 = vld [vmem:[%s2387 + $0x298] sm:$0xff]
    %v2472 = vld [vmem:[%s2387 + $0x2a0] sm:$0xff]
    %v2473 = vld [vmem:[%s2387 + $0x2a8] sm:$0xff]
    %v2474 = vld [vmem:[%s2387 + $0x2b0] sm:$0xff]
    %v2475 = vld [vmem:[%s2387 + $0x2b8] sm:$0xff]
    %v2476 = vld [vmem:[%s2387 + $0x2c0] sm:$0xff]
    %v2477 = vld [vmem:[%s2387 + $0x2c8] sm:$0xff]
    %v2478 = vld [vmem:[%s2387 + $0x2d0] sm:$0xff]
    %v2479 = vld [vmem:[%s2387 + $0x2d8] sm:$0xff]
    %v2480 = vld [vmem:[%s2387 + $0x2e0] sm:$0xff]
    %v2481 = vld [vmem:[%s2387 + $0x2e8] sm:$0xff]
    %v2482 = vld [vmem:[%s2387 + $0x2f0] sm:$0xff]
    %v2483 = vld [vmem:[%s2387 + $0x2f8] sm:$0xff]
    %v2484 = vld [vmem:[%s2387 + $0x300] sm:$0xff]
    %v2485 = vld [vmem:[%s2387 + $0x308] sm:$0xff]
    %v2486 = vld [vmem:[%s2387 + $0x310] sm:$0xff]
    %v2487 = vld [vmem:[%s2387 + $0x318] sm:$0xff]
    %v2488 = vld [vmem:[%s2387 + $0x320] sm:$0xff]
    %v2489 = vld [vmem:[%s2387 + $0x328] sm:$0xff]
    %v2490 = vld [vmem:[%s2387 + $0x330] sm:$0xff]
    %v2491 = vld [vmem:[%s2387 + $0x338] sm:$0xff]
    %v2492 = vld [vmem:[%s2387 + $0x340] sm:$0xff]
    %v2493 = vld [vmem:[%s2387 + $0x348] sm:$0xff]
    %v2494 = vld [vmem:[%s2387 + $0x350] sm:$0xff]
    %v2495 = vld [vmem:[%s2387 + $0x358] sm:$0xff]
    %v2496 = vld [vmem:[%s2387 + $0x360] sm:$0xff]
    %v2497 = vld [vmem:[%s2387 + $0x368] sm:$0xff]
    %v2498 = vld [vmem:[%s2387 + $0x370] sm:$0xff]
    %v2499 = vld [vmem:[%s2387 + $0x378] sm:$0xff]
    %v2500 = vld [vmem:[%s2387 + $0x380] sm:$0xff]
    %v2501 = vld [vmem:[%s2387 + $0x388] sm:$0xff]
    %v2502 = vld [vmem:[%s2387 + $0x390] sm:$0xff]
    %v2503 = vld [vmem:[%s2387 + $0x398] sm:$0xff]
    %v2504 = vld [vmem:[%s2387 + $0x3a0] sm:$0xff]
    %v2505 = vld [vmem:[%s2387 + $0x3a8] sm:$0xff]
    %v2506 = vld [vmem:[%s2387 + $0x3b0] sm:$0xff]
    %v2507 = vld [vmem:[%s2387 + $0x3b8] sm:$0xff]
    %v2508 = vld [vmem:[%s2387 + $0x3c0] sm:$0xff]
    %v2509 = vld [vmem:[%s2387 + $0x3c8] sm:$0xff]
    %v2510 = vld [vmem:[%s2387 + $0x3d0] sm:$0xff]
    %v2511 = vld [vmem:[%s2387 + $0x3d8] sm:$0xff]
    %v2512 = vld [vmem:[%s2387 + $0x3e0] sm:$0xff]
    %v2513 = vld [vmem:[%s2387 + $0x3e8] sm:$0xff]
    %v2514 = vld [vmem:[%s2387 + $0x3f0] sm:$0xff]
    %v2515 = vld [vmem:[%s2387 + $0x3f8] sm:$0xff]
    %2516 = vmatprep.subr.mxu0 %v2449
    %2517 = vmatpush1.msra.mxu0 %v2448
    %2518 = vmatprep.subr.mxu0 %v2445
    %2519 = vmatpush1.msra.mxu0 %v2444
    %2520 = vmatprep.subr.mxu0 %v2441
    %2521 = vmatpush1.msra.mxu0 %v2440
    %2522 = vmatprep.subr.mxu0 %v2437
    %2523 = vmatpush1.msra.mxu0 %v2436
    %2524 = vmatprep.subr.mxu0 %v2433
    %2525 = vmatpush1.msra.mxu0 %v2432
    %2526 = vmatprep.subr.mxu0 %v2429
    %2527 = vmatpush1.msra.mxu0 %v2428
    %2528 = vmatprep.subr.mxu0 %v2425
    %2529 = vmatpush1.msra.mxu0 %v2424
    %2530 = vmatprep.subr.mxu0 %v2421
    %2531 = vmatpush1.msra.mxu0 %v2420
    %2532 = vmatprep.subr.mxu0 %v2417
    %2533 = vmatpush1.msra.mxu0 %v2416
    %2534 = vmatprep.subr.mxu0 %v2413
    %2535 = vmatpush1.msra.mxu0 %v2412
    %2536 = vmatprep.subr.mxu0 %v2409
    %2537 = vmatpush1.msra.mxu0 %v2408
    %2538 = vmatprep.subr.mxu0 %v2405
    %2539 = vmatpush1.msra.mxu0 %v2404
    %2540 = vmatprep.subr.mxu0 %v2401
    %2541 = vmatpush1.msra.mxu0 %v2400
    %2542 = vmatprep.subr.mxu0 %v2397
    %2543 = vmatpush1.msra.mxu0 %v2396
    %2544 = vmatprep.subr.mxu0 %v2393
    %2545 = vmatpush1.msra.mxu0 %v2392
    %2546 = vmatprep.subr.mxu0 %v2389
    %2547 = vmatpush1.msra.mxu0 %v2388
    %2548 = vmatprep.subr.mxu0 %v2513
    %2549 = vmatpush2.msra.mxu0 %v2512
    %2550 = vmatprep.subr.mxu0 %v2509
    %2551 = vmatpush2.msra.mxu0 %v2508
    %2552 = vmatprep.subr.mxu0 %v2505
    %2553 = vmatpush2.msra.mxu0 %v2504
    %2554 = vmatprep.subr.mxu0 %v2501
    %2555 = vmatpush2.msra.mxu0 %v2500
    %2556 = vmatprep.subr.mxu0 %v2497
    %2557 = vmatpush2.msra.mxu0 %v2496
    %2558 = vmatprep.subr.mxu0 %v2493
    %2559 = vmatpush2.msra.mxu0 %v2492
    %2560 = vmatprep.subr.mxu0 %v2489
    %2561 = vmatpush2.msra.mxu0 %v2488
    %2562 = vmatprep.subr.mxu0 %v2485
    %2563 = vmatpush2.msra.mxu0 %v2484
    %2564 = vmatprep.subr.mxu0 %v2481
    %2565 = vmatpush2.msra.mxu0 %v2480
    %2566 = vmatprep.subr.mxu0 %v2477
    %2567 = vmatpush2.msra.mxu0 %v2476
    %2568 = vmatprep.subr.mxu0 %v2473
    %2569 = vmatpush2.msra.mxu0 %v2472
    %2570 = vmatprep.subr.mxu0 %v2469
    %2571 = vmatpush2.msra.mxu0 %v2468
    %2572 = vmatprep.subr.mxu0 %v2465
    %2573 = vmatpush2.msra.mxu0 %v2464
    %2574 = vmatprep.subr.mxu0 %v2461
    %2575 = vmatpush2.msra.mxu0 %v2460
    %2576 = vmatprep.subr.mxu0 %v2457
    %2577 = vmatpush2.msra.mxu0 %v2456
    %2578 = vmatprep.subr.mxu0 %v2453
    %2579 = vmatpush2.msra.mxu0 %v2452
    %2580 = vmatprep.mubr.f32.mxu0 %v2379
    %2581 = vmatmul.mubr.f32.gmra.mxu0 %v2377
    %v2582 = vpop.f32.mrf.mxu0
    %v2583 = vadd.f32 0.0, %v2582
    %v2584 = vpop.f32.mrf.mxu0
    %v2585 = vadd.f32 0.0, %v2584
    %2586 = vmatprep.mubr.f32.mxu0 %v2385
    %2587 = vmatmul.mubr.f32.gmra.mxu0 %v2383
    %v2588 = vpop.f32.mrf.mxu0
    %v2589 = vadd.f32 0.0, %v2588
    %v2590 = vpop.f32.mrf.mxu0
    %v2591 = vadd.f32 0.0, %v2590
    %2592 = vdwg.mxu0
    %2593 = vmatprep.subr.mxu0 %v2451
    %2594 = vmatpush1.msra.mxu0 %v2450
    %2595 = vmatprep.subr.mxu0 %v2447
    %2596 = vmatpush1.msra.mxu0 %v2446
    %2597 = vmatprep.subr.mxu0 %v2443
    %2598 = vmatpush1.msra.mxu0 %v2442
    %2599 = vmatprep.subr.mxu0 %v2439
    %2600 = vmatpush1.msra.mxu0 %v2438
    %2601 = vmatprep.subr.mxu0 %v2435
    %2602 = vmatpush1.msra.mxu0 %v2434
    %2603 = vmatprep.subr.mxu0 %v2431
    %2604 = vmatpush1.msra.mxu0 %v2430
    %2605 = vmatprep.subr.mxu0 %v2427
    %2606 = vmatpush1.msra.mxu0 %v2426
    %2607 = vmatprep.subr.mxu0 %v2423
    %2608 = vmatpush1.msra.mxu0 %v2422
    %2609 = vmatprep.subr.mxu0 %v2419
    %2610 = vmatpush1.msra.mxu0 %v2418
    %2611 = vmatprep.subr.mxu0 %v2415
    %2612 = vmatpush1.msra.mxu0 %v2414
    %2613 = vmatprep.subr.mxu0 %v2411
    %2614 = vmatpush1.msra.mxu0 %v2410
    %2615 = vmatprep.subr.mxu0 %v2407
    %2616 = vmatpush1.msra.mxu0 %v2406
    %2617 = vmatprep.subr.mxu0 %v2403
    %2618 = vmatpush1.msra.mxu0 %v2402
    %2619 = vmatprep.subr.mxu0 %v2399
    %2620 = vmatpush1.msra.mxu0 %v2398
    %2621 = vmatprep.subr.mxu0 %v2395
    %2622 = vmatpush1.msra.mxu0 %v2394
    %2623 = vmatprep.subr.mxu0 %v2391
    %2624 = vmatpush1.msra.mxu0 %v2390
    %2625 = vmatprep.subr.mxu0 %v2515
    %2626 = vmatpush2.msra.mxu0 %v2514
    %2627 = vmatprep.subr.mxu0 %v2511
    %2628 = vmatpush2.msra.mxu0 %v2510
    %2629 = vmatprep.subr.mxu0 %v2507
    %2630 = vmatpush2.msra.mxu0 %v2506
    %2631 = vmatprep.subr.mxu0 %v2503
    %2632 = vmatpush2.msra.mxu0 %v2502
    %2633 = vmatprep.subr.mxu0 %v2499
    %2634 = vmatpush2.msra.mxu0 %v2498
    %2635 = vmatprep.subr.mxu0 %v2495
    %2636 = vmatpush2.msra.mxu0 %v2494
    %2637 = vmatprep.subr.mxu0 %v2491
    %2638 = vmatpush2.msra.mxu0 %v2490
    %2639 = vmatprep.subr.mxu0 %v2487
    %2640 = vmatpush2.msra.mxu0 %v2486
    %2641 = vmatprep.subr.mxu0 %v2483
    %2642 = vmatpush2.msra.mxu0 %v2482
    %2643 = vmatprep.subr.mxu0 %v2479
    %2644 = vmatpush2.msra.mxu0 %v2478
    %2645 = vmatprep.subr.mxu0 %v2475
    %2646 = vmatpush2.msra.mxu0 %v2474
    %2647 = vmatprep.subr.mxu0 %v2471
    %2648 = vmatpush2.msra.mxu0 %v2470
    %2649 = vmatprep.subr.mxu0 %v2467
    %2650 = vmatpush2.msra.mxu0 %v2466
    %2651 = vmatprep.subr.mxu0 %v2463
    %2652 = vmatpush2.msra.mxu0 %v2462
    %2653 = vmatprep.subr.mxu0 %v2459
    %2654 = vmatpush2.msra.mxu0 %v2458
    %2655 = vmatprep.subr.mxu0 %v2455
    %2656 = vmatpush2.msra.mxu0 %v2454
    %2657 = vmatprep.mubr.f32.mxu0 %v2379
    %2658 = vmatmul.mubr.f32.gmra.mxu0 %v2377
    %v2659 = vpop.f32.mrf.mxu0
    %v2660 = vadd.f32 0.0, %v2659
    %v2661 = vpop.f32.mrf.mxu0
    %v2662 = vadd.f32 0.0, %v2661
    %2663 = vmatprep.mubr.f32.mxu0 %v2385
    %2664 = vmatmul.mubr.f32.gmra.mxu0 %v2383
    %v2665 = vpop.f32.mrf.mxu0
    %v2666 = vadd.f32 0.0, %v2665
    %v2667 = vpop.f32.mrf.mxu0
    %v2668 = vadd.f32 0.0, %v2667
    %2669 = vdwg.mxu0
    %s2670 = scalar_lea.vmem %s4, 1536
    %v2671 = vld [vmem:[%s2670] sm:$0xff]
    %v2672 = vld [vmem:[%s2670 + $0x8] sm:$0xff]
    %v2673 = vld [vmem:[%s2670 + $0x10] sm:$0xff]
    %v2674 = vld [vmem:[%s2670 + $0x18] sm:$0xff]
    %v2675 = vld [vmem:[%s2670 + $0x20] sm:$0xff]
    %v2676 = vld [vmem:[%s2670 + $0x28] sm:$0xff]
    %v2677 = vld [vmem:[%s2670 + $0x30] sm:$0xff]
    %v2678 = vld [vmem:[%s2670 + $0x38] sm:$0xff]
    %v2679 = vld [vmem:[%s2670 + $0x40] sm:$0xff]
    %v2680 = vld [vmem:[%s2670 + $0x48] sm:$0xff]
    %v2681 = vld [vmem:[%s2670 + $0x50] sm:$0xff]
    %v2682 = vld [vmem:[%s2670 + $0x58] sm:$0xff]
    %v2683 = vld [vmem:[%s2670 + $0x60] sm:$0xff]
    %v2684 = vld [vmem:[%s2670 + $0x68] sm:$0xff]
    %v2685 = vld [vmem:[%s2670 + $0x70] sm:$0xff]
    %v2686 = vld [vmem:[%s2670 + $0x78] sm:$0xff]
    %v2687 = vld [vmem:[%s2670 + $0x80] sm:$0xff]
    %v2688 = vld [vmem:[%s2670 + $0x88] sm:$0xff]
    %v2689 = vld [vmem:[%s2670 + $0x90] sm:$0xff]
    %v2690 = vld [vmem:[%s2670 + $0x98] sm:$0xff]
    %v2691 = vld [vmem:[%s2670 + $0xa0] sm:$0xff]
    %v2692 = vld [vmem:[%s2670 + $0xa8] sm:$0xff]
    %v2693 = vld [vmem:[%s2670 + $0xb0] sm:$0xff]
    %v2694 = vld [vmem:[%s2670 + $0xb8] sm:$0xff]
    %v2695 = vld [vmem:[%s2670 + $0xc0] sm:$0xff]
    %v2696 = vld [vmem:[%s2670 + $0xc8] sm:$0xff]
    %v2697 = vld [vmem:[%s2670 + $0xd0] sm:$0xff]
    %v2698 = vld [vmem:[%s2670 + $0xd8] sm:$0xff]
    %v2699 = vld [vmem:[%s2670 + $0xe0] sm:$0xff]
    %v2700 = vld [vmem:[%s2670 + $0xe8] sm:$0xff]
    %v2701 = vld [vmem:[%s2670 + $0xf0] sm:$0xff]
    %v2702 = vld [vmem:[%s2670 + $0xf8] sm:$0xff]
    %v2703 = vld [vmem:[%s2670 + $0x100] sm:$0xff]
    %v2704 = vld [vmem:[%s2670 + $0x108] sm:$0xff]
    %v2705 = vld [vmem:[%s2670 + $0x110] sm:$0xff]
    %v2706 = vld [vmem:[%s2670 + $0x118] sm:$0xff]
    %v2707 = vld [vmem:[%s2670 + $0x120] sm:$0xff]
    %v2708 = vld [vmem:[%s2670 + $0x128] sm:$0xff]
    %v2709 = vld [vmem:[%s2670 + $0x130] sm:$0xff]
    %v2710 = vld [vmem:[%s2670 + $0x138] sm:$0xff]
    %v2711 = vld [vmem:[%s2670 + $0x140] sm:$0xff]
    %v2712 = vld [vmem:[%s2670 + $0x148] sm:$0xff]
    %v2713 = vld [vmem:[%s2670 + $0x150] sm:$0xff]
    %v2714 = vld [vmem:[%s2670 + $0x158] sm:$0xff]
    %v2715 = vld [vmem:[%s2670 + $0x160] sm:$0xff]
    %v2716 = vld [vmem:[%s2670 + $0x168] sm:$0xff]
    %v2717 = vld [vmem:[%s2670 + $0x170] sm:$0xff]
    %v2718 = vld [vmem:[%s2670 + $0x178] sm:$0xff]
    %v2719 = vld [vmem:[%s2670 + $0x180] sm:$0xff]
    %v2720 = vld [vmem:[%s2670 + $0x188] sm:$0xff]
    %v2721 = vld [vmem:[%s2670 + $0x190] sm:$0xff]
    %v2722 = vld [vmem:[%s2670 + $0x198] sm:$0xff]
    %v2723 = vld [vmem:[%s2670 + $0x1a0] sm:$0xff]
    %v2724 = vld [vmem:[%s2670 + $0x1a8] sm:$0xff]
    %v2725 = vld [vmem:[%s2670 + $0x1b0] sm:$0xff]
    %v2726 = vld [vmem:[%s2670 + $0x1b8] sm:$0xff]
    %v2727 = vld [vmem:[%s2670 + $0x1c0] sm:$0xff]
    %v2728 = vld [vmem:[%s2670 + $0x1c8] sm:$0xff]
    %v2729 = vld [vmem:[%s2670 + $0x1d0] sm:$0xff]
    %v2730 = vld [vmem:[%s2670 + $0x1d8] sm:$0xff]
    %v2731 = vld [vmem:[%s2670 + $0x1e0] sm:$0xff]
    %v2732 = vld [vmem:[%s2670 + $0x1e8] sm:$0xff]
    %v2733 = vld [vmem:[%s2670 + $0x1f0] sm:$0xff]
    %v2734 = vld [vmem:[%s2670 + $0x1f8] sm:$0xff]
    %2735 = vmatprep.subr.mxu0 0.0
    %2736 = vmatpush1.msra.mxu0 %v2686
    %2737 = vmatprep.subr.mxu0 0.0
    %2738 = vmatpush1.msra.mxu0 %v2685
    %2739 = vmatprep.subr.mxu0 0.0
    %2740 = vmatpush1.msra.mxu0 %v2684
    %2741 = vmatprep.subr.mxu0 0.0
    %2742 = vmatpush1.msra.mxu0 %v2683
    %2743 = vmatprep.subr.mxu0 0.0
    %2744 = vmatpush1.msra.mxu0 %v2682
    %2745 = vmatprep.subr.mxu0 0.0
    %2746 = vmatpush1.msra.mxu0 %v2681
    %2747 = vmatprep.subr.mxu0 0.0
    %2748 = vmatpush1.msra.mxu0 %v2680
    %2749 = vmatprep.subr.mxu0 0.0
    %2750 = vmatpush1.msra.mxu0 %v2679
    %2751 = vmatprep.subr.mxu0 0.0
    %2752 = vmatpush1.msra.mxu0 %v2678
    %2753 = vmatprep.subr.mxu0 0.0
    %2754 = vmatpush1.msra.mxu0 %v2677
    %2755 = vmatprep.subr.mxu0 0.0
    %2756 = vmatpush1.msra.mxu0 %v2676
    %2757 = vmatprep.subr.mxu0 0.0
    %2758 = vmatpush1.msra.mxu0 %v2675
    %2759 = vmatprep.subr.mxu0 0.0
    %2760 = vmatpush1.msra.mxu0 %v2674
    %2761 = vmatprep.subr.mxu0 0.0
    %2762 = vmatpush1.msra.mxu0 %v2673
    %2763 = vmatprep.subr.mxu0 0.0
    %2764 = vmatpush1.msra.mxu0 %v2672
    %2765 = vmatprep.subr.mxu0 0.0
    %2766 = vmatpush1.msra.mxu0 %v2671
    %2767 = vmatprep.subr.mxu0 0.0
    %2768 = vmatpush2.msra.mxu0 %v2702
    %2769 = vmatprep.subr.mxu0 0.0
    %2770 = vmatpush2.msra.mxu0 %v2701
    %2771 = vmatprep.subr.mxu0 0.0
    %2772 = vmatpush2.msra.mxu0 %v2700
    %2773 = vmatprep.subr.mxu0 0.0
    %2774 = vmatpush2.msra.mxu0 %v2699
    %2775 = vmatprep.subr.mxu0 0.0
    %2776 = vmatpush2.msra.mxu0 %v2698
    %2777 = vmatprep.subr.mxu0 0.0
    %2778 = vmatpush2.msra.mxu0 %v2697
    %2779 = vmatprep.subr.mxu0 0.0
    %2780 = vmatpush2.msra.mxu0 %v2696
    %2781 = vmatprep.subr.mxu0 0.0
    %2782 = vmatpush2.msra.mxu0 %v2695
    %2783 = vmatprep.subr.mxu0 0.0
    %2784 = vmatpush2.msra.mxu0 %v2694
    %2785 = vmatprep.subr.mxu0 0.0
    %2786 = vmatpush2.msra.mxu0 %v2693
    %2787 = vmatprep.subr.mxu0 0.0
    %2788 = vmatpush2.msra.mxu0 %v2692
    %2789 = vmatprep.subr.mxu0 0.0
    %2790 = vmatpush2.msra.mxu0 %v2691
    %2791 = vmatprep.subr.mxu0 0.0
    %2792 = vmatpush2.msra.mxu0 %v2690
    %2793 = vmatprep.subr.mxu0 0.0
    %2794 = vmatpush2.msra.mxu0 %v2689
    %2795 = vmatprep.subr.mxu0 0.0
    %2796 = vmatpush2.msra.mxu0 %v2688
    %2797 = vmatprep.subr.mxu0 0.0
    %2798 = vmatpush2.msra.mxu0 %v2687
    %2799 = vmatprep.mubr.f32.mxu0 %v2585
    %2800 = vmatmul.mubr.f32.gmra.mxu0 %v2583
    %v2801 = vpop.f32.mrf.mxu0
    %v2802 = vadd.f32 0.0, %v2801
    %v2803 = vpop.f32.mrf.mxu0
    %2804 = vmatprep.mubr.f32.mxu0 %v2591
    %2805 = vmatmul.mubr.f32.gmra.mxu0 %v2589
    %v2806 = vpop.f32.mrf.mxu0
    %v2807 = vadd.f32 0.0, %v2806
    %v2808 = vpop.f32.mrf.mxu0
    %2809 = vdwg.mxu0
    %2810 = vmatprep.subr.mxu0 0.0
    %2811 = vmatpush1.msra.mxu0 %v2718
    %2812 = vmatprep.subr.mxu0 0.0
    %2813 = vmatpush1.msra.mxu0 %v2717
    %2814 = vmatprep.subr.mxu0 0.0
    %2815 = vmatpush1.msra.mxu0 %v2716
    %2816 = vmatprep.subr.mxu0 0.0
    %2817 = vmatpush1.msra.mxu0 %v2715
    %2818 = vmatprep.subr.mxu0 0.0
    %2819 = vmatpush1.msra.mxu0 %v2714
    %2820 = vmatprep.subr.mxu0 0.0
    %2821 = vmatpush1.msra.mxu0 %v2713
    %2822 = vmatprep.subr.mxu0 0.0
    %2823 = vmatpush1.msra.mxu0 %v2712
    %2824 = vmatprep.subr.mxu0 0.0
    %2825 = vmatpush1.msra.mxu0 %v2711
    %2826 = vmatprep.subr.mxu0 0.0
    %2827 = vmatpush1.msra.mxu0 %v2710
    %2828 = vmatprep.subr.mxu0 0.0
    %2829 = vmatpush1.msra.mxu0 %v2709
    %2830 = vmatprep.subr.mxu0 0.0
    %2831 = vmatpush1.msra.mxu0 %v2708
    %2832 = vmatprep.subr.mxu0 0.0
    %2833 = vmatpush1.msra.mxu0 %v2707
    %2834 = vmatprep.subr.mxu0 0.0
    %2835 = vmatpush1.msra.mxu0 %v2706
    %2836 = vmatprep.subr.mxu0 0.0
    %2837 = vmatpush1.msra.mxu0 %v2705
    %2838 = vmatprep.subr.mxu0 0.0
    %2839 = vmatpush1.msra.mxu0 %v2704
    %2840 = vmatprep.subr.mxu0 0.0
    %2841 = vmatpush1.msra.mxu0 %v2703
    %2842 = vmatprep.subr.mxu0 0.0
    %2843 = vmatpush2.msra.mxu0 %v2734
    %2844 = vmatprep.subr.mxu0 0.0
    %2845 = vmatpush2.msra.mxu0 %v2733
    %2846 = vmatprep.subr.mxu0 0.0
    %2847 = vmatpush2.msra.mxu0 %v2732
    %2848 = vmatprep.subr.mxu0 0.0
    %2849 = vmatpush2.msra.mxu0 %v2731
    %2850 = vmatprep.subr.mxu0 0.0
    %2851 = vmatpush2.msra.mxu0 %v2730
    %2852 = vmatprep.subr.mxu0 0.0
    %2853 = vmatpush2.msra.mxu0 %v2729
    %2854 = vmatprep.subr.mxu0 0.0
    %2855 = vmatpush2.msra.mxu0 %v2728
    %2856 = vmatprep.subr.mxu0 0.0
    %2857 = vmatpush2.msra.mxu0 %v2727
    %2858 = vmatprep.subr.mxu0 0.0
    %2859 = vmatpush2.msra.mxu0 %v2726
    %2860 = vmatprep.subr.mxu0 0.0
    %2861 = vmatpush2.msra.mxu0 %v2725
    %2862 = vmatprep.subr.mxu0 0.0
    %2863 = vmatpush2.msra.mxu0 %v2724
    %2864 = vmatprep.subr.mxu0 0.0
    %2865 = vmatpush2.msra.mxu0 %v2723
    %2866 = vmatprep.subr.mxu0 0.0
    %2867 = vmatpush2.msra.mxu0 %v2722
    %2868 = vmatprep.subr.mxu0 0.0
    %2869 = vmatpush2.msra.mxu0 %v2721
    %2870 = vmatprep.subr.mxu0 0.0
    %2871 = vmatpush2.msra.mxu0 %v2720
    %2872 = vmatprep.subr.mxu0 0.0
    %2873 = vmatpush2.msra.mxu0 %v2719
    %2874 = vmatprep.mubr.f32.mxu0 %v2662
    %2875 = vmatmul.mubr.f32.gmra.mxu0 %v2660
    %v2876 = vpop.f32.mrf.mxu0
    %v2877 = vadd.f32 %v2802, %v2876
    %v2878 = vpop.f32.mrf.mxu0
    %2879 = vmatprep.mubr.f32.mxu0 %v2668
    %2880 = vmatmul.mubr.f32.gmra.mxu0 %v2666
    %v2881 = vpop.f32.mrf.mxu0
    %v2882 = vadd.f32 %v2807, %v2881
    %v2883 = vpop.f32.mrf.mxu0
    %2884 = vdwg.mxu0
    %v2885 = vmax.f32 %v2877, 0.0
    %v2886 = vmax.f32 %v2882, 0.0
    %v2887 = vadd.f32 %v776, %v1479
    %v2888 = vadd.f32 %v777, %v1480
    %v2889 = vadd.f32 %v2887, %v2182
    %v2890 = vadd.f32 %v2888, %v2183
    %v2891 = vadd.f32 %v2889, %v2885
    %v2892 = vadd.f32 %v2890, %v2886
    %v2893 = vrcp.pop %v2891
    %v2894 = vmul.f32 1.0, %v2893
    %v2895 = vrcp.pop %v2892
    %v2896 = vmul.f32 1.0, %v2895
    %2899 = vrot.lane.b32.xlu0 %v1479, 32
    %v2900 = vpop.permute.xlu0 %2899
    %2901 = vrot.lane.b32.xlu0 %v1480, 32
    %v2902 = vpop.permute.xlu0 %2901
    %2907 = vrot.lane.b32.xlu0 %v2182, 64
    %v2908 = vpop.permute.xlu0 %2907
    %2909 = vrot.lane.b32.xlu0 %v2183, 64
    %v2910 = vpop.permute.xlu0 %2909
    %2915 = vrot.lane.b32.xlu0 %v2885, 96
    %v2916 = vpop.permute.xlu0 %2915
    %2917 = vrot.lane.b32.xlu0 %v2886, 96
    %v2918 = vpop.permute.xlu0 %2917
    %vm2921 = vcmask 261120
    %v2922 = vsel %vm2921, %v776, %v2900
    %v2923 = vsel %vm2921, %v777, %v2902
    %v2924 = vsel %vm89, %v2922, %v2908
    %v2925 = vsel %vm89, %v2923, %v2910
    %vm2926 = vcmask 785408
    %v2927 = vsel %vm2926, %v2924, %v2916
    %v2928 = vsel %vm2926, %v2925, %v2918
    %2929 = vst [vmem:[#allocation10] sm:$0xff] %v2927
    %2930 = vst [vmem:[#allocation10 + $0x8] sm:$0xff] %v2928
    %v2931 = vmul.f32 %v776, %v2894
    %v2932 = vmul.f32 %v777, %v2896
    %v2933 = vmul.f32 %v1479, %v2894
    %v2934 = vmul.f32 %v1480, %v2896
    %v2935 = vmul.f32 %v2182, %v2894
    %v2936 = vmul.f32 %v2183, %v2896
    %v2937 = vmul.f32 %v2885, %v2894
    %v2938 = vmul.f32 %v2886, %v2896
    %2941 = vrot.lane.b32.xlu0 %v2933, 32
    %v2942 = vpop.permute.xlu0 %2941
    %2943 = vrot.lane.b32.xlu0 %v2934, 32
    %v2944 = vpop.permute.xlu0 %2943
    %2949 = vrot.lane.b32.xlu0 %v2935, 64
    %v2950 = vpop.permute.xlu0 %2949
    %2951 = vrot.lane.b32.xlu0 %v2936, 64
    %v2952 = vpop.permute.xlu0 %2951
    %2957 = vrot.lane.b32.xlu0 %v2937, 96
    %v2958 = vpop.permute.xlu0 %2957
    %2959 = vrot.lane.b32.xlu0 %v2938, 96
    %v2960 = vpop.permute.xlu0 %2959
    %v2963 = vsel %vm2921, %v2931, %v2942
    %v2964 = vsel %vm2921, %v2932, %v2944
    %v2965 = vsel %vm89, %v2963, %v2950
    %v2966 = vsel %vm89, %v2964, %v2952
    %v2967 = vsel %vm2926, %v2965, %v2958
    %v2968 = vsel %vm2926, %v2966, %v2960
    %2969 = vst [vmem:[#allocation11] sm:$0xff] %v2967
    %2970 = vst [vmem:[#allocation11 + $0x8] sm:$0xff] %v2968
    // Predicated region
    $region38: #{tpu_custom_call.1} parent=1 // pred_check
      _
    $region39: #{tpu_custom_call.1} parent=1 // pred_check_branch
      %2972 = sbr.rel (0) target = $region41
    $region40: #{tpu_custom_call.1} parent=1 // pred_region
      %s2974 = ssub.s32 256, 256
      %2975 = vsyncadd [#allocation4], %s2974
      %s2976 = sshll.u32 [#allocation10], 4
      %s2977 = int_to_ptr.vmem [resolvable:$true] %s2976
      %2982 = dma.vmem_to_hbm [thread:$0]  %s2977, 256, %s5, [#allocation4], 128, 128, 8
    $region41: #{tpu_custom_call.1} parent=1 // pred_fallthru
      _
    // Predicated region
    $region42: #{tpu_custom_call.1} parent=1 // pred_check
      _
    $region43: #{tpu_custom_call.1} parent=1 // pred_check_branch
      %2984 = sbr.rel (0) target = $region45
    $region44: #{tpu_custom_call.1} parent=1 // pred_region
      %s2986 = ssub.s32 256, 256
      %2987 = vsyncadd [#allocation12], %s2986
      %s2988 = sshll.u32 [#allocation11], 4
      %s2989 = int_to_ptr.vmem [resolvable:$true] %s2988
      %2994 = dma.vmem_to_hbm [thread:$0]  %s2989, 256, %s6, [#allocation12], 128, 128, 8
    $region45: #{tpu_custom_call.1} parent=1 // pred_fallthru
      _
    // Predicated region
    $region46: #{tpu_custom_call.1} parent=1 // pred_check
      _
    $region47: #{tpu_custom_call.1} parent=1 // pred_check_branch
      %2996 = sbr.rel (0) target = $region49
    $region48: #{tpu_custom_call.1} parent=1 // pred_region
      %2997 = dma.done [#allocation4], 256
    $region49: #{tpu_custom_call.1} parent=1 // pred_fallthru
      _
    // Predicated region
    $region50: #{tpu_custom_call.1} parent=1 // pred_check
      _
    $region51: #{tpu_custom_call.1} parent=1 // pred_check_branch
      %2999 = sbr.rel (0) target = $region53
    $region52: #{tpu_custom_call.1} parent=1 // pred_region
      %3000 = dma.done [#allocation12], 256
    $region53: #{tpu_custom_call.1} parent=1 // pred_fallthru
      _
    %3001 = vsyncpa [#allocation3], 1
    %3002 = vsyncpa [#allocation6], 1
    %3003 = vsyncpa [#allocation9], 1
    %3004 = vsyncpa [#allocation4], 1
    %3005 = vsyncpa [#allocation12], 1

</llo_original>
